<compile_context>
chip_gen: v6e
topology: v6e:2x2x1
jax: 0.10.0
libtpu: 0.0.40
codegen_flags: <defaults>
</compile_context>

<pallas_src>
import functools

import jax
import jax.numpy as jnp
from jax.experimental import pallas as pl
from jax.experimental.pallas import tpu as pltpu


SUBLANE = 8    # pad batch to a full sublane tile
LANE = 128     # lane-tile offset used for the packed (mu|logvar) / (state|reward) heads


# ----------------------------- Fused Pallas kernel -----------------------------


def fused_varibad_kernel(
    b_real, state_dim,                         # static: real batch size, state dim
    # ---- inputs ----
    traj_ref,      # [T*Bp, S+A+1] f32, time-major flattened (row = t*Bp + b)
    len_ref,       # [Bp, 1]  i32 sequence lengths (0 for padded rows)
    eps_ref,       # [Bp, L]  f32 reparameterization noise
    wih0_ref,      # [D_in, 3H] bf16  GRU layer-0 input weights
    bih0_ref,      # [1, 3H]   f32
    whh0_ref,      # [H, 3H]   bf16  GRU layer-0 hidden weights
    bhh0_ref,      # [1, 3H]   f32
    w1cat_ref,     # [2H, 4H]  bf16  fused GRU layer-1 weights (rz | gi_n | gh_n)
    b1cat_ref,     # [1, 4H]   f32   fused layer-1 bias
    wmulv_ref,     # [H, 2*LANE] f32 fused fc_mu (cols 0:L) / fc_logvar (cols LANE:LANE+L)
    bmulv_ref,     # [1, 2*LANE] f32
    dw1x_ref,      # [D_in, Hd] f32  decoder layer-1 (state|action rows, reward row zeroed)
    dw1z_ref,      # [L, Hd]   f32   decoder layer-1 (belief rows)
    db1_ref,       # [1, Hd]   f32
    dw2_ref,       # [Hd, Hd]  f32
    db2_ref,       # [1, Hd]   f32
    wsr_ref,       # [Hd, 2*LANE] f32 fused heads: state (cols 0:S) / reward (col LANE)
    bsr_ref,       # [1, 2*LANE]  f32
    # ---- outputs ----
    mu_ref,        # [Bp, L]
    lv_ref,        # [Bp, L]
    scal_ref,      # [1, 128] lanes 0..4 = state, reward, recon, kl, elbo
    # ---- scratch ----
    gi0_sc,        # [T*Bp, 3H] hoisted layer-0 input projection
):
    f32 = jnp.float32
    bf16 = jnp.bfloat16
    Bp = len_ref.shape[0]
    TBp, D_in = traj_ref.shape
    T = TBp // Bp
    H = whh0_ref.shape[0]
    L = mu_ref.shape[1]
    S = state_dim

    # ---- hoisted layer-0 input projection: one large bf16 MXU matmul, off the
    #      serial recurrence path ----
    gi0_sc[...] = (
        jnp.dot(traj_ref[...].astype(bf16), wih0_ref[...],
                preferred_element_type=f32)
        + bih0_ref[...]
    )

    lengths = len_ref[...]                              # [Bp, 1] i32

    # hoisted bias broadcasts (re-materialized per-iter otherwise)
    bhh0_b = jnp.broadcast_to(bhh0_ref[...], (Bp, 3 * H))
    b1cat_b = jnp.broadcast_to(b1cat_ref[...], (Bp, 4 * H))

    h0 = jnp.zeros((Bp, H), f32)
    h1 = jnp.zeros((Bp, H), f32)
    last_x = jnp.zeros((Bp, D_in), f32)                 # input row at each seq's last valid step

    # ---- unrolled 2-layer GRU recurrence: 2 serial MXU pushes per step ----
    for t in range(T):
        lo = t * Bp
        gi0 = gi0_sc[lo:lo + Bp, :]                     # [Bp, 3H] tile-aligned slice
        x_t = traj_ref[lo:lo + Bp, :]                   # [Bp, D_in]

        # layer 0 (gate order r, z, n); bf16 operands, f32 accumulate
        gh0 = jnp.dot(h0.astype(bf16), whh0_ref[...],
                      preferred_element_type=f32) + bhh0_b
        rz0 = jax.nn.sigmoid(gi0[:, 0:2 * H] + gh0[:, 0:2 * H])   # one EUP pass for r,z
        r0 = rz0[:, 0:H]
        z0 = rz0[:, H:2 * H]
        n0 = jnp.tanh(gi0[:, 2 * H:3 * H] + r0 * gh0[:, 2 * H:3 * H])
        h0_new = (1.0 - z0) * n0 + z0 * h0

        # layer 1: single fused K=2H matmul -> lanes [gi+gh (r,z) | gi_n | gh_n]
        x1 = jnp.concatenate([h0_new, h1], axis=-1).astype(bf16)   # [Bp, 2H]
        g1 = jnp.dot(x1, w1cat_ref[...], preferred_element_type=f32) + b1cat_b
        rz1 = jax.nn.sigmoid(g1[:, 0:2 * H])
        r1 = rz1[:, 0:H]
        z1 = rz1[:, H:2 * H]
        n1 = jnp.tanh(g1[:, 2 * H:3 * H] + r1 * g1[:, 3 * H:4 * H])
        h1_new = (1.0 - z1) * n1 + z1 * h1

        # pack_padded_sequence semantics: freeze hidden once t >= length
        valid = lengths > t                             # [Bp, 1] bool
        h0 = jnp.where(valid, h0_new, h0)
        h1 = jnp.where(valid, h1_new, h1)
        last_x = jnp.where(valid, x_t, last_x)          # ends at step (length - 1)

    # ---- fused belief head (fc_mu | fc_logvar packed at lane offsets 0, 128) ----
    mulv = jnp.dot(h1, wmulv_ref[...], preferred_element_type=f32) + bmulv_ref[...]
    mu = mulv[:, 0:L]
    lv = jnp.clip(mulv[:, LANE:LANE + L], -10.0, 10.0)
    mu_ref[...] = mu
    lv_ref[...] = lv

    # ---- reparameterization trick ----
    belief = mu + eps_ref[...] * jnp.exp(0.5 * lv)

    # ---- decoder MLP (Linear -> ReLU -> Dropout[eval=identity]) x2 + fused heads ----
    # dw1x has a zero row for the reward column, so the full last-step input row
    # can be used directly (no in-kernel (state|action) slice/concat needed).
    h = (
        jnp.dot(last_x, dw1x_ref[...], preferred_element_type=f32)
        + jnp.dot(belief, dw1z_ref[...], preferred_element_type=f32)
        + db1_ref[...]
    )
    h = jnp.maximum(h, 0.0)
    h = jnp.maximum(
        jnp.dot(h, dw2_ref[...], preferred_element_type=f32) + db2_ref[...], 0.0
    )
    pred = jnp.dot(h, wsr_ref[...], preferred_element_type=f32) + bsr_ref[...]
    pred_s = pred[:, 0:S]
    pred_r = pred[:, LANE:LANE + 1]

    # ---- targets: last *padded* timestep (mirrors VariBADVAE.forward) ----
    x_last = traj_ref[(T - 1) * Bp:T * Bp, :]
    next_s = x_last[:, 0:S]
    # reward column is the last lane of D_in; extract via mask (no unaligned slice)
    rmask = (jax.lax.broadcasted_iota(jnp.int32, (1, D_in), 1) == (D_in - 1)).astype(f32)
    next_r = jnp.sum(x_last * rmask, axis=-1, keepdims=True)

    # ---- losses, masked to the real batch rows ----
    bmask = (jax.lax.broadcasted_iota(jnp.int32, (Bp, 1), 0) < b_real).astype(f32)

    ds = (pred_s - next_s) ** 2 * bmask
    state_loss = jnp.sum(ds, axis=(0, 1), keepdims=True) * (1.0 / (b_real * S))
    dr = (pred_r - next_r) ** 2 * bmask
    reward_loss = jnp.sum(dr, axis=(0, 1), keepdims=True) * (1.0 / b_real)
    recon = state_loss + reward_loss

    # KL( N(mu, exp(0.5*lv)) || N(0, 1) ), sum over latent, mean over batch
    kl_elem = -0.5 * lv + 0.5 * (jnp.exp(lv) + mu * mu) - 0.5
    kl_per_b = jnp.sum(kl_elem, axis=-1, keepdims=True) * bmask
    kl = jnp.sum(kl_per_b, axis=(0, 1), keepdims=True) * (1.0 / b_real)

    elbo = -(recon + kl)

    # ---- pack the 5 scalars into one lane-dense (1, 128) output ----
    lane_idx = jax.lax.broadcasted_iota(jnp.int32, (1, 128), 1)
    scal_ref[...] = (
        jnp.where(lane_idx == 0, state_loss, 0.0)
        + jnp.where(lane_idx == 1, reward_loss, 0.0)
        + jnp.where(lane_idx == 2, recon, 0.0)
        + jnp.where(lane_idx == 3, kl, 0.0)
        + jnp.where(lane_idx == 4, elbo, 0.0)
    )


# ------------------------------ Parameters --------------------------------


def _xavier(key, fan_in, fan_out):
    limit = (6.0 / (fan_in + fan_out)) ** 0.5
    return jax.random.uniform(
        key, (fan_in, fan_out), jnp.float32, minval=-limit, maxval=limit
    )


def init_params(key, state_dim, action_dim, latent_dim, enc_hidden, dec_hidden):
    """Deterministic synthetic parameters with the same shapes as the PyTorch
    module (biases zero, xavier-ish weights)."""
    ks = list(jax.random.split(key, 16))
    d_in_enc = state_dim + action_dim + 1
    H = enc_hidden
    d_in_dec = state_dim + action_dim + latent_dim
    Hd = dec_hidden

    p = {}
    # Encoder GRU (2 layers). Weights stored (in, 3H), gate order (r, z, n).
    p["wih0"] = _xavier(ks[0], d_in_enc, 3 * H)
    p["whh0"] = _xavier(ks[1], H, 3 * H)
    p["bih0"] = jnp.zeros((1, 3 * H), jnp.float32)
    p["bhh0"] = jnp.zeros((1, 3 * H), jnp.float32)
    p["wih1"] = _xavier(ks[2], H, 3 * H)
    p["whh1"] = _xavier(ks[3], H, 3 * H)
    p["bih1"] = jnp.zeros((1, 3 * H), jnp.float32)
    p["bhh1"] = jnp.zeros((1, 3 * H), jnp.float32)
    # fc_mu / fc_logvar
    p["wmu"] = _xavier(ks[4], H, latent_dim)
    p["bmu"] = jnp.zeros((1, latent_dim), jnp.float32)
    p["wlv"] = _xavier(ks[5], H, latent_dim)
    p["blv"] = jnp.zeros((1, latent_dim), jnp.float32)
    # Decoder
    p["dw1"] = _xavier(ks[6], d_in_dec, Hd)
    p["db1"] = jnp.zeros((1, Hd), jnp.float32)
    p["dw2"] = _xavier(ks[7], Hd, Hd)
    p["db2"] = jnp.zeros((1, Hd), jnp.float32)
    p["dws"] = _xavier(ks[8], Hd, state_dim)
    p["dbs"] = jnp.zeros((1, state_dim), jnp.float32)
    p["dwr"] = _xavier(ks[9], Hd, 1)
    p["dbr"] = jnp.zeros((1, 1), jnp.float32)
    return p


# ------------------------------- Wrapper -----------------------------------


@jax.jit
def varibad_vae_forward(params, states, actions, rewards, lengths, eps):
    """Replicates VariBADVAE.forward (eval mode, given reparam noise `eps`)
    with one fused Pallas kernel."""
    B, T, S = states.shape
    A = actions.shape[-1]
    L = params["wmu"].shape[-1]
    H = params["whh0"].shape[0]
    Hd = params["dw2"].shape[0]
    D_in = S + A + 1
    f32 = jnp.float32
    bf16 = jnp.bfloat16

    # Pad the batch up to a full sublane tile; padded rows get length 0 and are
    # masked out of every loss inside the kernel.
    Bp = max(SUBLANE, ((B + SUBLANE - 1) // SUBLANE) * SUBLANE)
    pad = Bp - B

    traj = jnp.concatenate(
        [states, actions, rewards[..., None]], axis=-1
    ).astype(f32)                                         # [B, T, D_in]
    traj = jnp.pad(traj, ((0, pad), (0, 0), (0, 0)))      # [Bp, T, D_in]
    traj_tm = jnp.transpose(traj, (1, 0, 2)).reshape(T * Bp, D_in)

    len_col = jnp.pad(lengths.astype(jnp.int32), (0, pad)).reshape(Bp, 1)
    eps_p = jnp.pad(eps.astype(f32), ((0, pad), (0, 0)))

    # ---- fused / repacked parameters (all host-side, outside the kernel) ----
    # Recurrence weights in bf16 (f32 accumulation on the MXU inside the kernel).
    wih0_bf = params["wih0"].astype(bf16)
    whh0_bf = params["whh0"].astype(bf16)

    # Fused layer-1 weight [2H, 4H]: output lanes = [gi_rz+gh_rz | gi_n | gh_n].
    wih1, whh1 = params["wih1"], params["whh1"]
    zero_hh = jnp.zeros((H, H), f32)
    w1cat = jnp.concatenate(
        [
            jnp.concatenate([wih1[:, : 2 * H], wih1[:, 2 * H:], zero_hh], axis=1),
            jnp.concatenate([whh1[:, : 2 * H], zero_hh, whh1[:, 2 * H:]], axis=1),
        ],
        axis=0,
    ).astype(bf16)
    bih1, bhh1 = params["bih1"], params["bhh1"]
    b1cat = jnp.concatenate(
        [bih1[:, : 2 * H] + bhh1[:, : 2 * H], bih1[:, 2 * H:], bhh1[:, 2 * H:]],
        axis=1,
    )                                                     # [1, 4H]

    # Fused fc_mu / fc_logvar head, packed at lane offsets 0 and LANE.
    wmulv = (
        jnp.zeros((H, 2 * LANE), f32)
        .at[:, 0:L].set(params["wmu"])
        .at[:, LANE:LANE + L].set(params["wlv"])
    )
    bmulv = (
        jnp.zeros((1, 2 * LANE), f32)
        .at[:, 0:L].set(params["bmu"])
        .at[:, LANE:LANE + L].set(params["blv"])
    )

    # Decoder layer-1 input projection: (state|action) rows of dw1, with a zero
    # row for the reward column, so the kernel multiplies the full last-step row.
    dw1 = params["dw1"]
    dw1x = jnp.concatenate([dw1[: S + A], jnp.zeros((1, Hd), f32)], axis=0)  # [D_in, Hd]
    dw1z = dw1[S + A:]                                                       # [L, Hd]

    # Fused state / reward heads, packed at lane offsets 0 and LANE.
    wsr = (
        jnp.zeros((Hd, 2 * LANE), f32)
        .at[:, 0:S].set(params["dws"])
        .at[:, LANE:LANE + 1].set(params["dwr"])
    )
    bsr = (
        jnp.zeros((1, 2 * LANE), f32)
        .at[:, 0:S].set(params["dbs"])
        .at[:, LANE:LANE + 1].set(params["dbr"])
    )

    kernel = functools.partial(fused_varibad_kernel, B, S)

    mu_p, lv_p, scal = pl.pallas_call(
        kernel,
        out_shape=(
            jax.ShapeDtypeStruct((Bp, L), f32),
            jax.ShapeDtypeStruct((Bp, L), f32),
            jax.ShapeDtypeStruct((1, 128), f32),
        ),
        scratch_shapes=[pltpu.VMEM((T * Bp, 3 * H), f32)],
    )(
        traj_tm, len_col, eps_p,
        wih0_bf, params["bih0"], whh0_bf, params["bhh0"],
        w1cat, b1cat,
        wmulv, bmulv,
        dw1x, dw1z, params["db1"], params["dw2"], params["db2"],
        wsr, bsr,
    )

    s = scal[0]
    return {
        "elbo": s[4],
        "reconstruction_loss": s[2],
        "kl_loss": s[3],
        "state_loss": s[0],
        "reward_loss": s[1],
        "belief_mu": mu_p[:B],
        "belief_logvar": lv_p[:B],
    }


# --------------------------------- Main -------------------------------------


if __name__ == "__main__":
    # Small, module-consistent shapes.
    B, T = 2, 8
    state_dim, action_dim, latent_dim = 6, 8, 5
    enc_hidden = dec_hidden = 128

    key = jax.random.PRNGKey(0)
    kp, ks, ka, kr, ke = jax.random.split(key, 5)

    params = init_params(kp, state_dim, action_dim, latent_dim,
                         enc_hidden, dec_hidden)

    states = jax.random.normal(ks, (B, T, state_dim), jnp.float32)
    actions = jax.random.normal(ka, (B, T, action_dim), jnp.float32)
    rewards = jax.random.normal(kr, (B, T), jnp.float32)
    lengths = jnp.array([T, T - 3], jnp.int32)          # variable sequence lengths
    eps = jax.random.normal(ke, (B, latent_dim), jnp.float32)  # reparam noise

    out = varibad_vae_forward(params, states, actions, rewards, lengths, eps)
    jax.block_until_ready(out)
    print("KERNEL_OK")
</pallas_src>

<mosaic_0001>
module attributes {stable_mosaic.version = 11 : i64} {
  func.func @fused_varibad_kernel(%arg0: memref<64x15xf32, #tpu.memory_space<vmem>>, %arg1: memref<8x1xi32, #tpu.memory_space<vmem>>, %arg2: memref<8x5xf32, #tpu.memory_space<vmem>>, %arg3: memref<15x384xbf16, #tpu.memory_space<vmem>>, %arg4: memref<1x384xf32, #tpu.memory_space<vmem>>, %arg5: memref<128x384xbf16, #tpu.memory_space<vmem>>, %arg6: memref<1x384xf32, #tpu.memory_space<vmem>>, %arg7: memref<256x512xbf16, #tpu.memory_space<vmem>>, %arg8: memref<1x512xf32, #tpu.memory_space<vmem>>, %arg9: memref<128x256xf32, #tpu.memory_space<vmem>>, %arg10: memref<1x256xf32, #tpu.memory_space<vmem>>, %arg11: memref<15x128xf32, #tpu.memory_space<vmem>>, %arg12: memref<5x128xf32, #tpu.memory_space<vmem>>, %arg13: memref<1x128xf32, #tpu.memory_space<vmem>>, %arg14: memref<128x128xf32, #tpu.memory_space<vmem>>, %arg15: memref<1x128xf32, #tpu.memory_space<vmem>>, %arg16: memref<128x256xf32, #tpu.memory_space<vmem>>, %arg17: memref<1x256xf32, #tpu.memory_space<vmem>>, %arg18: memref<8x5xf32, #tpu.memory_space<vmem>>, %arg19: memref<8x5xf32, #tpu.memory_space<vmem>>, %arg20: memref<1x128xf32, #tpu.memory_space<vmem>>, %arg21: memref<64x384xf32, #tpu.memory_space<vmem>>) attributes {dimension_semantics = [], scalar_prefetch = 0 : i64, scratch_operands = 1 : i64, tpu.core_type = #tpu.core_type<tc>} {
    %c0 = arith.constant 0 : index
    %c0_0 = arith.constant 0 : index
    %0 = vector.load %arg0[%c0, %c0_0] : memref<64x15xf32, #tpu.memory_space<vmem>>, vector<64x15xf32>
    %1 = arith.truncf %0 : vector<64x15xf32> to vector<64x15xbf16>
    %c0_1 = arith.constant 0 : index
    %c0_2 = arith.constant 0 : index
    %2 = vector.load %arg3[%c0_1, %c0_2] : memref<15x384xbf16, #tpu.memory_space<vmem>>, vector<15x384xbf16>
    %cst = arith.constant dense<0.000000e+00> : vector<64x384xf32>
    %3 = tpu.matmul %1, %2, %cst {dimension_numbers = #tpu.dot_dimension_numbers<[1], [0], [0], [1], [0, 0, 1, 1], [], []>} : vector<64x15xbf16>, vector<15x384xbf16>, vector<64x384xf32> -> vector<64x384xf32>
    %c0_3 = arith.constant 0 : index
    %c0_4 = arith.constant 0 : index
    %4 = vector.load %arg4[%c0_3, %c0_4] : memref<1x384xf32, #tpu.memory_space<vmem>>, vector<1x384xf32>
    %5 = vector.broadcast %4 : vector<1x384xf32> to vector<64x384xf32>
    %6 = arith.addf %3, %5 : vector<64x384xf32>
    %c0_5 = arith.constant 0 : index
    %c0_6 = arith.constant 0 : index
    %7 = vector.load %arg21[%c0_5, %c0_6] : memref<64x384xf32, #tpu.memory_space<vmem>>, vector<64x384xf32>
    tpu.vector_store %arg21[%c0_5, %c0_6], %6 {strides = array<i32>} : memref<64x384xf32, #tpu.memory_space<vmem>>, vector<64x384xf32>,
    %c0_7 = arith.constant 0 : index
    %c0_8 = arith.constant 0 : index
    %8 = vector.load %arg1[%c0_7, %c0_8] : memref<8x1xi32, #tpu.memory_space<vmem>>, vector<8x1xi32>
    %c0_9 = arith.constant 0 : index
    %c0_10 = arith.constant 0 : index
    %9 = vector.load %arg6[%c0_9, %c0_10] : memref<1x384xf32, #tpu.memory_space<vmem>>, vector<1x384xf32>
    %10 = vector.shape_cast %9 : vector<1x384xf32> to vector<1x384xf32>
    %11 = vector.broadcast %10 : vector<1x384xf32> to vector<8x384xf32>
    %c0_11 = arith.constant 0 : index
    %c0_12 = arith.constant 0 : index
    %12 = vector.load %arg8[%c0_11, %c0_12] : memref<1x512xf32, #tpu.memory_space<vmem>>, vector<1x512xf32>
    %13 = vector.shape_cast %12 : vector<1x512xf32> to vector<1x512xf32>
    %14 = vector.broadcast %13 : vector<1x512xf32> to vector<8x512xf32>
    %cst_13 = arith.constant 0.000000e+00 : f32
    %15 = vector.broadcast %cst_13 : f32 to vector<8x128xf32>
    %cst_14 = arith.constant 0.000000e+00 : f32
    %16 = vector.broadcast %cst_14 : f32 to vector<8x128xf32>
    %cst_15 = arith.constant 0.000000e+00 : f32
    %17 = vector.broadcast %cst_15 : f32 to vector<8x15xf32>
    %c0_16 = arith.constant 0 : index
    %c0_17 = arith.constant 0 : index
    %18 = vector.load %arg21[%c0_16, %c0_17] : memref<64x384xf32, #tpu.memory_space<vmem>>, vector<8x384xf32>
    %c0_18 = arith.constant 0 : index
    %c0_19 = arith.constant 0 : index
    %19 = vector.load %arg0[%c0_18, %c0_19] : memref<64x15xf32, #tpu.memory_space<vmem>>, vector<8x15xf32>
    %20 = arith.truncf %15 : vector<8x128xf32> to vector<8x128xbf16>
    %c0_20 = arith.constant 0 : index
    %c0_21 = arith.constant 0 : index
    %21 = vector.load %arg5[%c0_20, %c0_21] : memref<128x384xbf16, #tpu.memory_space<vmem>>, vector<128x384xbf16>
    %cst_22 = arith.constant dense<0.000000e+00> : vector<8x384xf32>
    %22 = tpu.matmul %20, %21, %cst_22 {dimension_numbers = #tpu.dot_dimension_numbers<[1], [0], [0], [1], [0, 0, 1, 1], [], []>} : vector<8x128xbf16>, vector<128x384xbf16>, vector<8x384xf32> -> vector<8x384xf32>
    %23 = arith.addf %22, %11 : vector<8x384xf32>
    %24 = vector.extract_strided_slice %18 {offsets = [0, 0], sizes = [8, 256], strides = [1, 1]} : vector<8x384xf32> to vector<8x256xf32>
    %25 = vector.extract_strided_slice %23 {offsets = [0, 0], sizes = [8, 256], strides = [1, 1]} : vector<8x384xf32> to vector<8x256xf32>
    %26 = arith.addf %24, %25 : vector<8x256xf32>
    %27 = arith.negf %26 : vector<8x256xf32>
    %28 = math.exp %27 : vector<8x256xf32>
    %cst_23 = arith.constant 1.000000e+00 : f32
    %29 = vector.broadcast %cst_23 : f32 to vector<8x256xf32>
    %30 = arith.addf %29, %28 : vector<8x256xf32>
    %31 = arith.divf %29, %30 : vector<8x256xf32>
    %32 = vector.extract_strided_slice %31 {offsets = [0, 0], sizes = [8, 128], strides = [1, 1]} : vector<8x256xf32> to vector<8x128xf32>
    %33 = vector.extract_strided_slice %31 {offsets = [0, 128], sizes = [8, 128], strides = [1, 1]} : vector<8x256xf32> to vector<8x128xf32>
    %34 = vector.extract_strided_slice %18 {offsets = [0, 256], sizes = [8, 128], strides = [1, 1]} : vector<8x384xf32> to vector<8x128xf32>
    %35 = vector.extract_strided_slice %23 {offsets = [0, 256], sizes = [8, 128], strides = [1, 1]} : vector<8x384xf32> to vector<8x128xf32>
    %36 = arith.mulf %32, %35 : vector<8x128xf32>
    %37 = arith.addf %34, %36 : vector<8x128xf32>
    %38 = math.tanh %37 : vector<8x128xf32>
    %cst_24 = arith.constant 1.000000e+00 : f32
    %39 = vector.broadcast %cst_24 : f32 to vector<8x128xf32>
    %40 = arith.subf %39, %33 : vector<8x128xf32>
    %41 = arith.mulf %40, %38 : vector<8x128xf32>
    %42 = arith.mulf %33, %15 : vector<8x128xf32>
    %43 = arith.addf %41, %42 : vector<8x128xf32>
    %44 = tpu.concatenate %43, %16 in 1 : vector<8x128xf32>, vector<8x128xf32> -> vector<8x256xf32>
    %45 = arith.truncf %44 : vector<8x256xf32> to vector<8x256xbf16>
    %c0_25 = arith.constant 0 : index
    %c0_26 = arith.constant 0 : index
    %46 = vector.load %arg7[%c0_25, %c0_26] : memref<256x512xbf16, #tpu.memory_space<vmem>>, vector<256x512xbf16>
    %cst_27 = arith.constant dense<0.000000e+00> : vector<8x512xf32>
    %47 = tpu.matmul %45, %46, %cst_27 {dimension_numbers = #tpu.dot_dimension_numbers<[1], [0], [0], [1], [0, 0, 1, 1], [], []>} : vector<8x256xbf16>, vector<256x512xbf16>, vector<8x512xf32> -> vector<8x512xf32>
    %48 = arith.addf %47, %14 : vector<8x512xf32>
    %49 = vector.extract_strided_slice %48 {offsets = [0, 0], sizes = [8, 256], strides = [1, 1]} : vector<8x512xf32> to vector<8x256xf32>
    %50 = arith.negf %49 : vector<8x256xf32>
    %51 = math.exp %50 : vector<8x256xf32>
    %cst_28 = arith.constant 1.000000e+00 : f32
    %52 = vector.broadcast %cst_28 : f32 to vector<8x256xf32>
    %53 = arith.addf %52, %51 : vector<8x256xf32>
    %54 = arith.divf %52, %53 : vector<8x256xf32>
    %55 = vector.extract_strided_slice %54 {offsets = [0, 0], sizes = [8, 128], strides = [1, 1]} : vector<8x256xf32> to vector<8x128xf32>
    %56 = vector.extract_strided_slice %54 {offsets = [0, 128], sizes = [8, 128], strides = [1, 1]} : vector<8x256xf32> to vector<8x128xf32>
    %57 = vector.extract_strided_slice %48 {offsets = [0, 256], sizes = [8, 128], strides = [1, 1]} : vector<8x512xf32> to vector<8x128xf32>
    %58 = vector.extract_strided_slice %48 {offsets = [0, 384], sizes = [8, 128], strides = [1, 1]} : vector<8x512xf32> to vector<8x128xf32>
    %59 = arith.mulf %55, %58 : vector<8x128xf32>
    %60 = arith.addf %57, %59 : vector<8x128xf32>
    %61 = math.tanh %60 : vector<8x128xf32>
    %cst_29 = arith.constant 1.000000e+00 : f32
    %62 = vector.broadcast %cst_29 : f32 to vector<8x128xf32>
    %63 = arith.subf %62, %56 : vector<8x128xf32>
    %64 = arith.mulf %63, %61 : vector<8x128xf32>
    %65 = arith.mulf %56, %16 : vector<8x128xf32>
    %66 = arith.addf %64, %65 : vector<8x128xf32>
    %c0_i32 = arith.constant 0 : i32
    %67 = vector.broadcast %c0_i32 : i32 to vector<8x1xi32>
    %68 = arith.cmpi sgt, %8, %67 : vector<8x1xi32>
    %69 = vector.shape_cast %68 : vector<8x1xi1> to vector<8x1xi1>
    %70 = vector.broadcast %69 : vector<8x1xi1> to vector<8x128xi1>
    %71 = arith.select %70, %43, %15 : vector<8x128xi1>, vector<8x128xf32>
    %72 = vector.shape_cast %68 : vector<8x1xi1> to vector<8x1xi1>
    %73 = vector.broadcast %72 : vector<8x1xi1> to vector<8x128xi1>
    %74 = arith.select %73, %66, %16 : vector<8x128xi1>, vector<8x128xf32>
    %75 = vector.shape_cast %68 : vector<8x1xi1> to vector<8x1xi1>
    %76 = vector.broadcast %75 : vector<8x1xi1> to vector<8x15xi1>
    %77 = arith.select %76, %19, %17 : vector<8x15xi1>, vector<8x15xf32>
    %c8 = arith.constant 8 : index
    %c0_30 = arith.constant 0 : index
    %78 = vector.load %arg21[%c8, %c0_30] : memref<64x384xf32, #tpu.memory_space<vmem>>, vector<8x384xf32>
    %c8_31 = arith.constant 8 : index
    %c0_32 = arith.constant 0 : index
    %79 = vector.load %arg0[%c8_31, %c0_32] : memref<64x15xf32, #tpu.memory_space<vmem>>, vector<8x15xf32>
    %80 = arith.truncf %71 : vector<8x128xf32> to vector<8x128xbf16>
    %c0_33 = arith.constant 0 : index
    %c0_34 = arith.constant 0 : index
    %81 = vector.load %arg5[%c0_33, %c0_34] : memref<128x384xbf16, #tpu.memory_space<vmem>>, vector<128x384xbf16>
    %cst_35 = arith.constant dense<0.000000e+00> : vector<8x384xf32>
    %82 = tpu.matmul %80, %81, %cst_35 {dimension_numbers = #tpu.dot_dimension_numbers<[1], [0], [0], [1], [0, 0, 1, 1], [], []>} : vector<8x128xbf16>, vector<128x384xbf16>, vector<8x384xf32> -> vector<8x384xf32>
    %83 = arith.addf %82, %11 : vector<8x384xf32>
    %84 = vector.extract_strided_slice %78 {offsets = [0, 0], sizes = [8, 256], strides = [1, 1]} : vector<8x384xf32> to vector<8x256xf32>
    %85 = vector.extract_strided_slice %83 {offsets = [0, 0], sizes = [8, 256], strides = [1, 1]} : vector<8x384xf32> to vector<8x256xf32>
    %86 = arith.addf %84, %85 : vector<8x256xf32>
    %87 = arith.negf %86 : vector<8x256xf32>
    %88 = math.exp %87 : vector<8x256xf32>
    %cst_36 = arith.constant 1.000000e+00 : f32
    %89 = vector.broadcast %cst_36 : f32 to vector<8x256xf32>
    %90 = arith.addf %89, %88 : vector<8x256xf32>
    %91 = arith.divf %89, %90 : vector<8x256xf32>
    %92 = vector.extract_strided_slice %91 {offsets = [0, 0], sizes = [8, 128], strides = [1, 1]} : vector<8x256xf32> to vector<8x128xf32>
    %93 = vector.extract_strided_slice %91 {offsets = [0, 128], sizes = [8, 128], strides = [1, 1]} : vector<8x256xf32> to vector<8x128xf32>
    %94 = vector.extract_strided_slice %78 {offsets = [0, 256], sizes = [8, 128], strides = [1, 1]} : vector<8x384xf32> to vector<8x128xf32>
    %95 = vector.extract_strided_slice %83 {offsets = [0, 256], sizes = [8, 128], strides = [1, 1]} : vector<8x384xf32> to vector<8x128xf32>
    %96 = arith.mulf %92, %95 : vector<8x128xf32>
    %97 = arith.addf %94, %96 : vector<8x128xf32>
    %98 = math.tanh %97 : vector<8x128xf32>
    %cst_37 = arith.constant 1.000000e+00 : f32
    %99 = vector.broadcast %cst_37 : f32 to vector<8x128xf32>
    %100 = arith.subf %99, %93 : vector<8x128xf32>
    %101 = arith.mulf %100, %98 : vector<8x128xf32>
    %102 = arith.mulf %93, %71 : vector<8x128xf32>
    %103 = arith.addf %101, %102 : vector<8x128xf32>
    %104 = tpu.concatenate %103, %74 in 1 : vector<8x128xf32>, vector<8x128xf32> -> vector<8x256xf32>
    %105 = arith.truncf %104 : vector<8x256xf32> to vector<8x256xbf16>
    %c0_38 = arith.constant 0 : index
    %c0_39 = arith.constant 0 : index
    %106 = vector.load %arg7[%c0_38, %c0_39] : memref<256x512xbf16, #tpu.memory_space<vmem>>, vector<256x512xbf16>
    %cst_40 = arith.constant dense<0.000000e+00> : vector<8x512xf32>
    %107 = tpu.matmul %105, %106, %cst_40 {dimension_numbers = #tpu.dot_dimension_numbers<[1], [0], [0], [1], [0, 0, 1, 1], [], []>} : vector<8x256xbf16>, vector<256x512xbf16>, vector<8x512xf32> -> vector<8x512xf32>
    %108 = arith.addf %107, %14 : vector<8x512xf32>
    %109 = vector.extract_strided_slice %108 {offsets = [0, 0], sizes = [8, 256], strides = [1, 1]} : vector<8x512xf32> to vector<8x256xf32>
    %110 = arith.negf %109 : vector<8x256xf32>
    %111 = math.exp %110 : vector<8x256xf32>
    %cst_41 = arith.constant 1.000000e+00 : f32
    %112 = vector.broadcast %cst_41 : f32 to vector<8x256xf32>
    %113 = arith.addf %112, %111 : vector<8x256xf32>
    %114 = arith.divf %112, %113 : vector<8x256xf32>
    %115 = vector.extract_strided_slice %114 {offsets = [0, 0], sizes = [8, 128], strides = [1, 1]} : vector<8x256xf32> to vector<8x128xf32>
    %116 = vector.extract_strided_slice %114 {offsets = [0, 128], sizes = [8, 128], strides = [1, 1]} : vector<8x256xf32> to vector<8x128xf32>
    %117 = vector.extract_strided_slice %108 {offsets = [0, 256], sizes = [8, 128], strides = [1, 1]} : vector<8x512xf32> to vector<8x128xf32>
    %118 = vector.extract_strided_slice %108 {offsets = [0, 384], sizes = [8, 128], strides = [1, 1]} : vector<8x512xf32> to vector<8x128xf32>
    %119 = arith.mulf %115, %118 : vector<8x128xf32>
    %120 = arith.addf %117, %119 : vector<8x128xf32>
    %121 = math.tanh %120 : vector<8x128xf32>
    %cst_42 = arith.constant 1.000000e+00 : f32
    %122 = vector.broadcast %cst_42 : f32 to vector<8x128xf32>
    %123 = arith.subf %122, %116 : vector<8x128xf32>
    %124 = arith.mulf %123, %121 : vector<8x128xf32>
    %125 = arith.mulf %116, %74 : vector<8x128xf32>
    %126 = arith.addf %124, %125 : vector<8x128xf32>
    %c1_i32 = arith.constant 1 : i32
    %127 = vector.broadcast %c1_i32 : i32 to vector<8x1xi32>
    %128 = arith.cmpi sgt, %8, %127 : vector<8x1xi32>
    %129 = vector.shape_cast %128 : vector<8x1xi1> to vector<8x1xi1>
    %130 = vector.broadcast %129 : vector<8x1xi1> to vector<8x128xi1>
    %131 = arith.select %130, %103, %71 : vector<8x128xi1>, vector<8x128xf32>
    %132 = vector.shape_cast %128 : vector<8x1xi1> to vector<8x1xi1>
    %133 = vector.broadcast %132 : vector<8x1xi1> to vector<8x128xi1>
    %134 = arith.select %133, %126, %74 : vector<8x128xi1>, vector<8x128xf32>
    %135 = vector.shape_cast %128 : vector<8x1xi1> to vector<8x1xi1>
    %136 = vector.broadcast %135 : vector<8x1xi1> to vector<8x15xi1>
    %137 = arith.select %136, %79, %77 : vector<8x15xi1>, vector<8x15xf32>
    %c16 = arith.constant 16 : index
    %c0_43 = arith.constant 0 : index
    %138 = vector.load %arg21[%c16, %c0_43] : memref<64x384xf32, #tpu.memory_space<vmem>>, vector<8x384xf32>
    %c16_44 = arith.constant 16 : index
    %c0_45 = arith.constant 0 : index
    %139 = vector.load %arg0[%c16_44, %c0_45] : memref<64x15xf32, #tpu.memory_space<vmem>>, vector<8x15xf32>
    %140 = arith.truncf %131 : vector<8x128xf32> to vector<8x128xbf16>
    %c0_46 = arith.constant 0 : index
    %c0_47 = arith.constant 0 : index
    %141 = vector.load %arg5[%c0_46, %c0_47] : memref<128x384xbf16, #tpu.memory_space<vmem>>, vector<128x384xbf16>
    %cst_48 = arith.constant dense<0.000000e+00> : vector<8x384xf32>
    %142 = tpu.matmul %140, %141, %cst_48 {dimension_numbers = #tpu.dot_dimension_numbers<[1], [0], [0], [1], [0, 0, 1, 1], [], []>} : vector<8x128xbf16>, vector<128x384xbf16>, vector<8x384xf32> -> vector<8x384xf32>
    %143 = arith.addf %142, %11 : vector<8x384xf32>
    %144 = vector.extract_strided_slice %138 {offsets = [0, 0], sizes = [8, 256], strides = [1, 1]} : vector<8x384xf32> to vector<8x256xf32>
    %145 = vector.extract_strided_slice %143 {offsets = [0, 0], sizes = [8, 256], strides = [1, 1]} : vector<8x384xf32> to vector<8x256xf32>
    %146 = arith.addf %144, %145 : vector<8x256xf32>
    %147 = arith.negf %146 : vector<8x256xf32>
    %148 = math.exp %147 : vector<8x256xf32>
    %cst_49 = arith.constant 1.000000e+00 : f32
    %149 = vector.broadcast %cst_49 : f32 to vector<8x256xf32>
    %150 = arith.addf %149, %148 : vector<8x256xf32>
    %151 = arith.divf %149, %150 : vector<8x256xf32>
    %152 = vector.extract_strided_slice %151 {offsets = [0, 0], sizes = [8, 128], strides = [1, 1]} : vector<8x256xf32> to vector<8x128xf32>
    %153 = vector.extract_strided_slice %151 {offsets = [0, 128], sizes = [8, 128], strides = [1, 1]} : vector<8x256xf32> to vector<8x128xf32>
    %154 = vector.extract_strided_slice %138 {offsets = [0, 256], sizes = [8, 128], strides = [1, 1]} : vector<8x384xf32> to vector<8x128xf32>
    %155 = vector.extract_strided_slice %143 {offsets = [0, 256], sizes = [8, 128], strides = [1, 1]} : vector<8x384xf32> to vector<8x128xf32>
    %156 = arith.mulf %152, %155 : vector<8x128xf32>
    %157 = arith.addf %154, %156 : vector<8x128xf32>
    %158 = math.tanh %157 : vector<8x128xf32>
    %cst_50 = arith.constant 1.000000e+00 : f32
    %159 = vector.broadcast %cst_50 : f32 to vector<8x128xf32>
    %160 = arith.subf %159, %153 : vector<8x128xf32>
    %161 = arith.mulf %160, %158 : vector<8x128xf32>
    %162 = arith.mulf %153, %131 : vector<8x128xf32>
    %163 = arith.addf %161, %162 : vector<8x128xf32>
    %164 = tpu.concatenate %163, %134 in 1 : vector<8x128xf32>, vector<8x128xf32> -> vector<8x256xf32>
    %165 = arith.truncf %164 : vector<8x256xf32> to vector<8x256xbf16>
    %c0_51 = arith.constant 0 : index
    %c0_52 = arith.constant 0 : index
    %166 = vector.load %arg7[%c0_51, %c0_52] : memref<256x512xbf16, #tpu.memory_space<vmem>>, vector<256x512xbf16>
    %cst_53 = arith.constant dense<0.000000e+00> : vector<8x512xf32>
    %167 = tpu.matmul %165, %166, %cst_53 {dimension_numbers = #tpu.dot_dimension_numbers<[1], [0], [0], [1], [0, 0, 1, 1], [], []>} : vector<8x256xbf16>, vector<256x512xbf16>, vector<8x512xf32> -> vector<8x512xf32>
    %168 = arith.addf %167, %14 : vector<8x512xf32>
    %169 = vector.extract_strided_slice %168 {offsets = [0, 0], sizes = [8, 256], strides = [1, 1]} : vector<8x512xf32> to vector<8x256xf32>
    %170 = arith.negf %169 : vector<8x256xf32>
    %171 = math.exp %170 : vector<8x256xf32>
    %cst_54 = arith.constant 1.000000e+00 : f32
    %172 = vector.broadcast %cst_54 : f32 to vector<8x256xf32>
    %173 = arith.addf %172, %171 : vector<8x256xf32>
    %174 = arith.divf %172, %173 : vector<8x256xf32>
    %175 = vector.extract_strided_slice %174 {offsets = [0, 0], sizes = [8, 128], strides = [1, 1]} : vector<8x256xf32> to vector<8x128xf32>
    %176 = vector.extract_strided_slice %174 {offsets = [0, 128], sizes = [8, 128], strides = [1, 1]} : vector<8x256xf32> to vector<8x128xf32>
    %177 = vector.extract_strided_slice %168 {offsets = [0, 256], sizes = [8, 128], strides = [1, 1]} : vector<8x512xf32> to vector<8x128xf32>
    %178 = vector.extract_strided_slice %168 {offsets = [0, 384], sizes = [8, 128], strides = [1, 1]} : vector<8x512xf32> to vector<8x128xf32>
    %179 = arith.mulf %175, %178 : vector<8x128xf32>
    %180 = arith.addf %177, %179 : vector<8x128xf32>
    %181 = math.tanh %180 : vector<8x128xf32>
    %cst_55 = arith.constant 1.000000e+00 : f32
    %182 = vector.broadcast %cst_55 : f32 to vector<8x128xf32>
    %183 = arith.subf %182, %176 : vector<8x128xf32>
    %184 = arith.mulf %183, %181 : vector<8x128xf32>
    %185 = arith.mulf %176, %134 : vector<8x128xf32>
    %186 = arith.addf %184, %185 : vector<8x128xf32>
    %c2_i32 = arith.constant 2 : i32
    %187 = vector.broadcast %c2_i32 : i32 to vector<8x1xi32>
    %188 = arith.cmpi sgt, %8, %187 : vector<8x1xi32>
    %189 = vector.shape_cast %188 : vector<8x1xi1> to vector<8x1xi1>
    %190 = vector.broadcast %189 : vector<8x1xi1> to vector<8x128xi1>
    %191 = arith.select %190, %163, %131 : vector<8x128xi1>, vector<8x128xf32>
    %192 = vector.shape_cast %188 : vector<8x1xi1> to vector<8x1xi1>
    %193 = vector.broadcast %192 : vector<8x1xi1> to vector<8x128xi1>
    %194 = arith.select %193, %186, %134 : vector<8x128xi1>, vector<8x128xf32>
    %195 = vector.shape_cast %188 : vector<8x1xi1> to vector<8x1xi1>
    %196 = vector.broadcast %195 : vector<8x1xi1> to vector<8x15xi1>
    %197 = arith.select %196, %139, %137 : vector<8x15xi1>, vector<8x15xf32>
    %c24 = arith.constant 24 : index
    %c0_56 = arith.constant 0 : index
    %198 = vector.load %arg21[%c24, %c0_56] : memref<64x384xf32, #tpu.memory_space<vmem>>, vector<8x384xf32>
    %c24_57 = arith.constant 24 : index
    %c0_58 = arith.constant 0 : index
    %199 = vector.load %arg0[%c24_57, %c0_58] : memref<64x15xf32, #tpu.memory_space<vmem>>, vector<8x15xf32>
    %200 = arith.truncf %191 : vector<8x128xf32> to vector<8x128xbf16>
    %c0_59 = arith.constant 0 : index
    %c0_60 = arith.constant 0 : index
    %201 = vector.load %arg5[%c0_59, %c0_60] : memref<128x384xbf16, #tpu.memory_space<vmem>>, vector<128x384xbf16>
    %cst_61 = arith.constant dense<0.000000e+00> : vector<8x384xf32>
    %202 = tpu.matmul %200, %201, %cst_61 {dimension_numbers = #tpu.dot_dimension_numbers<[1], [0], [0], [1], [0, 0, 1, 1], [], []>} : vector<8x128xbf16>, vector<128x384xbf16>, vector<8x384xf32> -> vector<8x384xf32>
    %203 = arith.addf %202, %11 : vector<8x384xf32>
    %204 = vector.extract_strided_slice %198 {offsets = [0, 0], sizes = [8, 256], strides = [1, 1]} : vector<8x384xf32> to vector<8x256xf32>
    %205 = vector.extract_strided_slice %203 {offsets = [0, 0], sizes = [8, 256], strides = [1, 1]} : vector<8x384xf32> to vector<8x256xf32>
    %206 = arith.addf %204, %205 : vector<8x256xf32>
    %207 = arith.negf %206 : vector<8x256xf32>
    %208 = math.exp %207 : vector<8x256xf32>
    %cst_62 = arith.constant 1.000000e+00 : f32
    %209 = vector.broadcast %cst_62 : f32 to vector<8x256xf32>
    %210 = arith.addf %209, %208 : vector<8x256xf32>
    %211 = arith.divf %209, %210 : vector<8x256xf32>
    %212 = vector.extract_strided_slice %211 {offsets = [0, 0], sizes = [8, 128], strides = [1, 1]} : vector<8x256xf32> to vector<8x128xf32>
    %213 = vector.extract_strided_slice %211 {offsets = [0, 128], sizes = [8, 128], strides = [1, 1]} : vector<8x256xf32> to vector<8x128xf32>
    %214 = vector.extract_strided_slice %198 {offsets = [0, 256], sizes = [8, 128], strides = [1, 1]} : vector<8x384xf32> to vector<8x128xf32>
    %215 = vector.extract_strided_slice %203 {offsets = [0, 256], sizes = [8, 128], strides = [1, 1]} : vector<8x384xf32> to vector<8x128xf32>
    %216 = arith.mulf %212, %215 : vector<8x128xf32>
    %217 = arith.addf %214, %216 : vector<8x128xf32>
    %218 = math.tanh %217 : vector<8x128xf32>
    %cst_63 = arith.constant 1.000000e+00 : f32
    %219 = vector.broadcast %cst_63 : f32 to vector<8x128xf32>
    %220 = arith.subf %219, %213 : vector<8x128xf32>
    %221 = arith.mulf %220, %218 : vector<8x128xf32>
    %222 = arith.mulf %213, %191 : vector<8x128xf32>
    %223 = arith.addf %221, %222 : vector<8x128xf32>
    %224 = tpu.concatenate %223, %194 in 1 : vector<8x128xf32>, vector<8x128xf32> -> vector<8x256xf32>
    %225 = arith.truncf %224 : vector<8x256xf32> to vector<8x256xbf16>
    %c0_64 = arith.constant 0 : index
    %c0_65 = arith.constant 0 : index
    %226 = vector.load %arg7[%c0_64, %c0_65] : memref<256x512xbf16, #tpu.memory_space<vmem>>, vector<256x512xbf16>
    %cst_66 = arith.constant dense<0.000000e+00> : vector<8x512xf32>
    %227 = tpu.matmul %225, %226, %cst_66 {dimension_numbers = #tpu.dot_dimension_numbers<[1], [0], [0], [1], [0, 0, 1, 1], [], []>} : vector<8x256xbf16>, vector<256x512xbf16>, vector<8x512xf32> -> vector<8x512xf32>
    %228 = arith.addf %227, %14 : vector<8x512xf32>
    %229 = vector.extract_strided_slice %228 {offsets = [0, 0], sizes = [8, 256], strides = [1, 1]} : vector<8x512xf32> to vector<8x256xf32>
    %230 = arith.negf %229 : vector<8x256xf32>
    %231 = math.exp %230 : vector<8x256xf32>
    %cst_67 = arith.constant 1.000000e+00 : f32
    %232 = vector.broadcast %cst_67 : f32 to vector<8x256xf32>
    %233 = arith.addf %232, %231 : vector<8x256xf32>
    %234 = arith.divf %232, %233 : vector<8x256xf32>
    %235 = vector.extract_strided_slice %234 {offsets = [0, 0], sizes = [8, 128], strides = [1, 1]} : vector<8x256xf32> to vector<8x128xf32>
    %236 = vector.extract_strided_slice %234 {offsets = [0, 128], sizes = [8, 128], strides = [1, 1]} : vector<8x256xf32> to vector<8x128xf32>
    %237 = vector.extract_strided_slice %228 {offsets = [0, 256], sizes = [8, 128], strides = [1, 1]} : vector<8x512xf32> to vector<8x128xf32>
    %238 = vector.extract_strided_slice %228 {offsets = [0, 384], sizes = [8, 128], strides = [1, 1]} : vector<8x512xf32> to vector<8x128xf32>
    %239 = arith.mulf %235, %238 : vector<8x128xf32>
    %240 = arith.addf %237, %239 : vector<8x128xf32>
    %241 = math.tanh %240 : vector<8x128xf32>
    %cst_68 = arith.constant 1.000000e+00 : f32
    %242 = vector.broadcast %cst_68 : f32 to vector<8x128xf32>
    %243 = arith.subf %242, %236 : vector<8x128xf32>
    %244 = arith.mulf %243, %241 : vector<8x128xf32>
    %245 = arith.mulf %236, %194 : vector<8x128xf32>
    %246 = arith.addf %244, %245 : vector<8x128xf32>
    %c3_i32 = arith.constant 3 : i32
    %247 = vector.broadcast %c3_i32 : i32 to vector<8x1xi32>
    %248 = arith.cmpi sgt, %8, %247 : vector<8x1xi32>
    %249 = vector.shape_cast %248 : vector<8x1xi1> to vector<8x1xi1>
    %250 = vector.broadcast %249 : vector<8x1xi1> to vector<8x128xi1>
    %251 = arith.select %250, %223, %191 : vector<8x128xi1>, vector<8x128xf32>
    %252 = vector.shape_cast %248 : vector<8x1xi1> to vector<8x1xi1>
    %253 = vector.broadcast %252 : vector<8x1xi1> to vector<8x128xi1>
    %254 = arith.select %253, %246, %194 : vector<8x128xi1>, vector<8x128xf32>
    %255 = vector.shape_cast %248 : vector<8x1xi1> to vector<8x1xi1>
    %256 = vector.broadcast %255 : vector<8x1xi1> to vector<8x15xi1>
    %257 = arith.select %256, %199, %197 : vector<8x15xi1>, vector<8x15xf32>
    %c32 = arith.constant 32 : index
    %c0_69 = arith.constant 0 : index
    %258 = vector.load %arg21[%c32, %c0_69] : memref<64x384xf32, #tpu.memory_space<vmem>>, vector<8x384xf32>
    %c32_70 = arith.constant 32 : index
    %c0_71 = arith.constant 0 : index
    %259 = vector.load %arg0[%c32_70, %c0_71] : memref<64x15xf32, #tpu.memory_space<vmem>>, vector<8x15xf32>
    %260 = arith.truncf %251 : vector<8x128xf32> to vector<8x128xbf16>
    %c0_72 = arith.constant 0 : index
    %c0_73 = arith.constant 0 : index
    %261 = vector.load %arg5[%c0_72, %c0_73] : memref<128x384xbf16, #tpu.memory_space<vmem>>, vector<128x384xbf16>
    %cst_74 = arith.constant dense<0.000000e+00> : vector<8x384xf32>
    %262 = tpu.matmul %260, %261, %cst_74 {dimension_numbers = #tpu.dot_dimension_numbers<[1], [0], [0], [1], [0, 0, 1, 1], [], []>} : vector<8x128xbf16>, vector<128x384xbf16>, vector<8x384xf32> -> vector<8x384xf32>
    %263 = arith.addf %262, %11 : vector<8x384xf32>
    %264 = vector.extract_strided_slice %258 {offsets = [0, 0], sizes = [8, 256], strides = [1, 1]} : vector<8x384xf32> to vector<8x256xf32>
    %265 = vector.extract_strided_slice %263 {offsets = [0, 0], sizes = [8, 256], strides = [1, 1]} : vector<8x384xf32> to vector<8x256xf32>
    %266 = arith.addf %264, %265 : vector<8x256xf32>
    %267 = arith.negf %266 : vector<8x256xf32>
    %268 = math.exp %267 : vector<8x256xf32>
    %cst_75 = arith.constant 1.000000e+00 : f32
    %269 = vector.broadcast %cst_75 : f32 to vector<8x256xf32>
    %270 = arith.addf %269, %268 : vector<8x256xf32>
    %271 = arith.divf %269, %270 : vector<8x256xf32>
    %272 = vector.extract_strided_slice %271 {offsets = [0, 0], sizes = [8, 128], strides = [1, 1]} : vector<8x256xf32> to vector<8x128xf32>
    %273 = vector.extract_strided_slice %271 {offsets = [0, 128], sizes = [8, 128], strides = [1, 1]} : vector<8x256xf32> to vector<8x128xf32>
    %274 = vector.extract_strided_slice %258 {offsets = [0, 256], sizes = [8, 128], strides = [1, 1]} : vector<8x384xf32> to vector<8x128xf32>
    %275 = vector.extract_strided_slice %263 {offsets = [0, 256], sizes = [8, 128], strides = [1, 1]} : vector<8x384xf32> to vector<8x128xf32>
    %276 = arith.mulf %272, %275 : vector<8x128xf32>
    %277 = arith.addf %274, %276 : vector<8x128xf32>
    %278 = math.tanh %277 : vector<8x128xf32>
    %cst_76 = arith.constant 1.000000e+00 : f32
    %279 = vector.broadcast %cst_76 : f32 to vector<8x128xf32>
    %280 = arith.subf %279, %273 : vector<8x128xf32>
    %281 = arith.mulf %280, %278 : vector<8x128xf32>
    %282 = arith.mulf %273, %251 : vector<8x128xf32>
    %283 = arith.addf %281, %282 : vector<8x128xf32>
    %284 = tpu.concatenate %283, %254 in 1 : vector<8x128xf32>, vector<8x128xf32> -> vector<8x256xf32>
    %285 = arith.truncf %284 : vector<8x256xf32> to vector<8x256xbf16>
    %c0_77 = arith.constant 0 : index
    %c0_78 = arith.constant 0 : index
    %286 = vector.load %arg7[%c0_77, %c0_78] : memref<256x512xbf16, #tpu.memory_space<vmem>>, vector<256x512xbf16>
    %cst_79 = arith.constant dense<0.000000e+00> : vector<8x512xf32>
    %287 = tpu.matmul %285, %286, %cst_79 {dimension_numbers = #tpu.dot_dimension_numbers<[1], [0], [0], [1], [0, 0, 1, 1], [], []>} : vector<8x256xbf16>, vector<256x512xbf16>, vector<8x512xf32> -> vector<8x512xf32>
    %288 = arith.addf %287, %14 : vector<8x512xf32>
    %289 = vector.extract_strided_slice %288 {offsets = [0, 0], sizes = [8, 256], strides = [1, 1]} : vector<8x512xf32> to vector<8x256xf32>
    %290 = arith.negf %289 : vector<8x256xf32>
    %291 = math.exp %290 : vector<8x256xf32>
    %cst_80 = arith.constant 1.000000e+00 : f32
    %292 = vector.broadcast %cst_80 : f32 to vector<8x256xf32>
    %293 = arith.addf %292, %291 : vector<8x256xf32>
    %294 = arith.divf %292, %293 : vector<8x256xf32>
    %295 = vector.extract_strided_slice %294 {offsets = [0, 0], sizes = [8, 128], strides = [1, 1]} : vector<8x256xf32> to vector<8x128xf32>
    %296 = vector.extract_strided_slice %294 {offsets = [0, 128], sizes = [8, 128], strides = [1, 1]} : vector<8x256xf32> to vector<8x128xf32>
    %297 = vector.extract_strided_slice %288 {offsets = [0, 256], sizes = [8, 128], strides = [1, 1]} : vector<8x512xf32> to vector<8x128xf32>
    %298 = vector.extract_strided_slice %288 {offsets = [0, 384], sizes = [8, 128], strides = [1, 1]} : vector<8x512xf32> to vector<8x128xf32>
    %299 = arith.mulf %295, %298 : vector<8x128xf32>
    %300 = arith.addf %297, %299 : vector<8x128xf32>
    %301 = math.tanh %300 : vector<8x128xf32>
    %cst_81 = arith.constant 1.000000e+00 : f32
    %302 = vector.broadcast %cst_81 : f32 to vector<8x128xf32>
    %303 = arith.subf %302, %296 : vector<8x128xf32>
    %304 = arith.mulf %303, %301 : vector<8x128xf32>
    %305 = arith.mulf %296, %254 : vector<8x128xf32>
    %306 = arith.addf %304, %305 : vector<8x128xf32>
    %c4_i32 = arith.constant 4 : i32
    %307 = vector.broadcast %c4_i32 : i32 to vector<8x1xi32>
    %308 = arith.cmpi sgt, %8, %307 : vector<8x1xi32>
    %309 = vector.shape_cast %308 : vector<8x1xi1> to vector<8x1xi1>
    %310 = vector.broadcast %309 : vector<8x1xi1> to vector<8x128xi1>
    %311 = arith.select %310, %283, %251 : vector<8x128xi1>, vector<8x128xf32>
    %312 = vector.shape_cast %308 : vector<8x1xi1> to vector<8x1xi1>
    %313 = vector.broadcast %312 : vector<8x1xi1> to vector<8x128xi1>
    %314 = arith.select %313, %306, %254 : vector<8x128xi1>, vector<8x128xf32>
    %315 = vector.shape_cast %308 : vector<8x1xi1> to vector<8x1xi1>
    %316 = vector.broadcast %315 : vector<8x1xi1> to vector<8x15xi1>
    %317 = arith.select %316, %259, %257 : vector<8x15xi1>, vector<8x15xf32>
    %c40 = arith.constant 40 : index
    %c0_82 = arith.constant 0 : index
    %318 = vector.load %arg21[%c40, %c0_82] : memref<64x384xf32, #tpu.memory_space<vmem>>, vector<8x384xf32>
    %c40_83 = arith.constant 40 : index
    %c0_84 = arith.constant 0 : index
    %319 = vector.load %arg0[%c40_83, %c0_84] : memref<64x15xf32, #tpu.memory_space<vmem>>, vector<8x15xf32>
    %320 = arith.truncf %311 : vector<8x128xf32> to vector<8x128xbf16>
    %c0_85 = arith.constant 0 : index
    %c0_86 = arith.constant 0 : index
    %321 = vector.load %arg5[%c0_85, %c0_86] : memref<128x384xbf16, #tpu.memory_space<vmem>>, vector<128x384xbf16>
    %cst_87 = arith.constant dense<0.000000e+00> : vector<8x384xf32>
    %322 = tpu.matmul %320, %321, %cst_87 {dimension_numbers = #tpu.dot_dimension_numbers<[1], [0], [0], [1], [0, 0, 1, 1], [], []>} : vector<8x128xbf16>, vector<128x384xbf16>, vector<8x384xf32> -> vector<8x384xf32>
    %323 = arith.addf %322, %11 : vector<8x384xf32>
    %324 = vector.extract_strided_slice %318 {offsets = [0, 0], sizes = [8, 256], strides = [1, 1]} : vector<8x384xf32> to vector<8x256xf32>
    %325 = vector.extract_strided_slice %323 {offsets = [0, 0], sizes = [8, 256], strides = [1, 1]} : vector<8x384xf32> to vector<8x256xf32>
    %326 = arith.addf %324, %325 : vector<8x256xf32>
    %327 = arith.negf %326 : vector<8x256xf32>
    %328 = math.exp %327 : vector<8x256xf32>
    %cst_88 = arith.constant 1.000000e+00 : f32
    %329 = vector.broadcast %cst_88 : f32 to vector<8x256xf32>
    %330 = arith.addf %329, %328 : vector<8x256xf32>
    %331 = arith.divf %329, %330 : vector<8x256xf32>
    %332 = vector.extract_strided_slice %331 {offsets = [0, 0], sizes = [8, 128], strides = [1, 1]} : vector<8x256xf32> to vector<8x128xf32>
    %333 = vector.extract_strided_slice %331 {offsets = [0, 128], sizes = [8, 128], strides = [1, 1]} : vector<8x256xf32> to vector<8x128xf32>
    %334 = vector.extract_strided_slice %318 {offsets = [0, 256], sizes = [8, 128], strides = [1, 1]} : vector<8x384xf32> to vector<8x128xf32>
    %335 = vector.extract_strided_slice %323 {offsets = [0, 256], sizes = [8, 128], strides = [1, 1]} : vector<8x384xf32> to vector<8x128xf32>
    %336 = arith.mulf %332, %335 : vector<8x128xf32>
    %337 = arith.addf %334, %336 : vector<8x128xf32>
    %338 = math.tanh %337 : vector<8x128xf32>
    %cst_89 = arith.constant 1.000000e+00 : f32
    %339 = vector.broadcast %cst_89 : f32 to vector<8x128xf32>
    %340 = arith.subf %339, %333 : vector<8x128xf32>
    %341 = arith.mulf %340, %338 : vector<8x128xf32>
    %342 = arith.mulf %333, %311 : vector<8x128xf32>
    %343 = arith.addf %341, %342 : vector<8x128xf32>
    %344 = tpu.concatenate %343, %314 in 1 : vector<8x128xf32>, vector<8x128xf32> -> vector<8x256xf32>
    %345 = arith.truncf %344 : vector<8x256xf32> to vector<8x256xbf16>
    %c0_90 = arith.constant 0 : index
    %c0_91 = arith.constant 0 : index
    %346 = vector.load %arg7[%c0_90, %c0_91] : memref<256x512xbf16, #tpu.memory_space<vmem>>, vector<256x512xbf16>
    %cst_92 = arith.constant dense<0.000000e+00> : vector<8x512xf32>
    %347 = tpu.matmul %345, %346, %cst_92 {dimension_numbers = #tpu.dot_dimension_numbers<[1], [0], [0], [1], [0, 0, 1, 1], [], []>} : vector<8x256xbf16>, vector<256x512xbf16>, vector<8x512xf32> -> vector<8x512xf32>
    %348 = arith.addf %347, %14 : vector<8x512xf32>
    %349 = vector.extract_strided_slice %348 {offsets = [0, 0], sizes = [8, 256], strides = [1, 1]} : vector<8x512xf32> to vector<8x256xf32>
    %350 = arith.negf %349 : vector<8x256xf32>
    %351 = math.exp %350 : vector<8x256xf32>
    %cst_93 = arith.constant 1.000000e+00 : f32
    %352 = vector.broadcast %cst_93 : f32 to vector<8x256xf32>
    %353 = arith.addf %352, %351 : vector<8x256xf32>
    %354 = arith.divf %352, %353 : vector<8x256xf32>
    %355 = vector.extract_strided_slice %354 {offsets = [0, 0], sizes = [8, 128], strides = [1, 1]} : vector<8x256xf32> to vector<8x128xf32>
    %356 = vector.extract_strided_slice %354 {offsets = [0, 128], sizes = [8, 128], strides = [1, 1]} : vector<8x256xf32> to vector<8x128xf32>
    %357 = vector.extract_strided_slice %348 {offsets = [0, 256], sizes = [8, 128], strides = [1, 1]} : vector<8x512xf32> to vector<8x128xf32>
    %358 = vector.extract_strided_slice %348 {offsets = [0, 384], sizes = [8, 128], strides = [1, 1]} : vector<8x512xf32> to vector<8x128xf32>
    %359 = arith.mulf %355, %358 : vector<8x128xf32>
    %360 = arith.addf %357, %359 : vector<8x128xf32>
    %361 = math.tanh %360 : vector<8x128xf32>
    %cst_94 = arith.constant 1.000000e+00 : f32
    %362 = vector.broadcast %cst_94 : f32 to vector<8x128xf32>
    %363 = arith.subf %362, %356 : vector<8x128xf32>
    %364 = arith.mulf %363, %361 : vector<8x128xf32>
    %365 = arith.mulf %356, %314 : vector<8x128xf32>
    %366 = arith.addf %364, %365 : vector<8x128xf32>
    %c5_i32 = arith.constant 5 : i32
    %367 = vector.broadcast %c5_i32 : i32 to vector<8x1xi32>
    %368 = arith.cmpi sgt, %8, %367 : vector<8x1xi32>
    %369 = vector.shape_cast %368 : vector<8x1xi1> to vector<8x1xi1>
    %370 = vector.broadcast %369 : vector<8x1xi1> to vector<8x128xi1>
    %371 = arith.select %370, %343, %311 : vector<8x128xi1>, vector<8x128xf32>
    %372 = vector.shape_cast %368 : vector<8x1xi1> to vector<8x1xi1>
    %373 = vector.broadcast %372 : vector<8x1xi1> to vector<8x128xi1>
    %374 = arith.select %373, %366, %314 : vector<8x128xi1>, vector<8x128xf32>
    %375 = vector.shape_cast %368 : vector<8x1xi1> to vector<8x1xi1>
    %376 = vector.broadcast %375 : vector<8x1xi1> to vector<8x15xi1>
    %377 = arith.select %376, %319, %317 : vector<8x15xi1>, vector<8x15xf32>
    %c48 = arith.constant 48 : index
    %c0_95 = arith.constant 0 : index
    %378 = vector.load %arg21[%c48, %c0_95] : memref<64x384xf32, #tpu.memory_space<vmem>>, vector<8x384xf32>
    %c48_96 = arith.constant 48 : index
    %c0_97 = arith.constant 0 : index
    %379 = vector.load %arg0[%c48_96, %c0_97] : memref<64x15xf32, #tpu.memory_space<vmem>>, vector<8x15xf32>
    %380 = arith.truncf %371 : vector<8x128xf32> to vector<8x128xbf16>
    %c0_98 = arith.constant 0 : index
    %c0_99 = arith.constant 0 : index
    %381 = vector.load %arg5[%c0_98, %c0_99] : memref<128x384xbf16, #tpu.memory_space<vmem>>, vector<128x384xbf16>
    %cst_100 = arith.constant dense<0.000000e+00> : vector<8x384xf32>
    %382 = tpu.matmul %380, %381, %cst_100 {dimension_numbers = #tpu.dot_dimension_numbers<[1], [0], [0], [1], [0, 0, 1, 1], [], []>} : vector<8x128xbf16>, vector<128x384xbf16>, vector<8x384xf32> -> vector<8x384xf32>
    %383 = arith.addf %382, %11 : vector<8x384xf32>
    %384 = vector.extract_strided_slice %378 {offsets = [0, 0], sizes = [8, 256], strides = [1, 1]} : vector<8x384xf32> to vector<8x256xf32>
    %385 = vector.extract_strided_slice %383 {offsets = [0, 0], sizes = [8, 256], strides = [1, 1]} : vector<8x384xf32> to vector<8x256xf32>
    %386 = arith.addf %384, %385 : vector<8x256xf32>
    %387 = arith.negf %386 : vector<8x256xf32>
    %388 = math.exp %387 : vector<8x256xf32>
    %cst_101 = arith.constant 1.000000e+00 : f32
    %389 = vector.broadcast %cst_101 : f32 to vector<8x256xf32>
    %390 = arith.addf %389, %388 : vector<8x256xf32>
    %391 = arith.divf %389, %390 : vector<8x256xf32>
    %392 = vector.extract_strided_slice %391 {offsets = [0, 0], sizes = [8, 128], strides = [1, 1]} : vector<8x256xf32> to vector<8x128xf32>
    %393 = vector.extract_strided_slice %391 {offsets = [0, 128], sizes = [8, 128], strides = [1, 1]} : vector<8x256xf32> to vector<8x128xf32>
    %394 = vector.extract_strided_slice %378 {offsets = [0, 256], sizes = [8, 128], strides = [1, 1]} : vector<8x384xf32> to vector<8x128xf32>
    %395 = vector.extract_strided_slice %383 {offsets = [0, 256], sizes = [8, 128], strides = [1, 1]} : vector<8x384xf32> to vector<8x128xf32>
    %396 = arith.mulf %392, %395 : vector<8x128xf32>
    %397 = arith.addf %394, %396 : vector<8x128xf32>
    %398 = math.tanh %397 : vector<8x128xf32>
    %cst_102 = arith.constant 1.000000e+00 : f32
    %399 = vector.broadcast %cst_102 : f32 to vector<8x128xf32>
    %400 = arith.subf %399, %393 : vector<8x128xf32>
    %401 = arith.mulf %400, %398 : vector<8x128xf32>
    %402 = arith.mulf %393, %371 : vector<8x128xf32>
    %403 = arith.addf %401, %402 : vector<8x128xf32>
    %404 = tpu.concatenate %403, %374 in 1 : vector<8x128xf32>, vector<8x128xf32> -> vector<8x256xf32>
    %405 = arith.truncf %404 : vector<8x256xf32> to vector<8x256xbf16>
    %c0_103 = arith.constant 0 : index
    %c0_104 = arith.constant 0 : index
    %406 = vector.load %arg7[%c0_103, %c0_104] : memref<256x512xbf16, #tpu.memory_space<vmem>>, vector<256x512xbf16>
    %cst_105 = arith.constant dense<0.000000e+00> : vector<8x512xf32>
    %407 = tpu.matmul %405, %406, %cst_105 {dimension_numbers = #tpu.dot_dimension_numbers<[1], [0], [0], [1], [0, 0, 1, 1], [], []>} : vector<8x256xbf16>, vector<256x512xbf16>, vector<8x512xf32> -> vector<8x512xf32>
    %408 = arith.addf %407, %14 : vector<8x512xf32>
    %409 = vector.extract_strided_slice %408 {offsets = [0, 0], sizes = [8, 256], strides = [1, 1]} : vector<8x512xf32> to vector<8x256xf32>
    %410 = arith.negf %409 : vector<8x256xf32>
    %411 = math.exp %410 : vector<8x256xf32>
    %cst_106 = arith.constant 1.000000e+00 : f32
    %412 = vector.broadcast %cst_106 : f32 to vector<8x256xf32>
    %413 = arith.addf %412, %411 : vector<8x256xf32>
    %414 = arith.divf %412, %413 : vector<8x256xf32>
    %415 = vector.extract_strided_slice %414 {offsets = [0, 0], sizes = [8, 128], strides = [1, 1]} : vector<8x256xf32> to vector<8x128xf32>
    %416 = vector.extract_strided_slice %414 {offsets = [0, 128], sizes = [8, 128], strides = [1, 1]} : vector<8x256xf32> to vector<8x128xf32>
    %417 = vector.extract_strided_slice %408 {offsets = [0, 256], sizes = [8, 128], strides = [1, 1]} : vector<8x512xf32> to vector<8x128xf32>
    %418 = vector.extract_strided_slice %408 {offsets = [0, 384], sizes = [8, 128], strides = [1, 1]} : vector<8x512xf32> to vector<8x128xf32>
    %419 = arith.mulf %415, %418 : vector<8x128xf32>
    %420 = arith.addf %417, %419 : vector<8x128xf32>
    %421 = math.tanh %420 : vector<8x128xf32>
    %cst_107 = arith.constant 1.000000e+00 : f32
    %422 = vector.broadcast %cst_107 : f32 to vector<8x128xf32>
    %423 = arith.subf %422, %416 : vector<8x128xf32>
    %424 = arith.mulf %423, %421 : vector<8x128xf32>
    %425 = arith.mulf %416, %374 : vector<8x128xf32>
    %426 = arith.addf %424, %425 : vector<8x128xf32>
    %c6_i32 = arith.constant 6 : i32
    %427 = vector.broadcast %c6_i32 : i32 to vector<8x1xi32>
    %428 = arith.cmpi sgt, %8, %427 : vector<8x1xi32>
    %429 = vector.shape_cast %428 : vector<8x1xi1> to vector<8x1xi1>
    %430 = vector.broadcast %429 : vector<8x1xi1> to vector<8x128xi1>
    %431 = arith.select %430, %403, %371 : vector<8x128xi1>, vector<8x128xf32>
    %432 = vector.shape_cast %428 : vector<8x1xi1> to vector<8x1xi1>
    %433 = vector.broadcast %432 : vector<8x1xi1> to vector<8x128xi1>
    %434 = arith.select %433, %426, %374 : vector<8x128xi1>, vector<8x128xf32>
    %435 = vector.shape_cast %428 : vector<8x1xi1> to vector<8x1xi1>
    %436 = vector.broadcast %435 : vector<8x1xi1> to vector<8x15xi1>
    %437 = arith.select %436, %379, %377 : vector<8x15xi1>, vector<8x15xf32>
    %c56 = arith.constant 56 : index
    %c0_108 = arith.constant 0 : index
    %438 = vector.load %arg21[%c56, %c0_108] : memref<64x384xf32, #tpu.memory_space<vmem>>, vector<8x384xf32>
    %c56_109 = arith.constant 56 : index
    %c0_110 = arith.constant 0 : index
    %439 = vector.load %arg0[%c56_109, %c0_110] : memref<64x15xf32, #tpu.memory_space<vmem>>, vector<8x15xf32>
    %440 = arith.truncf %431 : vector<8x128xf32> to vector<8x128xbf16>
    %c0_111 = arith.constant 0 : index
    %c0_112 = arith.constant 0 : index
    %441 = vector.load %arg5[%c0_111, %c0_112] : memref<128x384xbf16, #tpu.memory_space<vmem>>, vector<128x384xbf16>
    %cst_113 = arith.constant dense<0.000000e+00> : vector<8x384xf32>
    %442 = tpu.matmul %440, %441, %cst_113 {dimension_numbers = #tpu.dot_dimension_numbers<[1], [0], [0], [1], [0, 0, 1, 1], [], []>} : vector<8x128xbf16>, vector<128x384xbf16>, vector<8x384xf32> -> vector<8x384xf32>
    %443 = arith.addf %442, %11 : vector<8x384xf32>
    %444 = vector.extract_strided_slice %438 {offsets = [0, 0], sizes = [8, 256], strides = [1, 1]} : vector<8x384xf32> to vector<8x256xf32>
    %445 = vector.extract_strided_slice %443 {offsets = [0, 0], sizes = [8, 256], strides = [1, 1]} : vector<8x384xf32> to vector<8x256xf32>
    %446 = arith.addf %444, %445 : vector<8x256xf32>
    %447 = arith.negf %446 : vector<8x256xf32>
    %448 = math.exp %447 : vector<8x256xf32>
    %cst_114 = arith.constant 1.000000e+00 : f32
    %449 = vector.broadcast %cst_114 : f32 to vector<8x256xf32>
    %450 = arith.addf %449, %448 : vector<8x256xf32>
    %451 = arith.divf %449, %450 : vector<8x256xf32>
    %452 = vector.extract_strided_slice %451 {offsets = [0, 0], sizes = [8, 128], strides = [1, 1]} : vector<8x256xf32> to vector<8x128xf32>
    %453 = vector.extract_strided_slice %451 {offsets = [0, 128], sizes = [8, 128], strides = [1, 1]} : vector<8x256xf32> to vector<8x128xf32>
    %454 = vector.extract_strided_slice %438 {offsets = [0, 256], sizes = [8, 128], strides = [1, 1]} : vector<8x384xf32> to vector<8x128xf32>
    %455 = vector.extract_strided_slice %443 {offsets = [0, 256], sizes = [8, 128], strides = [1, 1]} : vector<8x384xf32> to vector<8x128xf32>
    %456 = arith.mulf %452, %455 : vector<8x128xf32>
    %457 = arith.addf %454, %456 : vector<8x128xf32>
    %458 = math.tanh %457 : vector<8x128xf32>
    %cst_115 = arith.constant 1.000000e+00 : f32
    %459 = vector.broadcast %cst_115 : f32 to vector<8x128xf32>
    %460 = arith.subf %459, %453 : vector<8x128xf32>
    %461 = arith.mulf %460, %458 : vector<8x128xf32>
    %462 = arith.mulf %453, %431 : vector<8x128xf32>
    %463 = arith.addf %461, %462 : vector<8x128xf32>
    %464 = tpu.concatenate %463, %434 in 1 : vector<8x128xf32>, vector<8x128xf32> -> vector<8x256xf32>
    %465 = arith.truncf %464 : vector<8x256xf32> to vector<8x256xbf16>
    %c0_116 = arith.constant 0 : index
    %c0_117 = arith.constant 0 : index
    %466 = vector.load %arg7[%c0_116, %c0_117] : memref<256x512xbf16, #tpu.memory_space<vmem>>, vector<256x512xbf16>
    %cst_118 = arith.constant dense<0.000000e+00> : vector<8x512xf32>
    %467 = tpu.matmul %465, %466, %cst_118 {dimension_numbers = #tpu.dot_dimension_numbers<[1], [0], [0], [1], [0, 0, 1, 1], [], []>} : vector<8x256xbf16>, vector<256x512xbf16>, vector<8x512xf32> -> vector<8x512xf32>
    %468 = arith.addf %467, %14 : vector<8x512xf32>
    %469 = vector.extract_strided_slice %468 {offsets = [0, 0], sizes = [8, 256], strides = [1, 1]} : vector<8x512xf32> to vector<8x256xf32>
    %470 = arith.negf %469 : vector<8x256xf32>
    %471 = math.exp %470 : vector<8x256xf32>
    %cst_119 = arith.constant 1.000000e+00 : f32
    %472 = vector.broadcast %cst_119 : f32 to vector<8x256xf32>
    %473 = arith.addf %472, %471 : vector<8x256xf32>
    %474 = arith.divf %472, %473 : vector<8x256xf32>
    %475 = vector.extract_strided_slice %474 {offsets = [0, 0], sizes = [8, 128], strides = [1, 1]} : vector<8x256xf32> to vector<8x128xf32>
    %476 = vector.extract_strided_slice %474 {offsets = [0, 128], sizes = [8, 128], strides = [1, 1]} : vector<8x256xf32> to vector<8x128xf32>
    %477 = vector.extract_strided_slice %468 {offsets = [0, 256], sizes = [8, 128], strides = [1, 1]} : vector<8x512xf32> to vector<8x128xf32>
    %478 = vector.extract_strided_slice %468 {offsets = [0, 384], sizes = [8, 128], strides = [1, 1]} : vector<8x512xf32> to vector<8x128xf32>
    %479 = arith.mulf %475, %478 : vector<8x128xf32>
    %480 = arith.addf %477, %479 : vector<8x128xf32>
    %481 = math.tanh %480 : vector<8x128xf32>
    %cst_120 = arith.constant 1.000000e+00 : f32
    %482 = vector.broadcast %cst_120 : f32 to vector<8x128xf32>
    %483 = arith.subf %482, %476 : vector<8x128xf32>
    %484 = arith.mulf %483, %481 : vector<8x128xf32>
    %485 = arith.mulf %476, %434 : vector<8x128xf32>
    %486 = arith.addf %484, %485 : vector<8x128xf32>
    %c7_i32 = arith.constant 7 : i32
    %487 = vector.broadcast %c7_i32 : i32 to vector<8x1xi32>
    %488 = arith.cmpi sgt, %8, %487 : vector<8x1xi32>
    %489 = vector.shape_cast %488 : vector<8x1xi1> to vector<8x1xi1>
    %490 = vector.broadcast %489 : vector<8x1xi1> to vector<8x128xi1>
    %491 = arith.select %490, %486, %434 : vector<8x128xi1>, vector<8x128xf32>
    %492 = vector.shape_cast %488 : vector<8x1xi1> to vector<8x1xi1>
    %493 = vector.broadcast %492 : vector<8x1xi1> to vector<8x15xi1>
    %494 = arith.select %493, %439, %437 : vector<8x15xi1>, vector<8x15xf32>
    %c0_121 = arith.constant 0 : index
    %c0_122 = arith.constant 0 : index
    %495 = vector.load %arg9[%c0_121, %c0_122] : memref<128x256xf32, #tpu.memory_space<vmem>>, vector<128x256xf32>
    %cst_123 = arith.constant dense<0.000000e+00> : vector<8x256xf32>
    %496 = tpu.matmul %491, %495, %cst_123 {dimension_numbers = #tpu.dot_dimension_numbers<[1], [0], [0], [1], [0, 0, 1, 1], [], []>} : vector<8x128xf32>, vector<128x256xf32>, vector<8x256xf32> -> vector<8x256xf32>
    %c0_124 = arith.constant 0 : index
    %c0_125 = arith.constant 0 : index
    %497 = vector.load %arg10[%c0_124, %c0_125] : memref<1x256xf32, #tpu.memory_space<vmem>>, vector<1x256xf32>
    %498 = vector.broadcast %497 : vector<1x256xf32> to vector<8x256xf32>
    %499 = arith.addf %496, %498 : vector<8x256xf32>
    %500 = vector.extract_strided_slice %499 {offsets = [0, 0], sizes = [8, 5], strides = [1, 1]} : vector<8x256xf32> to vector<8x5xf32>
    %501 = vector.extract_strided_slice %499 {offsets = [0, 128], sizes = [8, 5], strides = [1, 1]} : vector<8x256xf32> to vector<8x5xf32>
    %cst_126 = arith.constant -1.000000e+01 : f32
    %cst_127 = arith.constant 1.000000e+01 : f32
    %502 = vector.broadcast %cst_126 : f32 to vector<8x5xf32>
    %503 = arith.maximumf %502, %501 : vector<8x5xf32>
    %504 = vector.broadcast %cst_127 : f32 to vector<8x5xf32>
    %505 = arith.minimumf %504, %503 : vector<8x5xf32>
    %c0_128 = arith.constant 0 : index
    %c0_129 = arith.constant 0 : index
    %506 = vector.load %arg18[%c0_128, %c0_129] : memref<8x5xf32, #tpu.memory_space<vmem>>, vector<8x5xf32>
    tpu.vector_store %arg18[%c0_128, %c0_129], %500 {strides = array<i32>} : memref<8x5xf32, #tpu.memory_space<vmem>>, vector<8x5xf32>,
    %c0_130 = arith.constant 0 : index
    %c0_131 = arith.constant 0 : index
    %507 = vector.load %arg19[%c0_130, %c0_131] : memref<8x5xf32, #tpu.memory_space<vmem>>, vector<8x5xf32>
    tpu.vector_store %arg19[%c0_130, %c0_131], %505 {strides = array<i32>} : memref<8x5xf32, #tpu.memory_space<vmem>>, vector<8x5xf32>,
    %c0_132 = arith.constant 0 : index
    %c0_133 = arith.constant 0 : index
    %508 = vector.load %arg2[%c0_132, %c0_133] : memref<8x5xf32, #tpu.memory_space<vmem>>, vector<8x5xf32>
    %cst_134 = arith.constant 5.000000e-01 : f32
    %509 = vector.broadcast %cst_134 : f32 to vector<8x5xf32>
    %510 = arith.mulf %509, %505 : vector<8x5xf32>
    %511 = math.exp %510 : vector<8x5xf32>
    %512 = arith.mulf %508, %511 : vector<8x5xf32>
    %513 = arith.addf %500, %512 : vector<8x5xf32>
    %c0_135 = arith.constant 0 : index
    %c0_136 = arith.constant 0 : index
    %514 = vector.load %arg11[%c0_135, %c0_136] : memref<15x128xf32, #tpu.memory_space<vmem>>, vector<15x128xf32>
    %cst_137 = arith.constant dense<0.000000e+00> : vector<8x128xf32>
    %515 = tpu.matmul %494, %514, %cst_137 {dimension_numbers = #tpu.dot_dimension_numbers<[1], [0], [0], [1], [0, 0, 1, 1], [], []>} : vector<8x15xf32>, vector<15x128xf32>, vector<8x128xf32> -> vector<8x128xf32>
    %c0_138 = arith.constant 0 : index
    %c0_139 = arith.constant 0 : index
    %516 = vector.load %arg12[%c0_138, %c0_139] : memref<5x128xf32, #tpu.memory_space<vmem>>, vector<5x128xf32>
    %cst_140 = arith.constant dense<0.000000e+00> : vector<8x128xf32>
    %517 = tpu.matmul %513, %516, %cst_140 {dimension_numbers = #tpu.dot_dimension_numbers<[1], [0], [0], [1], [0, 0, 1, 1], [], []>} : vector<8x5xf32>, vector<5x128xf32>, vector<8x128xf32> -> vector<8x128xf32>
    %518 = arith.addf %515, %517 : vector<8x128xf32>
    %c0_141 = arith.constant 0 : index
    %c0_142 = arith.constant 0 : index
    %519 = vector.load %arg13[%c0_141, %c0_142] : memref<1x128xf32, #tpu.memory_space<vmem>>, vector<1x128xf32>
    %520 = vector.broadcast %519 : vector<1x128xf32> to vector<8x128xf32>
    %521 = arith.addf %518, %520 : vector<8x128xf32>
    %cst_143 = arith.constant 0.000000e+00 : f32
    %522 = vector.broadcast %cst_143 : f32 to vector<8x128xf32>
    %523 = arith.maximumf %521, %522 : vector<8x128xf32>
    %c0_144 = arith.constant 0 : index
    %c0_145 = arith.constant 0 : index
    %524 = vector.load %arg14[%c0_144, %c0_145] : memref<128x128xf32, #tpu.memory_space<vmem>>, vector<128x128xf32>
    %cst_146 = arith.constant dense<0.000000e+00> : vector<8x128xf32>
    %525 = tpu.matmul %523, %524, %cst_146 {dimension_numbers = #tpu.dot_dimension_numbers<[1], [0], [0], [1], [0, 0, 1, 1], [], []>} : vector<8x128xf32>, vector<128x128xf32>, vector<8x128xf32> -> vector<8x128xf32>
    %c0_147 = arith.constant 0 : index
    %c0_148 = arith.constant 0 : index
    %526 = vector.load %arg15[%c0_147, %c0_148] : memref<1x128xf32, #tpu.memory_space<vmem>>, vector<1x128xf32>
    %527 = vector.broadcast %526 : vector<1x128xf32> to vector<8x128xf32>
    %528 = arith.addf %525, %527 : vector<8x128xf32>
    %cst_149 = arith.constant 0.000000e+00 : f32
    %529 = vector.broadcast %cst_149 : f32 to vector<8x128xf32>
    %530 = arith.maximumf %528, %529 : vector<8x128xf32>
    %c0_150 = arith.constant 0 : index
    %c0_151 = arith.constant 0 : index
    %531 = vector.load %arg16[%c0_150, %c0_151] : memref<128x256xf32, #tpu.memory_space<vmem>>, vector<128x256xf32>
    %cst_152 = arith.constant dense<0.000000e+00> : vector<8x256xf32>
    %532 = tpu.matmul %530, %531, %cst_152 {dimension_numbers = #tpu.dot_dimension_numbers<[1], [0], [0], [1], [0, 0, 1, 1], [], []>} : vector<8x128xf32>, vector<128x256xf32>, vector<8x256xf32> -> vector<8x256xf32>
    %c0_153 = arith.constant 0 : index
    %c0_154 = arith.constant 0 : index
    %533 = vector.load %arg17[%c0_153, %c0_154] : memref<1x256xf32, #tpu.memory_space<vmem>>, vector<1x256xf32>
    %534 = vector.broadcast %533 : vector<1x256xf32> to vector<8x256xf32>
    %535 = arith.addf %532, %534 : vector<8x256xf32>
    %536 = vector.extract_strided_slice %535 {offsets = [0, 0], sizes = [8, 6], strides = [1, 1]} : vector<8x256xf32> to vector<8x6xf32>
    %537 = vector.extract_strided_slice %535 {offsets = [0, 128], sizes = [8, 1], strides = [1, 1]} : vector<8x256xf32> to vector<8x1xf32>
    %c56_155 = arith.constant 56 : index
    %c0_156 = arith.constant 0 : index
    %538 = vector.load %arg0[%c56_155, %c0_156] : memref<64x15xf32, #tpu.memory_space<vmem>>, vector<8x15xf32>
    %539 = vector.extract_strided_slice %538 {offsets = [0, 0], sizes = [8, 6], strides = [1, 1]} : vector<8x15xf32> to vector<8x6xf32>
    %540 = tpu.iota {dimensions = array<i32: 1>} : vector<1x15xi32>
    %c14_i32 = arith.constant 14 : i32
    %541 = vector.broadcast %c14_i32 : i32 to vector<1x15xi32>
    %542 = arith.cmpi eq, %540, %541 : vector<1x15xi32>
    %543 = arith.extui %542 : vector<1x15xi1> to vector<1x15xi32>
    %544 = arith.sitofp %543 : vector<1x15xi32> to vector<1x15xf32>
    %545 = vector.broadcast %544 : vector<1x15xf32> to vector<8x15xf32>
    %546 = arith.mulf %538, %545 : vector<8x15xf32>
    %cst_157 = arith.constant dense<0.000000e+00> : vector<8xf32>
    %547 = vector.multi_reduction <add>, %546, %cst_157 [1] : vector<8x15xf32> to vector<8xf32>
    %548 = vector.shape_cast %547 : vector<8xf32> to vector<8x1xf32>
    %549 = tpu.iota {dimensions = array<i32: 0>} : vector<8x1xi32>
    %c2_i32_158 = arith.constant 2 : i32
    %550 = vector.broadcast %c2_i32_158 : i32 to vector<8x1xi32>
    %551 = arith.cmpi slt, %549, %550 : vector<8x1xi32>
    %552 = arith.extui %551 : vector<8x1xi1> to vector<8x1xi32>
    %553 = arith.sitofp %552 : vector<8x1xi32> to vector<8x1xf32>
    %554 = arith.subf %536, %539 : vector<8x6xf32>
    %555 = arith.mulf %554, %554 : vector<8x6xf32>
    %556 = vector.broadcast %553 : vector<8x1xf32> to vector<8x6xf32>
    %557 = arith.mulf %555, %556 : vector<8x6xf32>
    %558 = vector.shape_cast %557 : vector<8x6xf32> to vector<1x8x6xf32>
    %cst_159 = arith.constant dense<0.000000e+00> : vector<1xf32>
    %559 = vector.multi_reduction <add>, %558, %cst_159 [1, 2] : vector<1x8x6xf32> to vector<1xf32>
    %560 = vector.shape_cast %559 : vector<1xf32> to vector<1x1x1xf32>
    %561 = vector.extract %560[0, 0, 0] : f32 from vector<1x1x1xf32>
    %562 = vector.broadcast %561 : f32 to vector<1x1xf32>
    %cst_160 = arith.constant 0.0833333358 : f32
    %563 = vector.broadcast %cst_160 : f32 to vector<1x1xf32>
    %564 = arith.mulf %562, %563 : vector<1x1xf32>
    %565 = arith.subf %537, %548 : vector<8x1xf32>
    %566 = arith.mulf %565, %565 : vector<8x1xf32>
    %567 = arith.mulf %566, %553 : vector<8x1xf32>
    %568 = vector.shape_cast %567 : vector<8x1xf32> to vector<1x8x1xf32>
    %cst_161 = arith.constant dense<0.000000e+00> : vector<1xf32>
    %569 = vector.multi_reduction <add>, %568, %cst_161 [1, 2] : vector<1x8x1xf32> to vector<1xf32>
    %570 = vector.shape_cast %569 : vector<1xf32> to vector<1x1x1xf32>
    %571 = vector.extract %570[0, 0, 0] : f32 from vector<1x1x1xf32>
    %572 = vector.broadcast %571 : f32 to vector<1x1xf32>
    %cst_162 = arith.constant 5.000000e-01 : f32
    %573 = vector.broadcast %cst_162 : f32 to vector<1x1xf32>
    %574 = arith.mulf %572, %573 : vector<1x1xf32>
    %575 = arith.addf %564, %574 : vector<1x1xf32>
    %cst_163 = arith.constant -5.000000e-01 : f32
    %576 = vector.broadcast %cst_163 : f32 to vector<8x5xf32>
    %577 = arith.mulf %576, %505 : vector<8x5xf32>
    %578 = math.exp %505 : vector<8x5xf32>
    %579 = arith.mulf %500, %500 : vector<8x5xf32>
    %580 = arith.addf %578, %579 : vector<8x5xf32>
    %cst_164 = arith.constant 5.000000e-01 : f32
    %581 = vector.broadcast %cst_164 : f32 to vector<8x5xf32>
    %582 = arith.mulf %581, %580 : vector<8x5xf32>
    %583 = arith.addf %577, %582 : vector<8x5xf32>
    %cst_165 = arith.constant 5.000000e-01 : f32
    %584 = vector.broadcast %cst_165 : f32 to vector<8x5xf32>
    %585 = arith.subf %583, %584 : vector<8x5xf32>
    %cst_166 = arith.constant dense<0.000000e+00> : vector<8xf32>
    %586 = vector.multi_reduction <add>, %585, %cst_166 [1] : vector<8x5xf32> to vector<8xf32>
    %587 = vector.shape_cast %586 : vector<8xf32> to vector<8x1xf32>
    %588 = arith.mulf %587, %553 : vector<8x1xf32>
    %589 = vector.shape_cast %588 : vector<8x1xf32> to vector<1x8x1xf32>
    %cst_167 = arith.constant dense<0.000000e+00> : vector<1xf32>
    %590 = vector.multi_reduction <add>, %589, %cst_167 [1, 2] : vector<1x8x1xf32> to vector<1xf32>
    %591 = vector.shape_cast %590 : vector<1xf32> to vector<1x1x1xf32>
    %592 = vector.extract %591[0, 0, 0] : f32 from vector<1x1x1xf32>
    %593 = vector.broadcast %592 : f32 to vector<1x1xf32>
    %cst_168 = arith.constant 5.000000e-01 : f32
    %594 = vector.broadcast %cst_168 : f32 to vector<1x1xf32>
    %595 = arith.mulf %593, %594 : vector<1x1xf32>
    %596 = arith.addf %575, %595 : vector<1x1xf32>
    %cst_169 = arith.constant 0.000000e+00 : f32
    %597 = vector.broadcast %cst_169 : f32 to vector<1x1xf32>
    %598 = arith.subf %597, %596 : vector<1x1xf32>
    %599 = tpu.iota {dimensions = array<i32: 1>} : vector<1x128xi32>
    %c0_i32_170 = arith.constant 0 : i32
    %600 = vector.broadcast %c0_i32_170 : i32 to vector<1x128xi32>
    %601 = arith.cmpi eq, %599, %600 : vector<1x128xi32>
    %cst_171 = arith.constant 0.000000e+00 : f32
    %602 = vector.shape_cast %564 : vector<1x1xf32> to vector<1x1xf32>
    %603 = vector.broadcast %602 : vector<1x1xf32> to vector<1x128xf32>
    %604 = vector.broadcast %cst_171 : f32 to vector<1x128xf32>
    %605 = arith.select %601, %603, %604 : vector<1x128xi1>, vector<1x128xf32>
    %c1_i32_172 = arith.constant 1 : i32
    %606 = vector.broadcast %c1_i32_172 : i32 to vector<1x128xi32>
    %607 = arith.cmpi eq, %599, %606 : vector<1x128xi32>
    %cst_173 = arith.constant 0.000000e+00 : f32
    %608 = vector.shape_cast %574 : vector<1x1xf32> to vector<1x1xf32>
    %609 = vector.broadcast %608 : vector<1x1xf32> to vector<1x128xf32>
    %610 = vector.broadcast %cst_173 : f32 to vector<1x128xf32>
    %611 = arith.select %607, %609, %610 : vector<1x128xi1>, vector<1x128xf32>
    %612 = arith.addf %605, %611 : vector<1x128xf32>
    %c2_i32_174 = arith.constant 2 : i32
    %613 = vector.broadcast %c2_i32_174 : i32 to vector<1x128xi32>
    %614 = arith.cmpi eq, %599, %613 : vector<1x128xi32>
    %cst_175 = arith.constant 0.000000e+00 : f32
    %615 = vector.shape_cast %575 : vector<1x1xf32> to vector<1x1xf32>
    %616 = vector.broadcast %615 : vector<1x1xf32> to vector<1x128xf32>
    %617 = vector.broadcast %cst_175 : f32 to vector<1x128xf32>
    %618 = arith.select %614, %616, %617 : vector<1x128xi1>, vector<1x128xf32>
    %619 = arith.addf %612, %618 : vector<1x128xf32>
    %c3_i32_176 = arith.constant 3 : i32
    %620 = vector.broadcast %c3_i32_176 : i32 to vector<1x128xi32>
    %621 = arith.cmpi eq, %599, %620 : vector<1x128xi32>
    %cst_177 = arith.constant 0.000000e+00 : f32
    %622 = vector.shape_cast %595 : vector<1x1xf32> to vector<1x1xf32>
    %623 = vector.broadcast %622 : vector<1x1xf32> to vector<1x128xf32>
    %624 = vector.broadcast %cst_177 : f32 to vector<1x128xf32>
    %625 = arith.select %621, %623, %624 : vector<1x128xi1>, vector<1x128xf32>
    %626 = arith.addf %619, %625 : vector<1x128xf32>
    %c4_i32_178 = arith.constant 4 : i32
    %627 = vector.broadcast %c4_i32_178 : i32 to vector<1x128xi32>
    %628 = arith.cmpi eq, %599, %627 : vector<1x128xi32>
    %cst_179 = arith.constant 0.000000e+00 : f32
    %629 = vector.shape_cast %598 : vector<1x1xf32> to vector<1x1xf32>
    %630 = vector.broadcast %629 : vector<1x1xf32> to vector<1x128xf32>
    %631 = vector.broadcast %cst_179 : f32 to vector<1x128xf32>
    %632 = arith.select %628, %630, %631 : vector<1x128xi1>, vector<1x128xf32>
    %633 = arith.addf %626, %632 : vector<1x128xf32>
    %c0_180 = arith.constant 0 : index
    %c0_181 = arith.constant 0 : index
    %634 = vector.load %arg20[%c0_180, %c0_181] : memref<1x128xf32, #tpu.memory_space<vmem>>, vector<1x128xf32>
    tpu.vector_store %arg20[%c0_180, %c0_181], %633 {strides = array<i32>} : memref<1x128xf32, #tpu.memory_space<vmem>>, vector<1x128xf32>,
    return
  }
}

</mosaic_0001>

<llo_original>
// kernel: varibad_vae_forward.1
$region0: #{varibad_vae_forward.1}
  #allocation0 [shape = 'u32[]', space=smem, size = 0x4, offset = 0x4, fixed_abs, tag = 'smem constant byte address 0x4 - core index']
  #allocation1 [shape = 'u32[144,128]{1,0:T(1,128)}', space=vmem, size = 0x12000, scoped, tag = 'internal scratch']
  #allocation2 [shape = 'f32[64,384]{1,0:T(8,128)}', space=vmem, size = 0x18000, scoped, tag = 'scratch operand']
  %s0 = inlined_call_operand.vmem [shape: f32[64,15], index: 0, kind: input, shape index: {}]
  %s1 = inlined_call_operand.vmem [shape: s32[8,1], index: 1, kind: input, shape index: {}]
  %s2 = inlined_call_operand.vmem [shape: f32[8,5], index: 2, kind: input, shape index: {}]
  %s3 = inlined_call_operand.vmem [shape: bf16[15,384], index: 3, kind: input, shape index: {}]
  %s4 = inlined_call_operand.vmem [shape: f32[1,384], index: 4, kind: input, shape index: {}]
  %s5 = inlined_call_operand.vmem [shape: bf16[128,384], index: 5, kind: input, shape index: {}]
  %s6 = inlined_call_operand.vmem [shape: f32[1,384], index: 6, kind: input, shape index: {}]
  %s7 = inlined_call_operand.vmem [shape: bf16[256,512], index: 7, kind: input, shape index: {}]
  %s8 = inlined_call_operand.vmem [shape: f32[1,512], index: 8, kind: input, shape index: {}]
  %s9 = inlined_call_operand.vmem [shape: f32[128,256], index: 9, kind: input, shape index: {}]
  %s10 = inlined_call_operand.vmem [shape: f32[1,256], index: 10, kind: input, shape index: {}]
  %s11 = inlined_call_operand.vmem [shape: f32[15,128], index: 11, kind: input, shape index: {}]
  %s12 = inlined_call_operand.vmem [shape: f32[5,128], index: 12, kind: input, shape index: {}]
  %s13 = inlined_call_operand.vmem [shape: f32[1,128], index: 13, kind: input, shape index: {}]
  %s14 = inlined_call_operand.vmem [shape: f32[128,128], index: 14, kind: input, shape index: {}]
  %s15 = inlined_call_operand.vmem [shape: f32[1,128], index: 15, kind: input, shape index: {}]
  %s16 = inlined_call_operand.vmem [shape: f32[128,256], index: 16, kind: input, shape index: {}]
  %s17 = inlined_call_operand.vmem [shape: f32[1,256], index: 17, kind: input, shape index: {}]
  %s18 = inlined_call_operand.vmem [shape: f32[8,5], index: 18, kind: output, shape index: {0}]
  %s19 = inlined_call_operand.vmem [shape: f32[8,5], index: 19, kind: output, shape index: {1}]
  %s20 = inlined_call_operand.vmem [shape: f32[1,128], index: 20, kind: output, shape index: {2}]
  %21 = xla_tuple %s18, %s19, %s20
  %s22 = sld [smem:[#allocation0]]
  $region98: #{varibad_vae_forward.1} parent=0
    _
  %s24 = ssub.s32 1, %s22
  %s25 = scalar_select 0, %s24, %s22
  // Predicated region
  $region2: #{varibad_vae_forward.1} parent=0 // pred_check
    _
  $region3: #{varibad_vae_forward.1} parent=0 // pred_check_branch
    %27 = sbr.rel (0) target = $region5
  $region4: #{varibad_vae_forward.1} parent=0 // pred_region
    _
  $region5: #{varibad_vae_forward.1} parent=0 // pred_fallthru
    _
  // Predicated region
  $region6: #{varibad_vae_forward.1} parent=0 // pred_check
    _
  $region7: #{varibad_vae_forward.1} parent=0 // pred_check_branch
    %29 = sbr.rel (0) target = $region9
  $region8: #{varibad_vae_forward.1} parent=0 // pred_region
    _
  $region9: #{varibad_vae_forward.1} parent=0 // pred_fallthru
    _
  // Predicated region
  $region10: #{varibad_vae_forward.1} parent=0 // pred_check
    _
  $region11: #{varibad_vae_forward.1} parent=0 // pred_check_branch
    %31 = sbr.rel (0) target = $region13
  $region12: #{varibad_vae_forward.1} parent=0 // pred_region
    _
  $region13: #{varibad_vae_forward.1} parent=0 // pred_fallthru
    _
  // Predicated region
  $region14: #{varibad_vae_forward.1} parent=0 // pred_check
    _
  $region15: #{varibad_vae_forward.1} parent=0 // pred_check_branch
    %33 = sbr.rel (0) target = $region17
  $region16: #{varibad_vae_forward.1} parent=0 // pred_region
    _
  $region17: #{varibad_vae_forward.1} parent=0 // pred_fallthru
    _
  // Predicated region
  $region18: #{varibad_vae_forward.1} parent=0 // pred_check
    _
  $region19: #{varibad_vae_forward.1} parent=0 // pred_check_branch
    %35 = sbr.rel (0) target = $region21
  $region20: #{varibad_vae_forward.1} parent=0 // pred_region
    _
  $region21: #{varibad_vae_forward.1} parent=0 // pred_fallthru
    _
  // Predicated region
  $region22: #{varibad_vae_forward.1} parent=0 // pred_check
    _
  $region23: #{varibad_vae_forward.1} parent=0 // pred_check_branch
    %37 = sbr.rel (0) target = $region25
  $region24: #{varibad_vae_forward.1} parent=0 // pred_region
    _
  $region25: #{varibad_vae_forward.1} parent=0 // pred_fallthru
    _
  // Predicated region
  $region26: #{varibad_vae_forward.1} parent=0 // pred_check
    _
  $region27: #{varibad_vae_forward.1} parent=0 // pred_check_branch
    %39 = sbr.rel (0) target = $region29
  $region28: #{varibad_vae_forward.1} parent=0 // pred_region
    _
  $region29: #{varibad_vae_forward.1} parent=0 // pred_fallthru
    _
  // Predicated region
  $region30: #{varibad_vae_forward.1} parent=0 // pred_check
    _
  $region31: #{varibad_vae_forward.1} parent=0 // pred_check_branch
    %41 = sbr.rel (0) target = $region33
  $region32: #{varibad_vae_forward.1} parent=0 // pred_region
    _
  $region33: #{varibad_vae_forward.1} parent=0 // pred_fallthru
    _
  // Predicated region
  $region34: #{varibad_vae_forward.1} parent=0 // pred_check
    _
  $region35: #{varibad_vae_forward.1} parent=0 // pred_check_branch
    %43 = sbr.rel (0) target = $region37
  $region36: #{varibad_vae_forward.1} parent=0 // pred_region
    _
  $region37: #{varibad_vae_forward.1} parent=0 // pred_fallthru
    _
  // Predicated region
  $region38: #{varibad_vae_forward.1} parent=0 // pred_check
    _
  $region39: #{varibad_vae_forward.1} parent=0 // pred_check_branch
    %45 = sbr.rel (0) target = $region41
  $region40: #{varibad_vae_forward.1} parent=0 // pred_region
    _
  $region41: #{varibad_vae_forward.1} parent=0 // pred_fallthru
    _
  // Predicated region
  $region42: #{varibad_vae_forward.1} parent=0 // pred_check
    _
  $region43: #{varibad_vae_forward.1} parent=0 // pred_check_branch
    %47 = sbr.rel (0) target = $region45
  $region44: #{varibad_vae_forward.1} parent=0 // pred_region
    _
  $region45: #{varibad_vae_forward.1} parent=0 // pred_fallthru
    _
  // Predicated region
  $region46: #{varibad_vae_forward.1} parent=0 // pred_check
    _
  $region47: #{varibad_vae_forward.1} parent=0 // pred_check_branch
    %49 = sbr.rel (0) target = $region49
  $region48: #{varibad_vae_forward.1} parent=0 // pred_region
    _
  $region49: #{varibad_vae_forward.1} parent=0 // pred_fallthru
    _
  // Predicated region
  $region50: #{varibad_vae_forward.1} parent=0 // pred_check
    _
  $region51: #{varibad_vae_forward.1} parent=0 // pred_check_branch
    %51 = sbr.rel (0) target = $region53
  $region52: #{varibad_vae_forward.1} parent=0 // pred_region
    _
  $region53: #{varibad_vae_forward.1} parent=0 // pred_fallthru
    _
  // Predicated region
  $region54: #{varibad_vae_forward.1} parent=0 // pred_check
    _
  $region55: #{varibad_vae_forward.1} parent=0 // pred_check_branch
    %53 = sbr.rel (0) target = $region57
  $region56: #{varibad_vae_forward.1} parent=0 // pred_region
    _
  $region57: #{varibad_vae_forward.1} parent=0 // pred_fallthru
    _
  // Predicated region
  $region58: #{varibad_vae_forward.1} parent=0 // pred_check
    _
  $region59: #{varibad_vae_forward.1} parent=0 // pred_check_branch
    %55 = sbr.rel (0) target = $region61
  $region60: #{varibad_vae_forward.1} parent=0 // pred_region
    _
  $region61: #{varibad_vae_forward.1} parent=0 // pred_fallthru
    _
  // Predicated region
  $region62: #{varibad_vae_forward.1} parent=0 // pred_check
    _
  $region63: #{varibad_vae_forward.1} parent=0 // pred_check_branch
    %57 = sbr.rel (0) target = $region65
  $region64: #{varibad_vae_forward.1} parent=0 // pred_region
    _
  $region65: #{varibad_vae_forward.1} parent=0 // pred_fallthru
    _
  // Predicated region
  $region66: #{varibad_vae_forward.1} parent=0 // pred_check
    _
  $region67: #{varibad_vae_forward.1} parent=0 // pred_check_branch
    %59 = sbr.rel (0) target = $region69
  $region68: #{varibad_vae_forward.1} parent=0 // pred_region
    _
  $region69: #{varibad_vae_forward.1} parent=0 // pred_fallthru
    _
  // Predicated region
  $region70: #{varibad_vae_forward.1} parent=0 // pred_check
    _
  $region71: #{varibad_vae_forward.1} parent=0 // pred_check_branch
    %61 = sbr.rel (0) target = $region73
  $region72: #{varibad_vae_forward.1} parent=0 // pred_region
    _
  $region73: #{varibad_vae_forward.1} parent=0 // pred_fallthru
    _
  %v63 = vld [vmem:[%s0] sm:$0xff]
  %v64 = vld [vmem:[%s0 + $0x8] sm:$0xff]
  %v65 = vld [vmem:[%s0 + $0x10] sm:$0xff]
  %v66 = vld [vmem:[%s0 + $0x18] sm:$0xff]
  %v67 = vld [vmem:[%s0 + $0x20] sm:$0xff]
  %v68 = vld [vmem:[%s0 + $0x28] sm:$0xff]
  %v69 = vld [vmem:[%s0 + $0x30] sm:$0xff]
  %v70 = vld [vmem:[%s0 + $0x38] sm:$0xff]
  %v71 = vpack.c.bf16 %v64, %v63
  %v72 = vpack.c.bf16 %v66, %v65
  %v73 = vpack.c.bf16 %v68, %v67
  %v74 = vpack.c.bf16 %v70, %v69
  %v75 = vld [vmem:[%s3] sm:$0xff]
  %v76 = vld [vmem:[%s3 + $0x8] sm:$0xf]
  %v77 = vld [vmem:[%s3 + $0xc] sm:$0xff]
  %v78 = vld [vmem:[%s3 + $0x14] sm:$0xf]
  %v79 = vld [vmem:[%s4] sm:$0x7]
  %v81 = vlaneseq
  %v82 = vshrl.u32 %v81, 7
  %v83 = vsub.s32 0, %v82
  %v84 = vrot.slane %v79, %v83
  %v85 = vlaneseq
  %v86 = vshrl.u32 %v85, 7
  %v87 = vsub.s32 1, %v86
  %v88 = vrot.slane %v79, %v87
  %v89 = vlaneseq
  %v90 = vshrl.u32 %v89, 7
  %v91 = vsub.s32 2, %v90
  %v92 = vrot.slane %v79, %v91
  %v100 = vunpack.c.l.b16 %v75
  %v101 = vunpack.c.h.b16 %v75
  %v102 = vunpack.c.l.b16 %v76
  %v103 = vunpack.c.l.b16 %v77
  %v104 = vunpack.c.h.b16 %v77
  %v105 = vunpack.c.l.b16 %v78
  %v106 = vpack.c.b16 %v103, %v100
  %v107 = vpack.c.b16 %v104, %v101
  %v108 = vpack.c.b16 %v105, %v102
  %vm109 = vcmask 121856
  %v111 = vsel %vm109, %v71, 0
  %v114 = vsel %vm109, %v72, 0
  %v117 = vsel %vm109, %v73, 0
  %v120 = vsel %vm109, %v74, 0
  %vm122 = vcmask 1046528
  %vm123 = vcmask 1047552
  %v124 = vsel %vm122, 4294967295, 65535
  %v125 = vsel %vm123, %v124, 0
  %v127 = vand.u32 %v106, %v125
  %v130 = vand.u32 %v107, %v125
  %v133 = vand.u32 %v108, %v125
  %135 = vmatprep.subr.bf16.mxu0 0
  %136 = vmatpush1.bf16.msra.mxu0 0
  %137 = vmatprep.subr.bf16.mxu0 0
  %138 = vmatpush1.bf16.msra.mxu0 0
  %139 = vmatprep.subr.bf16.mxu0 0
  %140 = vmatpush1.bf16.msra.mxu0 0
  %141 = vmatprep.subr.bf16.mxu0 0
  %142 = vmatpush1.bf16.msra.mxu0 0
  %143 = vmatprep.subr.bf16.mxu0 0
  %144 = vmatpush1.bf16.msra.mxu0 0
  %145 = vmatprep.subr.bf16.mxu0 0
  %146 = vmatpush1.bf16.msra.mxu0 0
  %147 = vmatprep.subr.bf16.mxu0 0
  %148 = vmatpush1.bf16.msra.mxu0 0
  %149 = vmatprep.subr.bf16.mxu0 %v130
  %150 = vmatpush1.bf16.msra.mxu0 %v127
  %151 = vmatprep.subr.bf16.mxu0 0
  %152 = vmatpush2.bf16.msra.mxu0 0
  %153 = vmatprep.subr.bf16.mxu0 0
  %154 = vmatpush2.bf16.msra.mxu0 0
  %155 = vmatprep.subr.bf16.mxu0 0
  %156 = vmatpush2.bf16.msra.mxu0 0
  %157 = vmatprep.subr.bf16.mxu0 0
  %158 = vmatpush2.bf16.msra.mxu0 0
  %159 = vmatprep.subr.bf16.mxu0 0
  %160 = vmatpush2.bf16.msra.mxu0 0
  %161 = vmatprep.subr.bf16.mxu0 0
  %162 = vmatpush2.bf16.msra.mxu0 0
  %163 = vmatprep.subr.bf16.mxu0 0
  %164 = vmatpush2.bf16.msra.mxu0 0
  %165 = vmatprep.subr.bf16.mxu0 0
  %166 = vmatpush2.bf16.msra.mxu0 0
  %167 = vmatprep.mubr.bf16.mxu0 0
  %168 = vmatmul.mubr.bf16.gmra.mxu0 %v111
  %v169 = vpop.f32.mrf.mxu0
  %v170 = vadd.f32 %v84, %v169
  %v171 = vpop.f32.mrf.mxu0
  %v172 = vadd.f32 %v88, %v171
  %v173 = vpop.f32.mrf.mxu0
  %v174 = vadd.f32 %v84, %v173
  %v175 = vpop.f32.mrf.mxu0
  %v176 = vadd.f32 %v88, %v175
  %177 = vmatprep.mubr.bf16.mxu0 0
  %178 = vmatmul.mubr.bf16.gmra.mxu0 %v114
  %v179 = vpop.f32.mrf.mxu0
  %v180 = vadd.f32 %v84, %v179
  %v181 = vpop.f32.mrf.mxu0
  %v182 = vadd.f32 %v88, %v181
  %v183 = vpop.f32.mrf.mxu0
  %v184 = vadd.f32 %v84, %v183
  %v185 = vpop.f32.mrf.mxu0
  %v186 = vadd.f32 %v88, %v185
  %187 = vmatprep.mubr.bf16.mxu0 0
  %188 = vmatmul.mubr.bf16.gmra.mxu0 %v117
  %v189 = vpop.f32.mrf.mxu0
  %v190 = vadd.f32 %v84, %v189
  %v191 = vpop.f32.mrf.mxu0
  %v192 = vadd.f32 %v88, %v191
  %v193 = vpop.f32.mrf.mxu0
  %v194 = vadd.f32 %v84, %v193
  %v195 = vpop.f32.mrf.mxu0
  %v196 = vadd.f32 %v88, %v195
  %197 = vmatprep.mubr.bf16.mxu0 0
  %198 = vmatmul.mubr.bf16.gmra.mxu0 %v120
  %v199 = vpop.f32.mrf.mxu0
  %v200 = vadd.f32 %v84, %v199
  %v201 = vpop.f32.mrf.mxu0
  %v202 = vadd.f32 %v88, %v201
  %v203 = vpop.f32.mrf.mxu0
  %v204 = vadd.f32 %v84, %v203
  %v205 = vpop.f32.mrf.mxu0
  %v206 = vadd.f32 %v88, %v205
  %207 = vdwg.mxu0
  %208 = vmatprep.subr.bf16.mxu0 0
  %209 = vmatpush1.bf16.msra.mxu0 0
  %210 = vmatprep.subr.bf16.mxu0 0
  %211 = vmatpush1.bf16.msra.mxu0 0
  %212 = vmatprep.subr.bf16.mxu0 0
  %213 = vmatpush1.bf16.msra.mxu0 0
  %214 = vmatprep.subr.bf16.mxu0 0
  %215 = vmatpush1.bf16.msra.mxu0 0
  %216 = vmatprep.subr.bf16.mxu0 0
  %217 = vmatpush1.bf16.msra.mxu0 0
  %218 = vmatprep.subr.bf16.mxu0 0
  %219 = vmatpush1.bf16.msra.mxu0 0
  %220 = vmatprep.subr.bf16.mxu0 0
  %221 = vmatpush1.bf16.msra.mxu0 0
  %222 = vmatprep.subr.bf16.mxu0 0
  %223 = vmatpush1.bf16.msra.mxu0 %v133
  %224 = vmatprep.subr.bf16.mxu0 0
  %225 = vmatpush2.bf16.msra.mxu0 0
  %226 = vmatprep.subr.bf16.mxu0 0
  %227 = vmatpush2.bf16.msra.mxu0 0
  %228 = vmatprep.subr.bf16.mxu0 0
  %229 = vmatpush2.bf16.msra.mxu0 0
  %230 = vmatprep.subr.bf16.mxu0 0
  %231 = vmatpush2.bf16.msra.mxu0 0
  %232 = vmatprep.subr.bf16.mxu0 0
  %233 = vmatpush2.bf16.msra.mxu0 0
  %234 = vmatprep.subr.bf16.mxu0 0
  %235 = vmatpush2.bf16.msra.mxu0 0
  %236 = vmatprep.subr.bf16.mxu0 0
  %237 = vmatpush2.bf16.msra.mxu0 0
  %238 = vmatprep.subr.bf16.mxu0 0
  %239 = vmatpush2.bf16.msra.mxu0 0
  %240 = vmatprep.mubr.bf16.mxu0 0
  %241 = vmatmul.mubr.bf16.gmra.mxu0 %v111
  %v242 = vpop.f32.mrf.mxu0
  %v243 = vadd.f32 %v92, %v242
  %v244 = vpop.f32.mrf.mxu0
  %v245 = vpop.f32.mrf.mxu0
  %v246 = vadd.f32 %v92, %v245
  %v247 = vpop.f32.mrf.mxu0
  %248 = vmatprep.mubr.bf16.mxu0 0
  %249 = vmatmul.mubr.bf16.gmra.mxu0 %v114
  %v250 = vpop.f32.mrf.mxu0
  %v251 = vadd.f32 %v92, %v250
  %v252 = vpop.f32.mrf.mxu0
  %v253 = vpop.f32.mrf.mxu0
  %v254 = vadd.f32 %v92, %v253
  %v255 = vpop.f32.mrf.mxu0
  %256 = vmatprep.mubr.bf16.mxu0 0
  %257 = vmatmul.mubr.bf16.gmra.mxu0 %v117
  %v258 = vpop.f32.mrf.mxu0
  %v259 = vadd.f32 %v92, %v258
  %v260 = vpop.f32.mrf.mxu0
  %v261 = vpop.f32.mrf.mxu0
  %v262 = vadd.f32 %v92, %v261
  %v263 = vpop.f32.mrf.mxu0
  %264 = vmatprep.mubr.bf16.mxu0 0
  %265 = vmatmul.mubr.bf16.gmra.mxu0 %v120
  %v266 = vpop.f32.mrf.mxu0
  %v267 = vadd.f32 %v92, %v266
  %v268 = vpop.f32.mrf.mxu0
  %v269 = vpop.f32.mrf.mxu0
  %v270 = vadd.f32 %v92, %v269
  %v271 = vpop.f32.mrf.mxu0
  %272 = vdwg.mxu0
  %273 = vst [vmem:[#allocation2] sm:$0xff] %v170
  %274 = vst [vmem:[#allocation2 + $0x8] sm:$0xff] %v172
  %275 = vst [vmem:[#allocation2 + $0x10] sm:$0xff] %v243
  %276 = vst [vmem:[#allocation2 + $0x18] sm:$0xff] %v174
  %277 = vst [vmem:[#allocation2 + $0x20] sm:$0xff] %v176
  %278 = vst [vmem:[#allocation2 + $0x28] sm:$0xff] %v246
  %279 = vst [vmem:[#allocation2 + $0x30] sm:$0xff] %v180
  %280 = vst [vmem:[#allocation2 + $0x38] sm:$0xff] %v182
  %281 = vst [vmem:[#allocation2 + $0x40] sm:$0xff] %v251
  %282 = vst [vmem:[#allocation2 + $0x48] sm:$0xff] %v184
  %283 = vst [vmem:[#allocation2 + $0x50] sm:$0xff] %v186
  %284 = vst [vmem:[#allocation2 + $0x58] sm:$0xff] %v254
  %285 = vst [vmem:[#allocation2 + $0x60] sm:$0xff] %v190
  %286 = vst [vmem:[#allocation2 + $0x68] sm:$0xff] %v192
  %287 = vst [vmem:[#allocation2 + $0x70] sm:$0xff] %v259
  %288 = vst [vmem:[#allocation2 + $0x78] sm:$0xff] %v194
  %289 = vst [vmem:[#allocation2 + $0x80] sm:$0xff] %v196
  %290 = vst [vmem:[#allocation2 + $0x88] sm:$0xff] %v262
  %291 = vst [vmem:[#allocation2 + $0x90] sm:$0xff] %v200
  %292 = vst [vmem:[#allocation2 + $0x98] sm:$0xff] %v202
  %293 = vst [vmem:[#allocation2 + $0xa0] sm:$0xff] %v267
  %294 = vst [vmem:[#allocation2 + $0xa8] sm:$0xff] %v204
  %295 = vst [vmem:[#allocation2 + $0xb0] sm:$0xff] %v206
  %296 = vst [vmem:[#allocation2 + $0xb8] sm:$0xff] %v270
  %v297 = vld [vmem:[%s1] sm:$0xff]
  %v298 = vld [vmem:[%s6] sm:$0x7]
  %v300 = vlaneseq
  %v301 = vshrl.u32 %v300, 7
  %v302 = vsub.s32 0, %v301
  %v303 = vrot.slane %v298, %v302
  %v304 = vlaneseq
  %v305 = vshrl.u32 %v304, 7
  %v306 = vsub.s32 1, %v305
  %v307 = vrot.slane %v298, %v306
  %v308 = vlaneseq
  %v309 = vshrl.u32 %v308, 7
  %v310 = vsub.s32 2, %v309
  %v311 = vrot.slane %v298, %v310
  %v315 = vld [vmem:[%s8] sm:$0xf]
  %v317 = vlaneseq
  %v318 = vshrl.u32 %v317, 7
  %v319 = vsub.s32 0, %v318
  %v320 = vrot.slane %v315, %v319
  %v321 = vlaneseq
  %v322 = vshrl.u32 %v321, 7
  %v323 = vsub.s32 1, %v322
  %v324 = vrot.slane %v315, %v323
  %v325 = vlaneseq
  %v326 = vshrl.u32 %v325, 7
  %v327 = vsub.s32 2, %v326
  %v328 = vrot.slane %v315, %v327
  %v329 = vlaneseq
  %v330 = vshrl.u32 %v329, 7
  %v331 = vsub.s32 3, %v330
  %v332 = vrot.slane %v315, %v331
  %v337 = vld [vmem:[#allocation2] sm:$0xff]
  %v338 = vld [vmem:[#allocation2 + $0x8] sm:$0xff]
  %v339 = vld [vmem:[#allocation2 + $0x10] sm:$0xff]
  %v340 = vld [vmem:[%s0] sm:$0xff]
  %v341 = vld [vmem:[%s5] sm:$0xff]
  %v342 = vld [vmem:[%s5 + $0x8] sm:$0xf]
  %v343 = vld [vmem:[%s5 + $0xc] sm:$0xff]
  %v344 = vld [vmem:[%s5 + $0x14] sm:$0xf]
  %v345 = vld [vmem:[%s5 + $0x18] sm:$0xff]
  %v346 = vld [vmem:[%s5 + $0x20] sm:$0xf]
  %v347 = vld [vmem:[%s5 + $0x24] sm:$0xff]
  %v348 = vld [vmem:[%s5 + $0x2c] sm:$0xf]
  %v349 = vld [vmem:[%s5 + $0x30] sm:$0xff]
  %v350 = vld [vmem:[%s5 + $0x38] sm:$0xf]
  %v351 = vld [vmem:[%s5 + $0x3c] sm:$0xff]
  %v352 = vld [vmem:[%s5 + $0x44] sm:$0xf]
  %v353 = vld [vmem:[%s5 + $0x48] sm:$0xff]
  %v354 = vld [vmem:[%s5 + $0x50] sm:$0xf]
  %v355 = vld [vmem:[%s5 + $0x54] sm:$0xff]
  %v356 = vld [vmem:[%s5 + $0x5c] sm:$0xf]
  %v357 = vld [vmem:[%s5 + $0x60] sm:$0xff]
  %v358 = vld [vmem:[%s5 + $0x68] sm:$0xf]
  %v359 = vld [vmem:[%s5 + $0x6c] sm:$0xff]
  %v360 = vld [vmem:[%s5 + $0x74] sm:$0xf]
  %v361 = vld [vmem:[%s5 + $0x78] sm:$0xff]
  %v362 = vld [vmem:[%s5 + $0x80] sm:$0xf]
  %v363 = vld [vmem:[%s5 + $0x84] sm:$0xff]
  %v364 = vld [vmem:[%s5 + $0x8c] sm:$0xf]
  %v365 = vld [vmem:[%s5 + $0x90] sm:$0xff]
  %v366 = vld [vmem:[%s5 + $0x98] sm:$0xf]
  %v367 = vld [vmem:[%s5 + $0x9c] sm:$0xff]
  %v368 = vld [vmem:[%s5 + $0xa4] sm:$0xf]
  %v369 = vld [vmem:[%s5 + $0xa8] sm:$0xff]
  %v370 = vld [vmem:[%s5 + $0xb0] sm:$0xf]
  %v371 = vld [vmem:[%s5 + $0xb4] sm:$0xff]
  %v372 = vld [vmem:[%s5 + $0xbc] sm:$0xf]
  %v405 = vunpack.c.l.b16 %v341
  %v406 = vunpack.c.h.b16 %v341
  %v407 = vunpack.c.l.b16 %v342
  %v408 = vunpack.c.l.b16 %v343
  %v409 = vunpack.c.h.b16 %v343
  %v410 = vunpack.c.l.b16 %v344
  %v411 = vunpack.c.l.b16 %v345
  %v412 = vunpack.c.h.b16 %v345
  %v413 = vunpack.c.l.b16 %v346
  %v414 = vunpack.c.l.b16 %v347
  %v415 = vunpack.c.h.b16 %v347
  %v416 = vunpack.c.l.b16 %v348
  %v417 = vunpack.c.l.b16 %v349
  %v418 = vunpack.c.h.b16 %v349
  %v419 = vunpack.c.l.b16 %v350
  %v420 = vunpack.c.l.b16 %v351
  %v421 = vunpack.c.h.b16 %v351
  %v422 = vunpack.c.l.b16 %v352
  %v423 = vunpack.c.l.b16 %v353
  %v424 = vunpack.c.h.b16 %v353
  %v425 = vunpack.c.l.b16 %v354
  %v426 = vunpack.c.l.b16 %v355
  %v427 = vunpack.c.h.b16 %v355
  %v428 = vunpack.c.l.b16 %v356
  %v429 = vunpack.c.l.b16 %v357
  %v430 = vunpack.c.h.b16 %v357
  %v431 = vunpack.c.l.b16 %v358
  %v432 = vunpack.c.l.b16 %v359
  %v433 = vunpack.c.h.b16 %v359
  %v434 = vunpack.c.l.b16 %v360
  %v435 = vunpack.c.l.b16 %v361
  %v436 = vunpack.c.h.b16 %v361
  %v437 = vunpack.c.l.b16 %v362
  %v438 = vunpack.c.l.b16 %v363
  %v439 = vunpack.c.h.b16 %v363
  %v440 = vunpack.c.l.b16 %v364
  %v441 = vunpack.c.l.b16 %v365
  %v442 = vunpack.c.h.b16 %v365
  %v443 = vunpack.c.l.b16 %v366
  %v444 = vunpack.c.l.b16 %v367
  %v445 = vunpack.c.h.b16 %v367
  %v446 = vunpack.c.l.b16 %v368
  %v447 = vunpack.c.l.b16 %v369
  %v448 = vunpack.c.h.b16 %v369
  %v449 = vunpack.c.l.b16 %v370
  %v450 = vunpack.c.l.b16 %v371
  %v451 = vunpack.c.h.b16 %v371
  %v452 = vunpack.c.l.b16 %v372
  %v453 = vpack.c.b16 %v408, %v405
  %v454 = vpack.c.b16 %v409, %v406
  %v455 = vpack.c.b16 %v410, %v407
  %v456 = vpack.c.b16 %v414, %v411
  %v457 = vpack.c.b16 %v415, %v412
  %v458 = vpack.c.b16 %v416, %v413
  %v459 = vpack.c.b16 %v420, %v417
  %v460 = vpack.c.b16 %v421, %v418
  %v461 = vpack.c.b16 %v422, %v419
  %v462 = vpack.c.b16 %v426, %v423
  %v463 = vpack.c.b16 %v427, %v424
  %v464 = vpack.c.b16 %v428, %v425
  %v465 = vpack.c.b16 %v432, %v429
  %v466 = vpack.c.b16 %v433, %v430
  %v467 = vpack.c.b16 %v434, %v431
  %v468 = vpack.c.b16 %v438, %v435
  %v469 = vpack.c.b16 %v439, %v436
  %v470 = vpack.c.b16 %v440, %v437
  %v471 = vpack.c.b16 %v444, %v441
  %v472 = vpack.c.b16 %v445, %v442
  %v473 = vpack.c.b16 %v446, %v443
  %v474 = vpack.c.b16 %v450, %v447
  %v475 = vpack.c.b16 %v451, %v448
  %v476 = vpack.c.b16 %v452, %v449
  %501 = vmatprep.subr.bf16.mxu0 %v475
  %502 = vmatpush1.bf16.msra.mxu0 %v474
  %503 = vmatprep.subr.bf16.mxu0 %v472
  %504 = vmatpush1.bf16.msra.mxu0 %v471
  %505 = vmatprep.subr.bf16.mxu0 %v469
  %506 = vmatpush1.bf16.msra.mxu0 %v468
  %507 = vmatprep.subr.bf16.mxu0 %v466
  %508 = vmatpush1.bf16.msra.mxu0 %v465
  %509 = vmatprep.subr.bf16.mxu0 %v463
  %510 = vmatpush1.bf16.msra.mxu0 %v462
  %511 = vmatprep.subr.bf16.mxu0 %v460
  %512 = vmatpush1.bf16.msra.mxu0 %v459
  %513 = vmatprep.subr.bf16.mxu0 %v457
  %514 = vmatpush1.bf16.msra.mxu0 %v456
  %515 = vmatprep.subr.bf16.mxu0 %v454
  %516 = vmatpush1.bf16.msra.mxu0 %v453
  %517 = vmatprep.subr.bf16.mxu0 0
  %518 = vmatpush2.bf16.msra.mxu0 0
  %519 = vmatprep.subr.bf16.mxu0 0
  %520 = vmatpush2.bf16.msra.mxu0 0
  %521 = vmatprep.subr.bf16.mxu0 0
  %522 = vmatpush2.bf16.msra.mxu0 0
  %523 = vmatprep.subr.bf16.mxu0 0
  %524 = vmatpush2.bf16.msra.mxu0 0
  %525 = vmatprep.subr.bf16.mxu0 0
  %526 = vmatpush2.bf16.msra.mxu0 0
  %527 = vmatprep.subr.bf16.mxu0 0
  %528 = vmatpush2.bf16.msra.mxu0 0
  %529 = vmatprep.subr.bf16.mxu0 0
  %530 = vmatpush2.bf16.msra.mxu0 0
  %531 = vmatprep.subr.bf16.mxu0 0
  %532 = vmatpush2.bf16.msra.mxu0 0
  %533 = vmatprep.mubr.bf16.mxu0 0
  %534 = vmatmul.mubr.bf16.gmra.mxu0 0
  %v535 = vpop.f32.mrf.mxu0
  %v536 = vadd.f32 %v303, %v535
  %v537 = vpop.f32.mrf.mxu0
  %v538 = vadd.f32 %v307, %v537
  %v539 = vpop.f32.mrf.mxu0
  %v540 = vpop.f32.mrf.mxu0
  %541 = vdwg.mxu0
  %542 = vmatprep.subr.bf16.mxu0 0
  %543 = vmatpush1.bf16.msra.mxu0 %v476
  %544 = vmatprep.subr.bf16.mxu0 0
  %545 = vmatpush1.bf16.msra.mxu0 %v473
  %546 = vmatprep.subr.bf16.mxu0 0
  %547 = vmatpush1.bf16.msra.mxu0 %v470
  %548 = vmatprep.subr.bf16.mxu0 0
  %549 = vmatpush1.bf16.msra.mxu0 %v467
  %550 = vmatprep.subr.bf16.mxu0 0
  %551 = vmatpush1.bf16.msra.mxu0 %v464
  %552 = vmatprep.subr.bf16.mxu0 0
  %553 = vmatpush1.bf16.msra.mxu0 %v461
  %554 = vmatprep.subr.bf16.mxu0 0
  %555 = vmatpush1.bf16.msra.mxu0 %v458
  %556 = vmatprep.subr.bf16.mxu0 0
  %557 = vmatpush1.bf16.msra.mxu0 %v455
  %558 = vmatprep.subr.bf16.mxu0 0
  %559 = vmatpush2.bf16.msra.mxu0 0
  %560 = vmatprep.subr.bf16.mxu0 0
  %561 = vmatpush2.bf16.msra.mxu0 0
  %562 = vmatprep.subr.bf16.mxu0 0
  %563 = vmatpush2.bf16.msra.mxu0 0
  %564 = vmatprep.subr.bf16.mxu0 0
  %565 = vmatpush2.bf16.msra.mxu0 0
  %566 = vmatprep.subr.bf16.mxu0 0
  %567 = vmatpush2.bf16.msra.mxu0 0
  %568 = vmatprep.subr.bf16.mxu0 0
  %569 = vmatpush2.bf16.msra.mxu0 0
  %570 = vmatprep.subr.bf16.mxu0 0
  %571 = vmatpush2.bf16.msra.mxu0 0
  %572 = vmatprep.subr.bf16.mxu0 0
  %573 = vmatpush2.bf16.msra.mxu0 0
  %574 = vmatprep.mubr.bf16.mxu0 0
  %575 = vmatmul.mubr.bf16.gmra.mxu0 0
  %v576 = vpop.f32.mrf.mxu0
  %v577 = vadd.f32 %v311, %v576
  %v578 = vpop.f32.mrf.mxu0
  %v579 = vpop.f32.mrf.mxu0
  %v580 = vpop.f32.mrf.mxu0
  %581 = vdwg.mxu0
  %v582 = vadd.f32 %v337, %v536
  %v583 = vadd.f32 %v338, %v538
  %v584 = vxor.u32 %v582, 2147483648
  %v585 = vxor.u32 %v583, 2147483648
  %v586 = vmul.f32 %v584, 1.442695
  %v587 = vpow.pop %v586
  %v588 = vmul.f32 %v585, 1.442695
  %v589 = vpow.pop %v588
  %v590 = vadd.f32 %v587, 1.0
  %v591 = vadd.f32 %v589, 1.0
  %v592 = vrcp.pop %v590
  %v593 = vmul.f32 1.0, %v592
  %v594 = vrcp.pop %v591
  %v595 = vmul.f32 1.0, %v594
  %v596 = vmul.f32 %v593, %v577
  %v597 = vadd.f32 %v339, %v596
  %v598 = vtanh.pop %v597
  %v599 = vsub.f32 1.0, %v595
  %v600 = vmul.f32 %v599, %v598
  %v601 = vmul.f32 %v595, 0.0
  %v602 = vadd.f32 %v600, %v601
  %v603 = vpack.c.bf16 %v602, %v602
  %v604 = vpack.c.bf16 0.0, 0.0
  %v605 = vld [vmem:[%s7] sm:$0xff]
  %v606 = vld [vmem:[%s7 + $0x8] sm:$0xff]
  %v607 = vld [vmem:[%s7 + $0x10] sm:$0xff]
  %v608 = vld [vmem:[%s7 + $0x18] sm:$0xff]
  %v609 = vld [vmem:[%s7 + $0x20] sm:$0xff]
  %v610 = vld [vmem:[%s7 + $0x28] sm:$0xff]
  %v611 = vld [vmem:[%s7 + $0x30] sm:$0xff]
  %v612 = vld [vmem:[%s7 + $0x38] sm:$0xff]
  %v613 = vld [vmem:[%s7 + $0x40] sm:$0xff]
  %v614 = vld [vmem:[%s7 + $0x48] sm:$0xff]
  %v615 = vld [vmem:[%s7 + $0x50] sm:$0xff]
  %v616 = vld [vmem:[%s7 + $0x58] sm:$0xff]
  %v617 = vld [vmem:[%s7 + $0x60] sm:$0xff]
  %v618 = vld [vmem:[%s7 + $0x68] sm:$0xff]
  %v619 = vld [vmem:[%s7 + $0x70] sm:$0xff]
  %v620 = vld [vmem:[%s7 + $0x78] sm:$0xff]
  %v621 = vld [vmem:[%s7 + $0x80] sm:$0xff]
  %v622 = vld [vmem:[%s7 + $0x88] sm:$0xff]
  %v623 = vld [vmem:[%s7 + $0x90] sm:$0xff]
  %v624 = vld [vmem:[%s7 + $0x98] sm:$0xff]
  %v625 = vld [vmem:[%s7 + $0xa0] sm:$0xff]
  %v626 = vld [vmem:[%s7 + $0xa8] sm:$0xff]
  %v627 = vld [vmem:[%s7 + $0xb0] sm:$0xff]
  %v628 = vld [vmem:[%s7 + $0xb8] sm:$0xff]
  %v629 = vld [vmem:[%s7 + $0xc0] sm:$0xff]
  %v630 = vld [vmem:[%s7 + $0xc8] sm:$0xff]
  %v631 = vld [vmem:[%s7 + $0xd0] sm:$0xff]
  %v632 = vld [vmem:[%s7 + $0xd8] sm:$0xff]
  %v633 = vld [vmem:[%s7 + $0xe0] sm:$0xff]
  %v634 = vld [vmem:[%s7 + $0xe8] sm:$0xff]
  %v635 = vld [vmem:[%s7 + $0xf0] sm:$0xff]
  %v636 = vld [vmem:[%s7 + $0xf8] sm:$0xff]
  %v637 = vld [vmem:[%s7 + $0x100] sm:$0xff]
  %v638 = vld [vmem:[%s7 + $0x108] sm:$0xff]
  %v639 = vld [vmem:[%s7 + $0x110] sm:$0xff]
  %v640 = vld [vmem:[%s7 + $0x118] sm:$0xff]
  %v641 = vld [vmem:[%s7 + $0x120] sm:$0xff]
  %v642 = vld [vmem:[%s7 + $0x128] sm:$0xff]
  %v643 = vld [vmem:[%s7 + $0x130] sm:$0xff]
  %v644 = vld [vmem:[%s7 + $0x138] sm:$0xff]
  %v645 = vld [vmem:[%s7 + $0x140] sm:$0xff]
  %v646 = vld [vmem:[%s7 + $0x148] sm:$0xff]
  %v647 = vld [vmem:[%s7 + $0x150] sm:$0xff]
  %v648 = vld [vmem:[%s7 + $0x158] sm:$0xff]
  %v649 = vld [vmem:[%s7 + $0x160] sm:$0xff]
  %v650 = vld [vmem:[%s7 + $0x168] sm:$0xff]
  %v651 = vld [vmem:[%s7 + $0x170] sm:$0xff]
  %v652 = vld [vmem:[%s7 + $0x178] sm:$0xff]
  %v653 = vld [vmem:[%s7 + $0x180] sm:$0xff]
  %v654 = vld [vmem:[%s7 + $0x188] sm:$0xff]
  %v655 = vld [vmem:[%s7 + $0x190] sm:$0xff]
  %v656 = vld [vmem:[%s7 + $0x198] sm:$0xff]
  %v657 = vld [vmem:[%s7 + $0x1a0] sm:$0xff]
  %v658 = vld [vmem:[%s7 + $0x1a8] sm:$0xff]
  %v659 = vld [vmem:[%s7 + $0x1b0] sm:$0xff]
  %v660 = vld [vmem:[%s7 + $0x1b8] sm:$0xff]
  %v661 = vld [vmem:[%s7 + $0x1c0] sm:$0xff]
  %v662 = vld [vmem:[%s7 + $0x1c8] sm:$0xff]
  %v663 = vld [vmem:[%s7 + $0x1d0] sm:$0xff]
  %v664 = vld [vmem:[%s7 + $0x1d8] sm:$0xff]
  %v665 = vld [vmem:[%s7 + $0x1e0] sm:$0xff]
  %v666 = vld [vmem:[%s7 + $0x1e8] sm:$0xff]
  %v667 = vld [vmem:[%s7 + $0x1f0] sm:$0xff]
  %v668 = vld [vmem:[%s7 + $0x1f8] sm:$0xff]
  %v733 = vunpack.c.l.b16 %v605
  %v734 = vunpack.c.h.b16 %v605
  %v735 = vunpack.c.l.b16 %v606
  %v736 = vunpack.c.h.b16 %v606
  %v737 = vunpack.c.l.b16 %v607
  %v738 = vunpack.c.h.b16 %v607
  %v739 = vunpack.c.l.b16 %v608
  %v740 = vunpack.c.h.b16 %v608
  %v741 = vunpack.c.l.b16 %v609
  %v742 = vunpack.c.h.b16 %v609
  %v743 = vunpack.c.l.b16 %v610
  %v744 = vunpack.c.h.b16 %v610
  %v745 = vunpack.c.l.b16 %v611
  %v746 = vunpack.c.h.b16 %v611
  %v747 = vunpack.c.l.b16 %v612
  %v748 = vunpack.c.h.b16 %v612
  %v749 = vunpack.c.l.b16 %v613
  %v750 = vunpack.c.h.b16 %v613
  %v751 = vunpack.c.l.b16 %v614
  %v752 = vunpack.c.h.b16 %v614
  %v753 = vunpack.c.l.b16 %v615
  %v754 = vunpack.c.h.b16 %v615
  %v755 = vunpack.c.l.b16 %v616
  %v756 = vunpack.c.h.b16 %v616
  %v757 = vunpack.c.l.b16 %v617
  %v758 = vunpack.c.h.b16 %v617
  %v759 = vunpack.c.l.b16 %v618
  %v760 = vunpack.c.h.b16 %v618
  %v761 = vunpack.c.l.b16 %v619
  %v762 = vunpack.c.h.b16 %v619
  %v763 = vunpack.c.l.b16 %v620
  %v764 = vunpack.c.h.b16 %v620
  %v765 = vunpack.c.l.b16 %v621
  %v766 = vunpack.c.h.b16 %v621
  %v767 = vunpack.c.l.b16 %v622
  %v768 = vunpack.c.h.b16 %v622
  %v769 = vunpack.c.l.b16 %v623
  %v770 = vunpack.c.h.b16 %v623
  %v771 = vunpack.c.l.b16 %v624
  %v772 = vunpack.c.h.b16 %v624
  %v773 = vunpack.c.l.b16 %v625
  %v774 = vunpack.c.h.b16 %v625
  %v775 = vunpack.c.l.b16 %v626
  %v776 = vunpack.c.h.b16 %v626
  %v777 = vunpack.c.l.b16 %v627
  %v778 = vunpack.c.h.b16 %v627
  %v779 = vunpack.c.l.b16 %v628
  %v780 = vunpack.c.h.b16 %v628
  %v781 = vunpack.c.l.b16 %v629
  %v782 = vunpack.c.h.b16 %v629
  %v783 = vunpack.c.l.b16 %v630
  %v784 = vunpack.c.h.b16 %v630
  %v785 = vunpack.c.l.b16 %v631
  %v786 = vunpack.c.h.b16 %v631
  %v787 = vunpack.c.l.b16 %v632
  %v788 = vunpack.c.h.b16 %v632
  %v789 = vunpack.c.l.b16 %v633
  %v790 = vunpack.c.h.b16 %v633
  %v791 = vunpack.c.l.b16 %v634
  %v792 = vunpack.c.h.b16 %v634
  %v793 = vunpack.c.l.b16 %v635
  %v794 = vunpack.c.h.b16 %v635
  %v795 = vunpack.c.l.b16 %v636
  %v796 = vunpack.c.h.b16 %v636
  %v797 = vunpack.c.l.b16 %v637
  %v798 = vunpack.c.h.b16 %v637
  %v799 = vunpack.c.l.b16 %v638
  %v800 = vunpack.c.h.b16 %v638
  %v801 = vunpack.c.l.b16 %v639
  %v802 = vunpack.c.h.b16 %v639
  %v803 = vunpack.c.l.b16 %v640
  %v804 = vunpack.c.h.b16 %v640
  %v805 = vunpack.c.l.b16 %v641
  %v806 = vunpack.c.h.b16 %v641
  %v807 = vunpack.c.l.b16 %v642
  %v808 = vunpack.c.h.b16 %v642
  %v809 = vunpack.c.l.b16 %v643
  %v810 = vunpack.c.h.b16 %v643
  %v811 = vunpack.c.l.b16 %v644
  %v812 = vunpack.c.h.b16 %v644
  %v813 = vunpack.c.l.b16 %v645
  %v814 = vunpack.c.h.b16 %v645
  %v815 = vunpack.c.l.b16 %v646
  %v816 = vunpack.c.h.b16 %v646
  %v817 = vunpack.c.l.b16 %v647
  %v818 = vunpack.c.h.b16 %v647
  %v819 = vunpack.c.l.b16 %v648
  %v820 = vunpack.c.h.b16 %v648
  %v821 = vunpack.c.l.b16 %v649
  %v822 = vunpack.c.h.b16 %v649
  %v823 = vunpack.c.l.b16 %v650
  %v824 = vunpack.c.h.b16 %v650
  %v825 = vunpack.c.l.b16 %v651
  %v826 = vunpack.c.h.b16 %v651
  %v827 = vunpack.c.l.b16 %v652
  %v828 = vunpack.c.h.b16 %v652
  %v829 = vunpack.c.l.b16 %v653
  %v830 = vunpack.c.h.b16 %v653
  %v831 = vunpack.c.l.b16 %v654
  %v832 = vunpack.c.h.b16 %v654
  %v833 = vunpack.c.l.b16 %v655
  %v834 = vunpack.c.h.b16 %v655
  %v835 = vunpack.c.l.b16 %v656
  %v836 = vunpack.c.h.b16 %v656
  %v837 = vunpack.c.l.b16 %v657
  %v838 = vunpack.c.h.b16 %v657
  %v839 = vunpack.c.l.b16 %v658
  %v840 = vunpack.c.h.b16 %v658
  %v841 = vunpack.c.l.b16 %v659
  %v842 = vunpack.c.h.b16 %v659
  %v843 = vunpack.c.l.b16 %v660
  %v844 = vunpack.c.h.b16 %v660
  %v845 = vunpack.c.l.b16 %v661
  %v846 = vunpack.c.h.b16 %v661
  %v847 = vunpack.c.l.b16 %v662
  %v848 = vunpack.c.h.b16 %v662
  %v849 = vunpack.c.l.b16 %v663
  %v850 = vunpack.c.h.b16 %v663
  %v851 = vunpack.c.l.b16 %v664
  %v852 = vunpack.c.h.b16 %v664
  %v853 = vunpack.c.l.b16 %v665
  %v854 = vunpack.c.h.b16 %v665
  %v855 = vunpack.c.l.b16 %v666
  %v856 = vunpack.c.h.b16 %v666
  %v857 = vunpack.c.l.b16 %v667
  %v858 = vunpack.c.h.b16 %v667
  %v859 = vunpack.c.l.b16 %v668
  %v860 = vunpack.c.h.b16 %v668
  %v861 = vpack.c.b16 %v737, %v733
  %v862 = vpack.c.b16 %v738, %v734
  %v863 = vpack.c.b16 %v739, %v735
  %v864 = vpack.c.b16 %v740, %v736
  %v865 = vpack.c.b16 %v745, %v741
  %v866 = vpack.c.b16 %v746, %v742
  %v867 = vpack.c.b16 %v747, %v743
  %v868 = vpack.c.b16 %v748, %v744
  %v869 = vpack.c.b16 %v753, %v749
  %v870 = vpack.c.b16 %v754, %v750
  %v871 = vpack.c.b16 %v755, %v751
  %v872 = vpack.c.b16 %v756, %v752
  %v873 = vpack.c.b16 %v761, %v757
  %v874 = vpack.c.b16 %v762, %v758
  %v875 = vpack.c.b16 %v763, %v759
  %v876 = vpack.c.b16 %v764, %v760
  %v877 = vpack.c.b16 %v769, %v765
  %v878 = vpack.c.b16 %v770, %v766
  %v879 = vpack.c.b16 %v771, %v767
  %v880 = vpack.c.b16 %v772, %v768
  %v881 = vpack.c.b16 %v777, %v773
  %v882 = vpack.c.b16 %v778, %v774
  %v883 = vpack.c.b16 %v779, %v775
  %v884 = vpack.c.b16 %v780, %v776
  %v885 = vpack.c.b16 %v785, %v781
  %v886 = vpack.c.b16 %v786, %v782
  %v887 = vpack.c.b16 %v787, %v783
  %v888 = vpack.c.b16 %v788, %v784
  %v889 = vpack.c.b16 %v793, %v789
  %v890 = vpack.c.b16 %v794, %v790
  %v891 = vpack.c.b16 %v795, %v791
  %v892 = vpack.c.b16 %v796, %v792
  %v893 = vpack.c.b16 %v801, %v797
  %v894 = vpack.c.b16 %v802, %v798
  %v895 = vpack.c.b16 %v803, %v799
  %v896 = vpack.c.b16 %v804, %v800
  %v897 = vpack.c.b16 %v809, %v805
  %v898 = vpack.c.b16 %v810, %v806
  %v899 = vpack.c.b16 %v811, %v807
  %v900 = vpack.c.b16 %v812, %v808
  %v901 = vpack.c.b16 %v817, %v813
  %v902 = vpack.c.b16 %v818, %v814
  %v903 = vpack.c.b16 %v819, %v815
  %v904 = vpack.c.b16 %v820, %v816
  %v905 = vpack.c.b16 %v825, %v821
  %v906 = vpack.c.b16 %v826, %v822
  %v907 = vpack.c.b16 %v827, %v823
  %v908 = vpack.c.b16 %v828, %v824
  %v909 = vpack.c.b16 %v833, %v829
  %v910 = vpack.c.b16 %v834, %v830
  %v911 = vpack.c.b16 %v835, %v831
  %v912 = vpack.c.b16 %v836, %v832
  %v913 = vpack.c.b16 %v841, %v837
  %v914 = vpack.c.b16 %v842, %v838
  %v915 = vpack.c.b16 %v843, %v839
  %v916 = vpack.c.b16 %v844, %v840
  %v917 = vpack.c.b16 %v849, %v845
  %v918 = vpack.c.b16 %v850, %v846
  %v919 = vpack.c.b16 %v851, %v847
  %v920 = vpack.c.b16 %v852, %v848
  %v921 = vpack.c.b16 %v857, %v853
  %v922 = vpack.c.b16 %v858, %v854
  %v923 = vpack.c.b16 %v859, %v855
  %v924 = vpack.c.b16 %v860, %v856
  %989 = vmatprep.subr.bf16.mxu0 %v890
  %990 = vmatpush1.bf16.msra.mxu0 %v889
  %991 = vmatprep.subr.bf16.mxu0 %v886
  %992 = vmatpush1.bf16.msra.mxu0 %v885
  %993 = vmatprep.subr.bf16.mxu0 %v882
  %994 = vmatpush1.bf16.msra.mxu0 %v881
  %995 = vmatprep.subr.bf16.mxu0 %v878
  %996 = vmatpush1.bf16.msra.mxu0 %v877
  %997 = vmatprep.subr.bf16.mxu0 %v874
  %998 = vmatpush1.bf16.msra.mxu0 %v873
  %999 = vmatprep.subr.bf16.mxu0 %v870
  %1000 = vmatpush1.bf16.msra.mxu0 %v869
  %1001 = vmatprep.subr.bf16.mxu0 %v866
  %1002 = vmatpush1.bf16.msra.mxu0 %v865
  %1003 = vmatprep.subr.bf16.mxu0 %v862
  %1004 = vmatpush1.bf16.msra.mxu0 %v861
  %1005 = vmatprep.subr.bf16.mxu0 %v922
  %1006 = vmatpush2.bf16.msra.mxu0 %v921
  %1007 = vmatprep.subr.bf16.mxu0 %v918
  %1008 = vmatpush2.bf16.msra.mxu0 %v917
  %1009 = vmatprep.subr.bf16.mxu0 %v914
  %1010 = vmatpush2.bf16.msra.mxu0 %v913
  %1011 = vmatprep.subr.bf16.mxu0 %v910
  %1012 = vmatpush2.bf16.msra.mxu0 %v909
  %1013 = vmatprep.subr.bf16.mxu0 %v906
  %1014 = vmatpush2.bf16.msra.mxu0 %v905
  %1015 = vmatprep.subr.bf16.mxu0 %v902
  %1016 = vmatpush2.bf16.msra.mxu0 %v901
  %1017 = vmatprep.subr.bf16.mxu0 %v898
  %1018 = vmatpush2.bf16.msra.mxu0 %v897
  %1019 = vmatprep.subr.bf16.mxu0 %v894
  %1020 = vmatpush2.bf16.msra.mxu0 %v893
  %1021 = vmatprep.mubr.bf16.mxu0 %v604
  %1022 = vmatmul.mubr.bf16.gmra.mxu0 %v603
  %v1023 = vpop.f32.mrf.mxu0
  %v1024 = vadd.f32 %v320, %v1023
  %v1025 = vpop.f32.mrf.mxu0
  %v1026 = vadd.f32 %v324, %v1025
  %v1027 = vpop.f32.mrf.mxu0
  %v1028 = vpop.f32.mrf.mxu0
  %1029 = vdwg.mxu0
  %1030 = vmatprep.subr.bf16.mxu0 %v892
  %1031 = vmatpush1.bf16.msra.mxu0 %v891
  %1032 = vmatprep.subr.bf16.mxu0 %v888
  %1033 = vmatpush1.bf16.msra.mxu0 %v887
  %1034 = vmatprep.subr.bf16.mxu0 %v884
  %1035 = vmatpush1.bf16.msra.mxu0 %v883
  %1036 = vmatprep.subr.bf16.mxu0 %v880
  %1037 = vmatpush1.bf16.msra.mxu0 %v879
  %1038 = vmatprep.subr.bf16.mxu0 %v876
  %1039 = vmatpush1.bf16.msra.mxu0 %v875
  %1040 = vmatprep.subr.bf16.mxu0 %v872
  %1041 = vmatpush1.bf16.msra.mxu0 %v871
  %1042 = vmatprep.subr.bf16.mxu0 %v868
  %1043 = vmatpush1.bf16.msra.mxu0 %v867
  %1044 = vmatprep.subr.bf16.mxu0 %v864
  %1045 = vmatpush1.bf16.msra.mxu0 %v863
  %1046 = vmatprep.subr.bf16.mxu0 %v924
  %1047 = vmatpush2.bf16.msra.mxu0 %v923
  %1048 = vmatprep.subr.bf16.mxu0 %v920
  %1049 = vmatpush2.bf16.msra.mxu0 %v919
  %1050 = vmatprep.subr.bf16.mxu0 %v916
  %1051 = vmatpush2.bf16.msra.mxu0 %v915
  %1052 = vmatprep.subr.bf16.mxu0 %v912
  %1053 = vmatpush2.bf16.msra.mxu0 %v911
  %1054 = vmatprep.subr.bf16.mxu0 %v908
  %1055 = vmatpush2.bf16.msra.mxu0 %v907
  %1056 = vmatprep.subr.bf16.mxu0 %v904
  %1057 = vmatpush2.bf16.msra.mxu0 %v903
  %1058 = vmatprep.subr.bf16.mxu0 %v900
  %1059 = vmatpush2.bf16.msra.mxu0 %v899
  %1060 = vmatprep.subr.bf16.mxu0 %v896
  %1061 = vmatpush2.bf16.msra.mxu0 %v895
  %1062 = vmatprep.mubr.bf16.mxu0 %v604
  %1063 = vmatmul.mubr.bf16.gmra.mxu0 %v603
  %v1064 = vpop.f32.mrf.mxu0
  %v1065 = vadd.f32 %v328, %v1064
  %v1066 = vpop.f32.mrf.mxu0
  %v1067 = vadd.f32 %v332, %v1066
  %v1068 = vpop.f32.mrf.mxu0
  %v1069 = vpop.f32.mrf.mxu0
  %1070 = vdwg.mxu0
  %v1071 = vxor.u32 %v1024, 2147483648
  %v1072 = vxor.u32 %v1026, 2147483648
  %v1073 = vmul.f32 %v1071, 1.442695
  %v1074 = vpow.pop %v1073
  %v1075 = vmul.f32 %v1072, 1.442695
  %v1076 = vpow.pop %v1075
  %v1077 = vadd.f32 %v1074, 1.0
  %v1078 = vadd.f32 %v1076, 1.0
  %v1079 = vrcp.pop %v1077
  %v1080 = vmul.f32 1.0, %v1079
  %v1081 = vrcp.pop %v1078
  %v1082 = vmul.f32 1.0, %v1081
  %v1083 = vmul.f32 %v1080, %v1067
  %v1084 = vadd.f32 %v1065, %v1083
  %v1085 = vtanh.pop %v1084
  %v1086 = vsub.f32 1.0, %v1082
  %v1087 = vmul.f32 %v1086, %v1085
  %v1088 = vmul.f32 %v1082, 0.0
  %v1089 = vadd.f32 %v1087, %v1088
  %vm1090 = vcmp.gt.s32.totalorder %v297, 0
  %v1091 = vsel %vm1090, 1, 0
  %1092 = vset.pattern.permute.xlu0 0
  %1093 = vperm.xlu0 %1092, %v1091
  %v1094 = vpop.permute.xlu0 %1093
  %vm1095 = vcmp.eq.s32.totalorder %v1094, 1
  %v1096 = vsel %vm1095, %v602, 0.0
  %v1097 = vsel %vm1095, %v1089, 0.0
  %v1098 = vsel %vm1095, %v340, 0.0
  %v1099 = vld [vmem:[#allocation2 + $0x18] sm:$0xff]
  %v1100 = vld [vmem:[#allocation2 + $0x20] sm:$0xff]
  %v1101 = vld [vmem:[#allocation2 + $0x28] sm:$0xff]
  %v1102 = vld [vmem:[%s0 + $0x8] sm:$0xff]
  %v1103 = vpack.c.bf16 %v1096, %v1096
  %1104 = vmatprep.subr.bf16.mxu0 %v475
  %1105 = vmatpush1.bf16.msra.mxu0 %v474
  %1106 = vmatprep.subr.bf16.mxu0 %v472
  %1107 = vmatpush1.bf16.msra.mxu0 %v471
  %1108 = vmatprep.subr.bf16.mxu0 %v469
  %1109 = vmatpush1.bf16.msra.mxu0 %v468
  %1110 = vmatprep.subr.bf16.mxu0 %v466
  %1111 = vmatpush1.bf16.msra.mxu0 %v465
  %1112 = vmatprep.subr.bf16.mxu0 %v463
  %1113 = vmatpush1.bf16.msra.mxu0 %v462
  %1114 = vmatprep.subr.bf16.mxu0 %v460
  %1115 = vmatpush1.bf16.msra.mxu0 %v459
  %1116 = vmatprep.subr.bf16.mxu0 %v457
  %1117 = vmatpush1.bf16.msra.mxu0 %v456
  %1118 = vmatprep.subr.bf16.mxu0 %v454
  %1119 = vmatpush1.bf16.msra.mxu0 %v453
  %1120 = vmatprep.subr.bf16.mxu0 0
  %1121 = vmatpush2.bf16.msra.mxu0 0
  %1122 = vmatprep.subr.bf16.mxu0 0
  %1123 = vmatpush2.bf16.msra.mxu0 0
  %1124 = vmatprep.subr.bf16.mxu0 0
  %1125 = vmatpush2.bf16.msra.mxu0 0
  %1126 = vmatprep.subr.bf16.mxu0 0
  %1127 = vmatpush2.bf16.msra.mxu0 0
  %1128 = vmatprep.subr.bf16.mxu0 0
  %1129 = vmatpush2.bf16.msra.mxu0 0
  %1130 = vmatprep.subr.bf16.mxu0 0
  %1131 = vmatpush2.bf16.msra.mxu0 0
  %1132 = vmatprep.subr.bf16.mxu0 0
  %1133 = vmatpush2.bf16.msra.mxu0 0
  %1134 = vmatprep.subr.bf16.mxu0 0
  %1135 = vmatpush2.bf16.msra.mxu0 0
  %1136 = vmatprep.mubr.bf16.mxu0 0
  %1137 = vmatmul.mubr.bf16.gmra.mxu0 %v1103
  %v1138 = vpop.f32.mrf.mxu0
  %v1139 = vadd.f32 %v303, %v1138
  %v1140 = vpop.f32.mrf.mxu0
  %v1141 = vadd.f32 %v307, %v1140
  %v1142 = vpop.f32.mrf.mxu0
  %v1143 = vpop.f32.mrf.mxu0
  %1144 = vdwg.mxu0
  %1145 = vmatprep.subr.bf16.mxu0 0
  %1146 = vmatpush1.bf16.msra.mxu0 %v476
  %1147 = vmatprep.subr.bf16.mxu0 0
  %1148 = vmatpush1.bf16.msra.mxu0 %v473
  %1149 = vmatprep.subr.bf16.mxu0 0
  %1150 = vmatpush1.bf16.msra.mxu0 %v470
  %1151 = vmatprep.subr.bf16.mxu0 0
  %1152 = vmatpush1.bf16.msra.mxu0 %v467
  %1153 = vmatprep.subr.bf16.mxu0 0
  %1154 = vmatpush1.bf16.msra.mxu0 %v464
  %1155 = vmatprep.subr.bf16.mxu0 0
  %1156 = vmatpush1.bf16.msra.mxu0 %v461
  %1157 = vmatprep.subr.bf16.mxu0 0
  %1158 = vmatpush1.bf16.msra.mxu0 %v458
  %1159 = vmatprep.subr.bf16.mxu0 0
  %1160 = vmatpush1.bf16.msra.mxu0 %v455
  %1161 = vmatprep.subr.bf16.mxu0 0
  %1162 = vmatpush2.bf16.msra.mxu0 0
  %1163 = vmatprep.subr.bf16.mxu0 0
  %1164 = vmatpush2.bf16.msra.mxu0 0
  %1165 = vmatprep.subr.bf16.mxu0 0
  %1166 = vmatpush2.bf16.msra.mxu0 0
  %1167 = vmatprep.subr.bf16.mxu0 0
  %1168 = vmatpush2.bf16.msra.mxu0 0
  %1169 = vmatprep.subr.bf16.mxu0 0
  %1170 = vmatpush2.bf16.msra.mxu0 0
  %1171 = vmatprep.subr.bf16.mxu0 0
  %1172 = vmatpush2.bf16.msra.mxu0 0
  %1173 = vmatprep.subr.bf16.mxu0 0
  %1174 = vmatpush2.bf16.msra.mxu0 0
  %1175 = vmatprep.subr.bf16.mxu0 0
  %1176 = vmatpush2.bf16.msra.mxu0 0
  %1177 = vmatprep.mubr.bf16.mxu0 0
  %1178 = vmatmul.mubr.bf16.gmra.mxu0 %v1103
  %v1179 = vpop.f32.mrf.mxu0
  %v1180 = vadd.f32 %v311, %v1179
  %v1181 = vpop.f32.mrf.mxu0
  %v1182 = vpop.f32.mrf.mxu0
  %v1183 = vpop.f32.mrf.mxu0
  %1184 = vdwg.mxu0
  %v1185 = vadd.f32 %v1099, %v1139
  %v1186 = vadd.f32 %v1100, %v1141
  %v1187 = vxor.u32 %v1185, 2147483648
  %v1188 = vxor.u32 %v1186, 2147483648
  %v1189 = vmul.f32 %v1187, 1.442695
  %v1190 = vpow.pop %v1189
  %v1191 = vmul.f32 %v1188, 1.442695
  %v1192 = vpow.pop %v1191
  %v1193 = vadd.f32 %v1190, 1.0
  %v1194 = vadd.f32 %v1192, 1.0
  %v1195 = vrcp.pop %v1193
  %v1196 = vmul.f32 1.0, %v1195
  %v1197 = vrcp.pop %v1194
  %v1198 = vmul.f32 1.0, %v1197
  %v1199 = vmul.f32 %v1196, %v1180
  %v1200 = vadd.f32 %v1101, %v1199
  %v1201 = vtanh.pop %v1200
  %v1202 = vsub.f32 1.0, %v1198
  %v1203 = vmul.f32 %v1202, %v1201
  %v1204 = vmul.f32 %v1198, %v1096
  %v1205 = vadd.f32 %v1203, %v1204
  %v1206 = vpack.c.bf16 %v1205, %v1205
  %v1207 = vpack.c.bf16 %v1097, %v1097
  %1208 = vmatprep.subr.bf16.mxu0 %v890
  %1209 = vmatpush1.bf16.msra.mxu0 %v889
  %1210 = vmatprep.subr.bf16.mxu0 %v886
  %1211 = vmatpush1.bf16.msra.mxu0 %v885
  %1212 = vmatprep.subr.bf16.mxu0 %v882
  %1213 = vmatpush1.bf16.msra.mxu0 %v881
  %1214 = vmatprep.subr.bf16.mxu0 %v878
  %1215 = vmatpush1.bf16.msra.mxu0 %v877
  %1216 = vmatprep.subr.bf16.mxu0 %v874
  %1217 = vmatpush1.bf16.msra.mxu0 %v873
  %1218 = vmatprep.subr.bf16.mxu0 %v870
  %1219 = vmatpush1.bf16.msra.mxu0 %v869
  %1220 = vmatprep.subr.bf16.mxu0 %v866
  %1221 = vmatpush1.bf16.msra.mxu0 %v865
  %1222 = vmatprep.subr.bf16.mxu0 %v862
  %1223 = vmatpush1.bf16.msra.mxu0 %v861
  %1224 = vmatprep.subr.bf16.mxu0 %v922
  %1225 = vmatpush2.bf16.msra.mxu0 %v921
  %1226 = vmatprep.subr.bf16.mxu0 %v918
  %1227 = vmatpush2.bf16.msra.mxu0 %v917
  %1228 = vmatprep.subr.bf16.mxu0 %v914
  %1229 = vmatpush2.bf16.msra.mxu0 %v913
  %1230 = vmatprep.subr.bf16.mxu0 %v910
  %1231 = vmatpush2.bf16.msra.mxu0 %v909
  %1232 = vmatprep.subr.bf16.mxu0 %v906
  %1233 = vmatpush2.bf16.msra.mxu0 %v905
  %1234 = vmatprep.subr.bf16.mxu0 %v902
  %1235 = vmatpush2.bf16.msra.mxu0 %v901
  %1236 = vmatprep.subr.bf16.mxu0 %v898
  %1237 = vmatpush2.bf16.msra.mxu0 %v897
  %1238 = vmatprep.subr.bf16.mxu0 %v894
  %1239 = vmatpush2.bf16.msra.mxu0 %v893
  %1240 = vmatprep.mubr.bf16.mxu0 %v1207
  %1241 = vmatmul.mubr.bf16.gmra.mxu0 %v1206
  %v1242 = vpop.f32.mrf.mxu0
  %v1243 = vadd.f32 %v320, %v1242
  %v1244 = vpop.f32.mrf.mxu0
  %v1245 = vadd.f32 %v324, %v1244
  %v1246 = vpop.f32.mrf.mxu0
  %v1247 = vpop.f32.mrf.mxu0
  %1248 = vdwg.mxu0
  %1249 = vmatprep.subr.bf16.mxu0 %v892
  %1250 = vmatpush1.bf16.msra.mxu0 %v891
  %1251 = vmatprep.subr.bf16.mxu0 %v888
  %1252 = vmatpush1.bf16.msra.mxu0 %v887
  %1253 = vmatprep.subr.bf16.mxu0 %v884
  %1254 = vmatpush1.bf16.msra.mxu0 %v883
  %1255 = vmatprep.subr.bf16.mxu0 %v880
  %1256 = vmatpush1.bf16.msra.mxu0 %v879
  %1257 = vmatprep.subr.bf16.mxu0 %v876
  %1258 = vmatpush1.bf16.msra.mxu0 %v875
  %1259 = vmatprep.subr.bf16.mxu0 %v872
  %1260 = vmatpush1.bf16.msra.mxu0 %v871
  %1261 = vmatprep.subr.bf16.mxu0 %v868
  %1262 = vmatpush1.bf16.msra.mxu0 %v867
  %1263 = vmatprep.subr.bf16.mxu0 %v864
  %1264 = vmatpush1.bf16.msra.mxu0 %v863
  %1265 = vmatprep.subr.bf16.mxu0 %v924
  %1266 = vmatpush2.bf16.msra.mxu0 %v923
  %1267 = vmatprep.subr.bf16.mxu0 %v920
  %1268 = vmatpush2.bf16.msra.mxu0 %v919
  %1269 = vmatprep.subr.bf16.mxu0 %v916
  %1270 = vmatpush2.bf16.msra.mxu0 %v915
  %1271 = vmatprep.subr.bf16.mxu0 %v912
  %1272 = vmatpush2.bf16.msra.mxu0 %v911
  %1273 = vmatprep.subr.bf16.mxu0 %v908
  %1274 = vmatpush2.bf16.msra.mxu0 %v907
  %1275 = vmatprep.subr.bf16.mxu0 %v904
  %1276 = vmatpush2.bf16.msra.mxu0 %v903
  %1277 = vmatprep.subr.bf16.mxu0 %v900
  %1278 = vmatpush2.bf16.msra.mxu0 %v899
  %1279 = vmatprep.subr.bf16.mxu0 %v896
  %1280 = vmatpush2.bf16.msra.mxu0 %v895
  %1281 = vmatprep.mubr.bf16.mxu0 %v1207
  %1282 = vmatmul.mubr.bf16.gmra.mxu0 %v1206
  %v1283 = vpop.f32.mrf.mxu0
  %v1284 = vadd.f32 %v328, %v1283
  %v1285 = vpop.f32.mrf.mxu0
  %v1286 = vadd.f32 %v332, %v1285
  %v1287 = vpop.f32.mrf.mxu0
  %v1288 = vpop.f32.mrf.mxu0
  %1289 = vdwg.mxu0
  %v1290 = vxor.u32 %v1243, 2147483648
  %v1291 = vxor.u32 %v1245, 2147483648
  %v1292 = vmul.f32 %v1290, 1.442695
  %v1293 = vpow.pop %v1292
  %v1294 = vmul.f32 %v1291, 1.442695
  %v1295 = vpow.pop %v1294
  %v1296 = vadd.f32 %v1293, 1.0
  %v1297 = vadd.f32 %v1295, 1.0
  %v1298 = vrcp.pop %v1296
  %v1299 = vmul.f32 1.0, %v1298
  %v1300 = vrcp.pop %v1297
  %v1301 = vmul.f32 1.0, %v1300
  %v1302 = vmul.f32 %v1299, %v1286
  %v1303 = vadd.f32 %v1284, %v1302
  %v1304 = vtanh.pop %v1303
  %v1305 = vsub.f32 1.0, %v1301
  %v1306 = vmul.f32 %v1305, %v1304
  %v1307 = vmul.f32 %v1301, %v1097
  %v1308 = vadd.f32 %v1306, %v1307
  %vm1309 = vcmp.gt.s32.totalorder %v297, 1
  %v1310 = vsel %vm1309, 1, 0
  %1311 = vset.pattern.permute.xlu0 0
  %1312 = vperm.xlu0 %1311, %v1310
  %v1313 = vpop.permute.xlu0 %1312
  %vm1314 = vcmp.eq.s32.totalorder %v1313, 1
  %v1315 = vsel %vm1314, %v1205, %v1096
  %v1316 = vsel %vm1314, %v1308, %v1097
  %v1317 = vsel %vm1314, %v1102, %v1098
  %v1318 = vld [vmem:[#allocation2 + $0x30] sm:$0xff]
  %v1319 = vld [vmem:[#allocation2 + $0x38] sm:$0xff]
  %v1320 = vld [vmem:[#allocation2 + $0x40] sm:$0xff]
  %v1321 = vld [vmem:[%s0 + $0x10] sm:$0xff]
  %v1322 = vpack.c.bf16 %v1315, %v1315
  %1323 = vmatprep.subr.bf16.mxu0 %v475
  %1324 = vmatpush1.bf16.msra.mxu0 %v474
  %1325 = vmatprep.subr.bf16.mxu0 %v472
  %1326 = vmatpush1.bf16.msra.mxu0 %v471
  %1327 = vmatprep.subr.bf16.mxu0 %v469
  %1328 = vmatpush1.bf16.msra.mxu0 %v468
  %1329 = vmatprep.subr.bf16.mxu0 %v466
  %1330 = vmatpush1.bf16.msra.mxu0 %v465
  %1331 = vmatprep.subr.bf16.mxu0 %v463
  %1332 = vmatpush1.bf16.msra.mxu0 %v462
  %1333 = vmatprep.subr.bf16.mxu0 %v460
  %1334 = vmatpush1.bf16.msra.mxu0 %v459
  %1335 = vmatprep.subr.bf16.mxu0 %v457
  %1336 = vmatpush1.bf16.msra.mxu0 %v456
  %1337 = vmatprep.subr.bf16.mxu0 %v454
  %1338 = vmatpush1.bf16.msra.mxu0 %v453
  %1339 = vmatprep.subr.bf16.mxu0 0
  %1340 = vmatpush2.bf16.msra.mxu0 0
  %1341 = vmatprep.subr.bf16.mxu0 0
  %1342 = vmatpush2.bf16.msra.mxu0 0
  %1343 = vmatprep.subr.bf16.mxu0 0
  %1344 = vmatpush2.bf16.msra.mxu0 0
  %1345 = vmatprep.subr.bf16.mxu0 0
  %1346 = vmatpush2.bf16.msra.mxu0 0
  %1347 = vmatprep.subr.bf16.mxu0 0
  %1348 = vmatpush2.bf16.msra.mxu0 0
  %1349 = vmatprep.subr.bf16.mxu0 0
  %1350 = vmatpush2.bf16.msra.mxu0 0
  %1351 = vmatprep.subr.bf16.mxu0 0
  %1352 = vmatpush2.bf16.msra.mxu0 0
  %1353 = vmatprep.subr.bf16.mxu0 0
  %1354 = vmatpush2.bf16.msra.mxu0 0
  %1355 = vmatprep.mubr.bf16.mxu0 0
  %1356 = vmatmul.mubr.bf16.gmra.mxu0 %v1322
  %v1357 = vpop.f32.mrf.mxu0
  %v1358 = vadd.f32 %v303, %v1357
  %v1359 = vpop.f32.mrf.mxu0
  %v1360 = vadd.f32 %v307, %v1359
  %v1361 = vpop.f32.mrf.mxu0
  %v1362 = vpop.f32.mrf.mxu0
  %1363 = vdwg.mxu0
  %1364 = vmatprep.subr.bf16.mxu0 0
  %1365 = vmatpush1.bf16.msra.mxu0 %v476
  %1366 = vmatprep.subr.bf16.mxu0 0
  %1367 = vmatpush1.bf16.msra.mxu0 %v473
  %1368 = vmatprep.subr.bf16.mxu0 0
  %1369 = vmatpush1.bf16.msra.mxu0 %v470
  %1370 = vmatprep.subr.bf16.mxu0 0
  %1371 = vmatpush1.bf16.msra.mxu0 %v467
  %1372 = vmatprep.subr.bf16.mxu0 0
  %1373 = vmatpush1.bf16.msra.mxu0 %v464
  %1374 = vmatprep.subr.bf16.mxu0 0
  %1375 = vmatpush1.bf16.msra.mxu0 %v461
  %1376 = vmatprep.subr.bf16.mxu0 0
  %1377 = vmatpush1.bf16.msra.mxu0 %v458
  %1378 = vmatprep.subr.bf16.mxu0 0
  %1379 = vmatpush1.bf16.msra.mxu0 %v455
  %1380 = vmatprep.subr.bf16.mxu0 0
  %1381 = vmatpush2.bf16.msra.mxu0 0
  %1382 = vmatprep.subr.bf16.mxu0 0
  %1383 = vmatpush2.bf16.msra.mxu0 0
  %1384 = vmatprep.subr.bf16.mxu0 0
  %1385 = vmatpush2.bf16.msra.mxu0 0
  %1386 = vmatprep.subr.bf16.mxu0 0
  %1387 = vmatpush2.bf16.msra.mxu0 0
  %1388 = vmatprep.subr.bf16.mxu0 0
  %1389 = vmatpush2.bf16.msra.mxu0 0
  %1390 = vmatprep.subr.bf16.mxu0 0
  %1391 = vmatpush2.bf16.msra.mxu0 0
  %1392 = vmatprep.subr.bf16.mxu0 0
  %1393 = vmatpush2.bf16.msra.mxu0 0
  %1394 = vmatprep.subr.bf16.mxu0 0
  %1395 = vmatpush2.bf16.msra.mxu0 0
  %1396 = vmatprep.mubr.bf16.mxu0 0
  %1397 = vmatmul.mubr.bf16.gmra.mxu0 %v1322
  %v1398 = vpop.f32.mrf.mxu0
  %v1399 = vadd.f32 %v311, %v1398
  %v1400 = vpop.f32.mrf.mxu0
  %v1401 = vpop.f32.mrf.mxu0
  %v1402 = vpop.f32.mrf.mxu0
  %1403 = vdwg.mxu0
  %v1404 = vadd.f32 %v1318, %v1358
  %v1405 = vadd.f32 %v1319, %v1360
  %v1406 = vxor.u32 %v1404, 2147483648
  %v1407 = vxor.u32 %v1405, 2147483648
  %v1408 = vmul.f32 %v1406, 1.442695
  %v1409 = vpow.pop %v1408
  %v1410 = vmul.f32 %v1407, 1.442695
  %v1411 = vpow.pop %v1410
  %v1412 = vadd.f32 %v1409, 1.0
  %v1413 = vadd.f32 %v1411, 1.0
  %v1414 = vrcp.pop %v1412
  %v1415 = vmul.f32 1.0, %v1414
  %v1416 = vrcp.pop %v1413
  %v1417 = vmul.f32 1.0, %v1416
  %v1418 = vmul.f32 %v1415, %v1399
  %v1419 = vadd.f32 %v1320, %v1418
  %v1420 = vtanh.pop %v1419
  %v1421 = vsub.f32 1.0, %v1417
  %v1422 = vmul.f32 %v1421, %v1420
  %v1423 = vmul.f32 %v1417, %v1315
  %v1424 = vadd.f32 %v1422, %v1423
  %v1425 = vpack.c.bf16 %v1424, %v1424
  %v1426 = vpack.c.bf16 %v1316, %v1316
  %1427 = vmatprep.subr.bf16.mxu0 %v890
  %1428 = vmatpush1.bf16.msra.mxu0 %v889
  %1429 = vmatprep.subr.bf16.mxu0 %v886
  %1430 = vmatpush1.bf16.msra.mxu0 %v885
  %1431 = vmatprep.subr.bf16.mxu0 %v882
  %1432 = vmatpush1.bf16.msra.mxu0 %v881
  %1433 = vmatprep.subr.bf16.mxu0 %v878
  %1434 = vmatpush1.bf16.msra.mxu0 %v877
  %1435 = vmatprep.subr.bf16.mxu0 %v874
  %1436 = vmatpush1.bf16.msra.mxu0 %v873
  %1437 = vmatprep.subr.bf16.mxu0 %v870
  %1438 = vmatpush1.bf16.msra.mxu0 %v869
  %1439 = vmatprep.subr.bf16.mxu0 %v866
  %1440 = vmatpush1.bf16.msra.mxu0 %v865
  %1441 = vmatprep.subr.bf16.mxu0 %v862
  %1442 = vmatpush1.bf16.msra.mxu0 %v861
  %1443 = vmatprep.subr.bf16.mxu0 %v922
  %1444 = vmatpush2.bf16.msra.mxu0 %v921
  %1445 = vmatprep.subr.bf16.mxu0 %v918
  %1446 = vmatpush2.bf16.msra.mxu0 %v917
  %1447 = vmatprep.subr.bf16.mxu0 %v914
  %1448 = vmatpush2.bf16.msra.mxu0 %v913
  %1449 = vmatprep.subr.bf16.mxu0 %v910
  %1450 = vmatpush2.bf16.msra.mxu0 %v909
  %1451 = vmatprep.subr.bf16.mxu0 %v906
  %1452 = vmatpush2.bf16.msra.mxu0 %v905
  %1453 = vmatprep.subr.bf16.mxu0 %v902
  %1454 = vmatpush2.bf16.msra.mxu0 %v901
  %1455 = vmatprep.subr.bf16.mxu0 %v898
  %1456 = vmatpush2.bf16.msra.mxu0 %v897
  %1457 = vmatprep.subr.bf16.mxu0 %v894
  %1458 = vmatpush2.bf16.msra.mxu0 %v893
  %1459 = vmatprep.mubr.bf16.mxu0 %v1426
  %1460 = vmatmul.mubr.bf16.gmra.mxu0 %v1425
  %v1461 = vpop.f32.mrf.mxu0
  %v1462 = vadd.f32 %v320, %v1461
  %v1463 = vpop.f32.mrf.mxu0
  %v1464 = vadd.f32 %v324, %v1463
  %v1465 = vpop.f32.mrf.mxu0
  %v1466 = vpop.f32.mrf.mxu0
  %1467 = vdwg.mxu0
  %1468 = vmatprep.subr.bf16.mxu0 %v892
  %1469 = vmatpush1.bf16.msra.mxu0 %v891
  %1470 = vmatprep.subr.bf16.mxu0 %v888
  %1471 = vmatpush1.bf16.msra.mxu0 %v887
  %1472 = vmatprep.subr.bf16.mxu0 %v884
  %1473 = vmatpush1.bf16.msra.mxu0 %v883
  %1474 = vmatprep.subr.bf16.mxu0 %v880
  %1475 = vmatpush1.bf16.msra.mxu0 %v879
  %1476 = vmatprep.subr.bf16.mxu0 %v876
  %1477 = vmatpush1.bf16.msra.mxu0 %v875
  %1478 = vmatprep.subr.bf16.mxu0 %v872
  %1479 = vmatpush1.bf16.msra.mxu0 %v871
  %1480 = vmatprep.subr.bf16.mxu0 %v868
  %1481 = vmatpush1.bf16.msra.mxu0 %v867
  %1482 = vmatprep.subr.bf16.mxu0 %v864
  %1483 = vmatpush1.bf16.msra.mxu0 %v863
  %1484 = vmatprep.subr.bf16.mxu0 %v924
  %1485 = vmatpush2.bf16.msra.mxu0 %v923
  %1486 = vmatprep.subr.bf16.mxu0 %v920
  %1487 = vmatpush2.bf16.msra.mxu0 %v919
  %1488 = vmatprep.subr.bf16.mxu0 %v916
  %1489 = vmatpush2.bf16.msra.mxu0 %v915
  %1490 = vmatprep.subr.bf16.mxu0 %v912
  %1491 = vmatpush2.bf16.msra.mxu0 %v911
  %1492 = vmatprep.subr.bf16.mxu0 %v908
  %1493 = vmatpush2.bf16.msra.mxu0 %v907
  %1494 = vmatprep.subr.bf16.mxu0 %v904
  %1495 = vmatpush2.bf16.msra.mxu0 %v903
  %1496 = vmatprep.subr.bf16.mxu0 %v900
  %1497 = vmatpush2.bf16.msra.mxu0 %v899
  %1498 = vmatprep.subr.bf16.mxu0 %v896
  %1499 = vmatpush2.bf16.msra.mxu0 %v895
  %1500 = vmatprep.mubr.bf16.mxu0 %v1426
  %1501 = vmatmul.mubr.bf16.gmra.mxu0 %v1425
  %v1502 = vpop.f32.mrf.mxu0
  %v1503 = vadd.f32 %v328, %v1502
  %v1504 = vpop.f32.mrf.mxu0
  %v1505 = vadd.f32 %v332, %v1504
  %v1506 = vpop.f32.mrf.mxu0
  %v1507 = vpop.f32.mrf.mxu0
  %1508 = vdwg.mxu0
  %v1509 = vxor.u32 %v1462, 2147483648
  %v1510 = vxor.u32 %v1464, 2147483648
  %v1511 = vmul.f32 %v1509, 1.442695
  %v1512 = vpow.pop %v1511
  %v1513 = vmul.f32 %v1510, 1.442695
  %v1514 = vpow.pop %v1513
  %v1515 = vadd.f32 %v1512, 1.0
  %v1516 = vadd.f32 %v1514, 1.0
  %v1517 = vrcp.pop %v1515
  %v1518 = vmul.f32 1.0, %v1517
  %v1519 = vrcp.pop %v1516
  %v1520 = vmul.f32 1.0, %v1519
  %v1521 = vmul.f32 %v1518, %v1505
  %v1522 = vadd.f32 %v1503, %v1521
  %v1523 = vtanh.pop %v1522
  %v1524 = vsub.f32 1.0, %v1520
  %v1525 = vmul.f32 %v1524, %v1523
  %v1526 = vmul.f32 %v1520, %v1316
  %v1527 = vadd.f32 %v1525, %v1526
  %vm1528 = vcmp.gt.s32.totalorder %v297, 2
  %v1529 = vsel %vm1528, 1, 0
  %1530 = vset.pattern.permute.xlu0 0
  %1531 = vperm.xlu0 %1530, %v1529
  %v1532 = vpop.permute.xlu0 %1531
  %vm1533 = vcmp.eq.s32.totalorder %v1532, 1
  %v1534 = vsel %vm1533, %v1424, %v1315
  %v1535 = vsel %vm1533, %v1527, %v1316
  %v1536 = vsel %vm1533, %v1321, %v1317
  %v1537 = vld [vmem:[#allocation2 + $0x48] sm:$0xff]
  %v1538 = vld [vmem:[#allocation2 + $0x50] sm:$0xff]
  %v1539 = vld [vmem:[#allocation2 + $0x58] sm:$0xff]
  %v1540 = vld [vmem:[%s0 + $0x18] sm:$0xff]
  %v1541 = vpack.c.bf16 %v1534, %v1534
  %1542 = vmatprep.subr.bf16.mxu0 %v475
  %1543 = vmatpush1.bf16.msra.mxu0 %v474
  %1544 = vmatprep.subr.bf16.mxu0 %v472
  %1545 = vmatpush1.bf16.msra.mxu0 %v471
  %1546 = vmatprep.subr.bf16.mxu0 %v469
  %1547 = vmatpush1.bf16.msra.mxu0 %v468
  %1548 = vmatprep.subr.bf16.mxu0 %v466
  %1549 = vmatpush1.bf16.msra.mxu0 %v465
  %1550 = vmatprep.subr.bf16.mxu0 %v463
  %1551 = vmatpush1.bf16.msra.mxu0 %v462
  %1552 = vmatprep.subr.bf16.mxu0 %v460
  %1553 = vmatpush1.bf16.msra.mxu0 %v459
  %1554 = vmatprep.subr.bf16.mxu0 %v457
  %1555 = vmatpush1.bf16.msra.mxu0 %v456
  %1556 = vmatprep.subr.bf16.mxu0 %v454
  %1557 = vmatpush1.bf16.msra.mxu0 %v453
  %1558 = vmatprep.subr.bf16.mxu0 0
  %1559 = vmatpush2.bf16.msra.mxu0 0
  %1560 = vmatprep.subr.bf16.mxu0 0
  %1561 = vmatpush2.bf16.msra.mxu0 0
  %1562 = vmatprep.subr.bf16.mxu0 0
  %1563 = vmatpush2.bf16.msra.mxu0 0
  %1564 = vmatprep.subr.bf16.mxu0 0
  %1565 = vmatpush2.bf16.msra.mxu0 0
  %1566 = vmatprep.subr.bf16.mxu0 0
  %1567 = vmatpush2.bf16.msra.mxu0 0
  %1568 = vmatprep.subr.bf16.mxu0 0
  %1569 = vmatpush2.bf16.msra.mxu0 0
  %1570 = vmatprep.subr.bf16.mxu0 0
  %1571 = vmatpush2.bf16.msra.mxu0 0
  %1572 = vmatprep.subr.bf16.mxu0 0
  %1573 = vmatpush2.bf16.msra.mxu0 0
  %1574 = vmatprep.mubr.bf16.mxu0 0
  %1575 = vmatmul.mubr.bf16.gmra.mxu0 %v1541
  %v1576 = vpop.f32.mrf.mxu0
  %v1577 = vadd.f32 %v303, %v1576
  %v1578 = vpop.f32.mrf.mxu0
  %v1579 = vadd.f32 %v307, %v1578
  %v1580 = vpop.f32.mrf.mxu0
  %v1581 = vpop.f32.mrf.mxu0
  %1582 = vdwg.mxu0
  %1583 = vmatprep.subr.bf16.mxu0 0
  %1584 = vmatpush1.bf16.msra.mxu0 %v476
  %1585 = vmatprep.subr.bf16.mxu0 0
  %1586 = vmatpush1.bf16.msra.mxu0 %v473
  %1587 = vmatprep.subr.bf16.mxu0 0
  %1588 = vmatpush1.bf16.msra.mxu0 %v470
  %1589 = vmatprep.subr.bf16.mxu0 0
  %1590 = vmatpush1.bf16.msra.mxu0 %v467
  %1591 = vmatprep.subr.bf16.mxu0 0
  %1592 = vmatpush1.bf16.msra.mxu0 %v464
  %1593 = vmatprep.subr.bf16.mxu0 0
  %1594 = vmatpush1.bf16.msra.mxu0 %v461
  %1595 = vmatprep.subr.bf16.mxu0 0
  %1596 = vmatpush1.bf16.msra.mxu0 %v458
  %1597 = vmatprep.subr.bf16.mxu0 0
  %1598 = vmatpush1.bf16.msra.mxu0 %v455
  %1599 = vmatprep.subr.bf16.mxu0 0
  %1600 = vmatpush2.bf16.msra.mxu0 0
  %1601 = vmatprep.subr.bf16.mxu0 0
  %1602 = vmatpush2.bf16.msra.mxu0 0
  %1603 = vmatprep.subr.bf16.mxu0 0
  %1604 = vmatpush2.bf16.msra.mxu0 0
  %1605 = vmatprep.subr.bf16.mxu0 0
  %1606 = vmatpush2.bf16.msra.mxu0 0
  %1607 = vmatprep.subr.bf16.mxu0 0
  %1608 = vmatpush2.bf16.msra.mxu0 0
  %1609 = vmatprep.subr.bf16.mxu0 0
  %1610 = vmatpush2.bf16.msra.mxu0 0
  %1611 = vmatprep.subr.bf16.mxu0 0
  %1612 = vmatpush2.bf16.msra.mxu0 0
  %1613 = vmatprep.subr.bf16.mxu0 0
  %1614 = vmatpush2.bf16.msra.mxu0 0
  %1615 = vmatprep.mubr.bf16.mxu0 0
  %1616 = vmatmul.mubr.bf16.gmra.mxu0 %v1541
  %v1617 = vpop.f32.mrf.mxu0
  %v1618 = vadd.f32 %v311, %v1617
  %v1619 = vpop.f32.mrf.mxu0
  %v1620 = vpop.f32.mrf.mxu0
  %v1621 = vpop.f32.mrf.mxu0
  %1622 = vdwg.mxu0
  %v1623 = vadd.f32 %v1537, %v1577
  %v1624 = vadd.f32 %v1538, %v1579
  %v1625 = vxor.u32 %v1623, 2147483648
  %v1626 = vxor.u32 %v1624, 2147483648
  %v1627 = vmul.f32 %v1625, 1.442695
  %v1628 = vpow.pop %v1627
  %v1629 = vmul.f32 %v1626, 1.442695
  %v1630 = vpow.pop %v1629
  %v1631 = vadd.f32 %v1628, 1.0
  %v1632 = vadd.f32 %v1630, 1.0
  %v1633 = vrcp.pop %v1631
  %v1634 = vmul.f32 1.0, %v1633
  %v1635 = vrcp.pop %v1632
  %v1636 = vmul.f32 1.0, %v1635
  %v1637 = vmul.f32 %v1634, %v1618
  %v1638 = vadd.f32 %v1539, %v1637
  %v1639 = vtanh.pop %v1638
  %v1640 = vsub.f32 1.0, %v1636
  %v1641 = vmul.f32 %v1640, %v1639
  %v1642 = vmul.f32 %v1636, %v1534
  %v1643 = vadd.f32 %v1641, %v1642
  %v1644 = vpack.c.bf16 %v1643, %v1643
  %v1645 = vpack.c.bf16 %v1535, %v1535
  %1646 = vmatprep.subr.bf16.mxu0 %v890
  %1647 = vmatpush1.bf16.msra.mxu0 %v889
  %1648 = vmatprep.subr.bf16.mxu0 %v886
  %1649 = vmatpush1.bf16.msra.mxu0 %v885
  %1650 = vmatprep.subr.bf16.mxu0 %v882
  %1651 = vmatpush1.bf16.msra.mxu0 %v881
  %1652 = vmatprep.subr.bf16.mxu0 %v878
  %1653 = vmatpush1.bf16.msra.mxu0 %v877
  %1654 = vmatprep.subr.bf16.mxu0 %v874
  %1655 = vmatpush1.bf16.msra.mxu0 %v873
  %1656 = vmatprep.subr.bf16.mxu0 %v870
  %1657 = vmatpush1.bf16.msra.mxu0 %v869
  %1658 = vmatprep.subr.bf16.mxu0 %v866
  %1659 = vmatpush1.bf16.msra.mxu0 %v865
  %1660 = vmatprep.subr.bf16.mxu0 %v862
  %1661 = vmatpush1.bf16.msra.mxu0 %v861
  %1662 = vmatprep.subr.bf16.mxu0 %v922
  %1663 = vmatpush2.bf16.msra.mxu0 %v921
  %1664 = vmatprep.subr.bf16.mxu0 %v918
  %1665 = vmatpush2.bf16.msra.mxu0 %v917
  %1666 = vmatprep.subr.bf16.mxu0 %v914
  %1667 = vmatpush2.bf16.msra.mxu0 %v913
  %1668 = vmatprep.subr.bf16.mxu0 %v910
  %1669 = vmatpush2.bf16.msra.mxu0 %v909
  %1670 = vmatprep.subr.bf16.mxu0 %v906
  %1671 = vmatpush2.bf16.msra.mxu0 %v905
  %1672 = vmatprep.subr.bf16.mxu0 %v902
  %1673 = vmatpush2.bf16.msra.mxu0 %v901
  %1674 = vmatprep.subr.bf16.mxu0 %v898
  %1675 = vmatpush2.bf16.msra.mxu0 %v897
  %1676 = vmatprep.subr.bf16.mxu0 %v894
  %1677 = vmatpush2.bf16.msra.mxu0 %v893
  %1678 = vmatprep.mubr.bf16.mxu0 %v1645
  %1679 = vmatmul.mubr.bf16.gmra.mxu0 %v1644
  %v1680 = vpop.f32.mrf.mxu0
  %v1681 = vadd.f32 %v320, %v1680
  %v1682 = vpop.f32.mrf.mxu0
  %v1683 = vadd.f32 %v324, %v1682
  %v1684 = vpop.f32.mrf.mxu0
  %v1685 = vpop.f32.mrf.mxu0
  %1686 = vdwg.mxu0
  %1687 = vmatprep.subr.bf16.mxu0 %v892
  %1688 = vmatpush1.bf16.msra.mxu0 %v891
  %1689 = vmatprep.subr.bf16.mxu0 %v888
  %1690 = vmatpush1.bf16.msra.mxu0 %v887
  %1691 = vmatprep.subr.bf16.mxu0 %v884
  %1692 = vmatpush1.bf16.msra.mxu0 %v883
  %1693 = vmatprep.subr.bf16.mxu0 %v880
  %1694 = vmatpush1.bf16.msra.mxu0 %v879
  %1695 = vmatprep.subr.bf16.mxu0 %v876
  %1696 = vmatpush1.bf16.msra.mxu0 %v875
  %1697 = vmatprep.subr.bf16.mxu0 %v872
  %1698 = vmatpush1.bf16.msra.mxu0 %v871
  %1699 = vmatprep.subr.bf16.mxu0 %v868
  %1700 = vmatpush1.bf16.msra.mxu0 %v867
  %1701 = vmatprep.subr.bf16.mxu0 %v864
  %1702 = vmatpush1.bf16.msra.mxu0 %v863
  %1703 = vmatprep.subr.bf16.mxu0 %v924
  %1704 = vmatpush2.bf16.msra.mxu0 %v923
  %1705 = vmatprep.subr.bf16.mxu0 %v920
  %1706 = vmatpush2.bf16.msra.mxu0 %v919
  %1707 = vmatprep.subr.bf16.mxu0 %v916
  %1708 = vmatpush2.bf16.msra.mxu0 %v915
  %1709 = vmatprep.subr.bf16.mxu0 %v912
  %1710 = vmatpush2.bf16.msra.mxu0 %v911
  %1711 = vmatprep.subr.bf16.mxu0 %v908
  %1712 = vmatpush2.bf16.msra.mxu0 %v907
  %1713 = vmatprep.subr.bf16.mxu0 %v904
  %1714 = vmatpush2.bf16.msra.mxu0 %v903
  %1715 = vmatprep.subr.bf16.mxu0 %v900
  %1716 = vmatpush2.bf16.msra.mxu0 %v899
  %1717 = vmatprep.subr.bf16.mxu0 %v896
  %1718 = vmatpush2.bf16.msra.mxu0 %v895
  %1719 = vmatprep.mubr.bf16.mxu0 %v1645
  %1720 = vmatmul.mubr.bf16.gmra.mxu0 %v1644
  %v1721 = vpop.f32.mrf.mxu0
  %v1722 = vadd.f32 %v328, %v1721
  %v1723 = vpop.f32.mrf.mxu0
  %v1724 = vadd.f32 %v332, %v1723
  %v1725 = vpop.f32.mrf.mxu0
  %v1726 = vpop.f32.mrf.mxu0
  %1727 = vdwg.mxu0
  %v1728 = vxor.u32 %v1681, 2147483648
  %v1729 = vxor.u32 %v1683, 2147483648
  %v1730 = vmul.f32 %v1728, 1.442695
  %v1731 = vpow.pop %v1730
  %v1732 = vmul.f32 %v1729, 1.442695
  %v1733 = vpow.pop %v1732
  %v1734 = vadd.f32 %v1731, 1.0
  %v1735 = vadd.f32 %v1733, 1.0
  %v1736 = vrcp.pop %v1734
  %v1737 = vmul.f32 1.0, %v1736
  %v1738 = vrcp.pop %v1735
  %v1739 = vmul.f32 1.0, %v1738
  %v1740 = vmul.f32 %v1737, %v1724
  %v1741 = vadd.f32 %v1722, %v1740
  %v1742 = vtanh.pop %v1741
  %v1743 = vsub.f32 1.0, %v1739
  %v1744 = vmul.f32 %v1743, %v1742
  %v1745 = vmul.f32 %v1739, %v1535
  %v1746 = vadd.f32 %v1744, %v1745
  %vm1747 = vcmp.gt.s32.totalorder %v297, 3
  %v1748 = vsel %vm1747, 1, 0
  %1749 = vset.pattern.permute.xlu0 0
  %1750 = vperm.xlu0 %1749, %v1748
  %v1751 = vpop.permute.xlu0 %1750
  %vm1752 = vcmp.eq.s32.totalorder %v1751, 1
  %v1753 = vsel %vm1752, %v1643, %v1534
  %v1754 = vsel %vm1752, %v1746, %v1535
  %v1755 = vsel %vm1752, %v1540, %v1536
  %v1756 = vld [vmem:[#allocation2 + $0x60] sm:$0xff]
  %v1757 = vld [vmem:[#allocation2 + $0x68] sm:$0xff]
  %v1758 = vld [vmem:[#allocation2 + $0x70] sm:$0xff]
  %v1759 = vld [vmem:[%s0 + $0x20] sm:$0xff]
  %v1760 = vpack.c.bf16 %v1753, %v1753
  %1761 = vmatprep.subr.bf16.mxu0 %v475
  %1762 = vmatpush1.bf16.msra.mxu0 %v474
  %1763 = vmatprep.subr.bf16.mxu0 %v472
  %1764 = vmatpush1.bf16.msra.mxu0 %v471
  %1765 = vmatprep.subr.bf16.mxu0 %v469
  %1766 = vmatpush1.bf16.msra.mxu0 %v468
  %1767 = vmatprep.subr.bf16.mxu0 %v466
  %1768 = vmatpush1.bf16.msra.mxu0 %v465
  %1769 = vmatprep.subr.bf16.mxu0 %v463
  %1770 = vmatpush1.bf16.msra.mxu0 %v462
  %1771 = vmatprep.subr.bf16.mxu0 %v460
  %1772 = vmatpush1.bf16.msra.mxu0 %v459
  %1773 = vmatprep.subr.bf16.mxu0 %v457
  %1774 = vmatpush1.bf16.msra.mxu0 %v456
  %1775 = vmatprep.subr.bf16.mxu0 %v454
  %1776 = vmatpush1.bf16.msra.mxu0 %v453
  %1777 = vmatprep.subr.bf16.mxu0 0
  %1778 = vmatpush2.bf16.msra.mxu0 0
  %1779 = vmatprep.subr.bf16.mxu0 0
  %1780 = vmatpush2.bf16.msra.mxu0 0
  %1781 = vmatprep.subr.bf16.mxu0 0
  %1782 = vmatpush2.bf16.msra.mxu0 0
  %1783 = vmatprep.subr.bf16.mxu0 0
  %1784 = vmatpush2.bf16.msra.mxu0 0
  %1785 = vmatprep.subr.bf16.mxu0 0
  %1786 = vmatpush2.bf16.msra.mxu0 0
  %1787 = vmatprep.subr.bf16.mxu0 0
  %1788 = vmatpush2.bf16.msra.mxu0 0
  %1789 = vmatprep.subr.bf16.mxu0 0
  %1790 = vmatpush2.bf16.msra.mxu0 0
  %1791 = vmatprep.subr.bf16.mxu0 0
  %1792 = vmatpush2.bf16.msra.mxu0 0
  %1793 = vmatprep.mubr.bf16.mxu0 0
  %1794 = vmatmul.mubr.bf16.gmra.mxu0 %v1760
  %v1795 = vpop.f32.mrf.mxu0
  %v1796 = vadd.f32 %v303, %v1795
  %v1797 = vpop.f32.mrf.mxu0
  %v1798 = vadd.f32 %v307, %v1797
  %v1799 = vpop.f32.mrf.mxu0
  %v1800 = vpop.f32.mrf.mxu0
  %1801 = vdwg.mxu0
  %1802 = vmatprep.subr.bf16.mxu0 0
  %1803 = vmatpush1.bf16.msra.mxu0 %v476
  %1804 = vmatprep.subr.bf16.mxu0 0
  %1805 = vmatpush1.bf16.msra.mxu0 %v473
  %1806 = vmatprep.subr.bf16.mxu0 0
  %1807 = vmatpush1.bf16.msra.mxu0 %v470
  %1808 = vmatprep.subr.bf16.mxu0 0
  %1809 = vmatpush1.bf16.msra.mxu0 %v467
  %1810 = vmatprep.subr.bf16.mxu0 0
  %1811 = vmatpush1.bf16.msra.mxu0 %v464
  %1812 = vmatprep.subr.bf16.mxu0 0
  %1813 = vmatpush1.bf16.msra.mxu0 %v461
  %1814 = vmatprep.subr.bf16.mxu0 0
  %1815 = vmatpush1.bf16.msra.mxu0 %v458
  %1816 = vmatprep.subr.bf16.mxu0 0
  %1817 = vmatpush1.bf16.msra.mxu0 %v455
  %1818 = vmatprep.subr.bf16.mxu0 0
  %1819 = vmatpush2.bf16.msra.mxu0 0
  %1820 = vmatprep.subr.bf16.mxu0 0
  %1821 = vmatpush2.bf16.msra.mxu0 0
  %1822 = vmatprep.subr.bf16.mxu0 0
  %1823 = vmatpush2.bf16.msra.mxu0 0
  %1824 = vmatprep.subr.bf16.mxu0 0
  %1825 = vmatpush2.bf16.msra.mxu0 0
  %1826 = vmatprep.subr.bf16.mxu0 0
  %1827 = vmatpush2.bf16.msra.mxu0 0
  %1828 = vmatprep.subr.bf16.mxu0 0
  %1829 = vmatpush2.bf16.msra.mxu0 0
  %1830 = vmatprep.subr.bf16.mxu0 0
  %1831 = vmatpush2.bf16.msra.mxu0 0
  %1832 = vmatprep.subr.bf16.mxu0 0
  %1833 = vmatpush2.bf16.msra.mxu0 0
  %1834 = vmatprep.mubr.bf16.mxu0 0
  %1835 = vmatmul.mubr.bf16.gmra.mxu0 %v1760
  %v1836 = vpop.f32.mrf.mxu0
  %v1837 = vadd.f32 %v311, %v1836
  %v1838 = vpop.f32.mrf.mxu0
  %v1839 = vpop.f32.mrf.mxu0
  %v1840 = vpop.f32.mrf.mxu0
  %1841 = vdwg.mxu0
  %v1842 = vadd.f32 %v1756, %v1796
  %v1843 = vadd.f32 %v1757, %v1798
  %v1844 = vxor.u32 %v1842, 2147483648
  %v1845 = vxor.u32 %v1843, 2147483648
  %v1846 = vmul.f32 %v1844, 1.442695
  %v1847 = vpow.pop %v1846
  %v1848 = vmul.f32 %v1845, 1.442695
  %v1849 = vpow.pop %v1848
  %v1850 = vadd.f32 %v1847, 1.0
  %v1851 = vadd.f32 %v1849, 1.0
  %v1852 = vrcp.pop %v1850
  %v1853 = vmul.f32 1.0, %v1852
  %v1854 = vrcp.pop %v1851
  %v1855 = vmul.f32 1.0, %v1854
  %v1856 = vmul.f32 %v1853, %v1837
  %v1857 = vadd.f32 %v1758, %v1856
  %v1858 = vtanh.pop %v1857
  %v1859 = vsub.f32 1.0, %v1855
  %v1860 = vmul.f32 %v1859, %v1858
  %v1861 = vmul.f32 %v1855, %v1753
  %v1862 = vadd.f32 %v1860, %v1861
  %v1863 = vpack.c.bf16 %v1862, %v1862
  %v1864 = vpack.c.bf16 %v1754, %v1754
  %1865 = vmatprep.subr.bf16.mxu0 %v890
  %1866 = vmatpush1.bf16.msra.mxu0 %v889
  %1867 = vmatprep.subr.bf16.mxu0 %v886
  %1868 = vmatpush1.bf16.msra.mxu0 %v885
  %1869 = vmatprep.subr.bf16.mxu0 %v882
  %1870 = vmatpush1.bf16.msra.mxu0 %v881
  %1871 = vmatprep.subr.bf16.mxu0 %v878
  %1872 = vmatpush1.bf16.msra.mxu0 %v877
  %1873 = vmatprep.subr.bf16.mxu0 %v874
  %1874 = vmatpush1.bf16.msra.mxu0 %v873
  %1875 = vmatprep.subr.bf16.mxu0 %v870
  %1876 = vmatpush1.bf16.msra.mxu0 %v869
  %1877 = vmatprep.subr.bf16.mxu0 %v866
  %1878 = vmatpush1.bf16.msra.mxu0 %v865
  %1879 = vmatprep.subr.bf16.mxu0 %v862
  %1880 = vmatpush1.bf16.msra.mxu0 %v861
  %1881 = vmatprep.subr.bf16.mxu0 %v922
  %1882 = vmatpush2.bf16.msra.mxu0 %v921
  %1883 = vmatprep.subr.bf16.mxu0 %v918
  %1884 = vmatpush2.bf16.msra.mxu0 %v917
  %1885 = vmatprep.subr.bf16.mxu0 %v914
  %1886 = vmatpush2.bf16.msra.mxu0 %v913
  %1887 = vmatprep.subr.bf16.mxu0 %v910
  %1888 = vmatpush2.bf16.msra.mxu0 %v909
  %1889 = vmatprep.subr.bf16.mxu0 %v906
  %1890 = vmatpush2.bf16.msra.mxu0 %v905
  %1891 = vmatprep.subr.bf16.mxu0 %v902
  %1892 = vmatpush2.bf16.msra.mxu0 %v901
  %1893 = vmatprep.subr.bf16.mxu0 %v898
  %1894 = vmatpush2.bf16.msra.mxu0 %v897
  %1895 = vmatprep.subr.bf16.mxu0 %v894
  %1896 = vmatpush2.bf16.msra.mxu0 %v893
  %1897 = vmatprep.mubr.bf16.mxu0 %v1864
  %1898 = vmatmul.mubr.bf16.gmra.mxu0 %v1863
  %v1899 = vpop.f32.mrf.mxu0
  %v1900 = vadd.f32 %v320, %v1899
  %v1901 = vpop.f32.mrf.mxu0
  %v1902 = vadd.f32 %v324, %v1901
  %v1903 = vpop.f32.mrf.mxu0
  %v1904 = vpop.f32.mrf.mxu0
  %1905 = vdwg.mxu0
  %1906 = vmatprep.subr.bf16.mxu0 %v892
  %1907 = vmatpush1.bf16.msra.mxu0 %v891
  %1908 = vmatprep.subr.bf16.mxu0 %v888
  %1909 = vmatpush1.bf16.msra.mxu0 %v887
  %1910 = vmatprep.subr.bf16.mxu0 %v884
  %1911 = vmatpush1.bf16.msra.mxu0 %v883
  %1912 = vmatprep.subr.bf16.mxu0 %v880
  %1913 = vmatpush1.bf16.msra.mxu0 %v879
  %1914 = vmatprep.subr.bf16.mxu0 %v876
  %1915 = vmatpush1.bf16.msra.mxu0 %v875
  %1916 = vmatprep.subr.bf16.mxu0 %v872
  %1917 = vmatpush1.bf16.msra.mxu0 %v871
  %1918 = vmatprep.subr.bf16.mxu0 %v868
  %1919 = vmatpush1.bf16.msra.mxu0 %v867
  %1920 = vmatprep.subr.bf16.mxu0 %v864
  %1921 = vmatpush1.bf16.msra.mxu0 %v863
  %1922 = vmatprep.subr.bf16.mxu0 %v924
  %1923 = vmatpush2.bf16.msra.mxu0 %v923
  %1924 = vmatprep.subr.bf16.mxu0 %v920
  %1925 = vmatpush2.bf16.msra.mxu0 %v919
  %1926 = vmatprep.subr.bf16.mxu0 %v916
  %1927 = vmatpush2.bf16.msra.mxu0 %v915
  %1928 = vmatprep.subr.bf16.mxu0 %v912
  %1929 = vmatpush2.bf16.msra.mxu0 %v911
  %1930 = vmatprep.subr.bf16.mxu0 %v908
  %1931 = vmatpush2.bf16.msra.mxu0 %v907
  %1932 = vmatprep.subr.bf16.mxu0 %v904
  %1933 = vmatpush2.bf16.msra.mxu0 %v903
  %1934 = vmatprep.subr.bf16.mxu0 %v900
  %1935 = vmatpush2.bf16.msra.mxu0 %v899
  %1936 = vmatprep.subr.bf16.mxu0 %v896
  %1937 = vmatpush2.bf16.msra.mxu0 %v895
  %1938 = vmatprep.mubr.bf16.mxu0 %v1864
  %1939 = vmatmul.mubr.bf16.gmra.mxu0 %v1863
  %v1940 = vpop.f32.mrf.mxu0
  %v1941 = vadd.f32 %v328, %v1940
  %v1942 = vpop.f32.mrf.mxu0
  %v1943 = vadd.f32 %v332, %v1942
  %v1944 = vpop.f32.mrf.mxu0
  %v1945 = vpop.f32.mrf.mxu0
  %1946 = vdwg.mxu0
  %v1947 = vxor.u32 %v1900, 2147483648
  %v1948 = vxor.u32 %v1902, 2147483648
  %v1949 = vmul.f32 %v1947, 1.442695
  %v1950 = vpow.pop %v1949
  %v1951 = vmul.f32 %v1948, 1.442695
  %v1952 = vpow.pop %v1951
  %v1953 = vadd.f32 %v1950, 1.0
  %v1954 = vadd.f32 %v1952, 1.0
  %v1955 = vrcp.pop %v1953
  %v1956 = vmul.f32 1.0, %v1955
  %v1957 = vrcp.pop %v1954
  %v1958 = vmul.f32 1.0, %v1957
  %v1959 = vmul.f32 %v1956, %v1943
  %v1960 = vadd.f32 %v1941, %v1959
  %v1961 = vtanh.pop %v1960
  %v1962 = vsub.f32 1.0, %v1958
  %v1963 = vmul.f32 %v1962, %v1961
  %v1964 = vmul.f32 %v1958, %v1754
  %v1965 = vadd.f32 %v1963, %v1964
  %vm1966 = vcmp.gt.s32.totalorder %v297, 4
  %v1967 = vsel %vm1966, 1, 0
  %1968 = vset.pattern.permute.xlu0 0
  %1969 = vperm.xlu0 %1968, %v1967
  %v1970 = vpop.permute.xlu0 %1969
  %vm1971 = vcmp.eq.s32.totalorder %v1970, 1
  %v1972 = vsel %vm1971, %v1862, %v1753
  %v1973 = vsel %vm1971, %v1965, %v1754
  %v1974 = vsel %vm1971, %v1759, %v1755
  %v1975 = vld [vmem:[#allocation2 + $0x78] sm:$0xff]
  %v1976 = vld [vmem:[#allocation2 + $0x80] sm:$0xff]
  %v1977 = vld [vmem:[#allocation2 + $0x88] sm:$0xff]
  %v1978 = vld [vmem:[%s0 + $0x28] sm:$0xff]
  %v1979 = vpack.c.bf16 %v1972, %v1972
  %1980 = vmatprep.subr.bf16.mxu0 %v475
  %1981 = vmatpush1.bf16.msra.mxu0 %v474
  %1982 = vmatprep.subr.bf16.mxu0 %v472
  %1983 = vmatpush1.bf16.msra.mxu0 %v471
  %1984 = vmatprep.subr.bf16.mxu0 %v469
  %1985 = vmatpush1.bf16.msra.mxu0 %v468
  %1986 = vmatprep.subr.bf16.mxu0 %v466
  %1987 = vmatpush1.bf16.msra.mxu0 %v465
  %1988 = vmatprep.subr.bf16.mxu0 %v463
  %1989 = vmatpush1.bf16.msra.mxu0 %v462
  %1990 = vmatprep.subr.bf16.mxu0 %v460
  %1991 = vmatpush1.bf16.msra.mxu0 %v459
  %1992 = vmatprep.subr.bf16.mxu0 %v457
  %1993 = vmatpush1.bf16.msra.mxu0 %v456
  %1994 = vmatprep.subr.bf16.mxu0 %v454
  %1995 = vmatpush1.bf16.msra.mxu0 %v453
  %1996 = vmatprep.subr.bf16.mxu0 0
  %1997 = vmatpush2.bf16.msra.mxu0 0
  %1998 = vmatprep.subr.bf16.mxu0 0
  %1999 = vmatpush2.bf16.msra.mxu0 0
  %2000 = vmatprep.subr.bf16.mxu0 0
  %2001 = vmatpush2.bf16.msra.mxu0 0
  %2002 = vmatprep.subr.bf16.mxu0 0
  %2003 = vmatpush2.bf16.msra.mxu0 0
  %2004 = vmatprep.subr.bf16.mxu0 0
  %2005 = vmatpush2.bf16.msra.mxu0 0
  %2006 = vmatprep.subr.bf16.mxu0 0
  %2007 = vmatpush2.bf16.msra.mxu0 0
  %2008 = vmatprep.subr.bf16.mxu0 0
  %2009 = vmatpush2.bf16.msra.mxu0 0
  %2010 = vmatprep.subr.bf16.mxu0 0
  %2011 = vmatpush2.bf16.msra.mxu0 0
  %2012 = vmatprep.mubr.bf16.mxu0 0
  %2013 = vmatmul.mubr.bf16.gmra.mxu0 %v1979
  %v2014 = vpop.f32.mrf.mxu0
  %v2015 = vadd.f32 %v303, %v2014
  %v2016 = vpop.f32.mrf.mxu0
  %v2017 = vadd.f32 %v307, %v2016
  %v2018 = vpop.f32.mrf.mxu0
  %v2019 = vpop.f32.mrf.mxu0
  %2020 = vdwg.mxu0
  %2021 = vmatprep.subr.bf16.mxu0 0
  %2022 = vmatpush1.bf16.msra.mxu0 %v476
  %2023 = vmatprep.subr.bf16.mxu0 0
  %2024 = vmatpush1.bf16.msra.mxu0 %v473
  %2025 = vmatprep.subr.bf16.mxu0 0
  %2026 = vmatpush1.bf16.msra.mxu0 %v470
  %2027 = vmatprep.subr.bf16.mxu0 0
  %2028 = vmatpush1.bf16.msra.mxu0 %v467
  %2029 = vmatprep.subr.bf16.mxu0 0
  %2030 = vmatpush1.bf16.msra.mxu0 %v464
  %2031 = vmatprep.subr.bf16.mxu0 0
  %2032 = vmatpush1.bf16.msra.mxu0 %v461
  %2033 = vmatprep.subr.bf16.mxu0 0
  %2034 = vmatpush1.bf16.msra.mxu0 %v458
  %2035 = vmatprep.subr.bf16.mxu0 0
  %2036 = vmatpush1.bf16.msra.mxu0 %v455
  %2037 = vmatprep.subr.bf16.mxu0 0
  %2038 = vmatpush2.bf16.msra.mxu0 0
  %2039 = vmatprep.subr.bf16.mxu0 0
  %2040 = vmatpush2.bf16.msra.mxu0 0
  %2041 = vmatprep.subr.bf16.mxu0 0
  %2042 = vmatpush2.bf16.msra.mxu0 0
  %2043 = vmatprep.subr.bf16.mxu0 0
  %2044 = vmatpush2.bf16.msra.mxu0 0
  %2045 = vmatprep.subr.bf16.mxu0 0
  %2046 = vmatpush2.bf16.msra.mxu0 0
  %2047 = vmatprep.subr.bf16.mxu0 0
  %2048 = vmatpush2.bf16.msra.mxu0 0
  %2049 = vmatprep.subr.bf16.mxu0 0
  %2050 = vmatpush2.bf16.msra.mxu0 0
  %2051 = vmatprep.subr.bf16.mxu0 0
  %2052 = vmatpush2.bf16.msra.mxu0 0
  %2053 = vmatprep.mubr.bf16.mxu0 0
  %2054 = vmatmul.mubr.bf16.gmra.mxu0 %v1979
  %v2055 = vpop.f32.mrf.mxu0
  %v2056 = vadd.f32 %v311, %v2055
  %v2057 = vpop.f32.mrf.mxu0
  %v2058 = vpop.f32.mrf.mxu0
  %v2059 = vpop.f32.mrf.mxu0
  %2060 = vdwg.mxu0
  %v2061 = vadd.f32 %v1975, %v2015
  %v2062 = vadd.f32 %v1976, %v2017
  %v2063 = vxor.u32 %v2061, 2147483648
  %v2064 = vxor.u32 %v2062, 2147483648
  %v2065 = vmul.f32 %v2063, 1.442695
  %v2066 = vpow.pop %v2065
  %v2067 = vmul.f32 %v2064, 1.442695
  %v2068 = vpow.pop %v2067
  %v2069 = vadd.f32 %v2066, 1.0
  %v2070 = vadd.f32 %v2068, 1.0
  %v2071 = vrcp.pop %v2069
  %v2072 = vmul.f32 1.0, %v2071
  %v2073 = vrcp.pop %v2070
  %v2074 = vmul.f32 1.0, %v2073
  %v2075 = vmul.f32 %v2072, %v2056
  %v2076 = vadd.f32 %v1977, %v2075
  %v2077 = vtanh.pop %v2076
  %v2078 = vsub.f32 1.0, %v2074
  %v2079 = vmul.f32 %v2078, %v2077
  %v2080 = vmul.f32 %v2074, %v1972
  %v2081 = vadd.f32 %v2079, %v2080
  %v2082 = vpack.c.bf16 %v2081, %v2081
  %v2083 = vpack.c.bf16 %v1973, %v1973
  %2084 = vmatprep.subr.bf16.mxu0 %v890
  %2085 = vmatpush1.bf16.msra.mxu0 %v889
  %2086 = vmatprep.subr.bf16.mxu0 %v886
  %2087 = vmatpush1.bf16.msra.mxu0 %v885
  %2088 = vmatprep.subr.bf16.mxu0 %v882
  %2089 = vmatpush1.bf16.msra.mxu0 %v881
  %2090 = vmatprep.subr.bf16.mxu0 %v878
  %2091 = vmatpush1.bf16.msra.mxu0 %v877
  %2092 = vmatprep.subr.bf16.mxu0 %v874
  %2093 = vmatpush1.bf16.msra.mxu0 %v873
  %2094 = vmatprep.subr.bf16.mxu0 %v870
  %2095 = vmatpush1.bf16.msra.mxu0 %v869
  %2096 = vmatprep.subr.bf16.mxu0 %v866
  %2097 = vmatpush1.bf16.msra.mxu0 %v865
  %2098 = vmatprep.subr.bf16.mxu0 %v862
  %2099 = vmatpush1.bf16.msra.mxu0 %v861
  %2100 = vmatprep.subr.bf16.mxu0 %v922
  %2101 = vmatpush2.bf16.msra.mxu0 %v921
  %2102 = vmatprep.subr.bf16.mxu0 %v918
  %2103 = vmatpush2.bf16.msra.mxu0 %v917
  %2104 = vmatprep.subr.bf16.mxu0 %v914
  %2105 = vmatpush2.bf16.msra.mxu0 %v913
  %2106 = vmatprep.subr.bf16.mxu0 %v910
  %2107 = vmatpush2.bf16.msra.mxu0 %v909
  %2108 = vmatprep.subr.bf16.mxu0 %v906
  %2109 = vmatpush2.bf16.msra.mxu0 %v905
  %2110 = vmatprep.subr.bf16.mxu0 %v902
  %2111 = vmatpush2.bf16.msra.mxu0 %v901
  %2112 = vmatprep.subr.bf16.mxu0 %v898
  %2113 = vmatpush2.bf16.msra.mxu0 %v897
  %2114 = vmatprep.subr.bf16.mxu0 %v894
  %2115 = vmatpush2.bf16.msra.mxu0 %v893
  %2116 = vmatprep.mubr.bf16.mxu0 %v2083
  %2117 = vmatmul.mubr.bf16.gmra.mxu0 %v2082
  %v2118 = vpop.f32.mrf.mxu0
  %v2119 = vadd.f32 %v320, %v2118
  %v2120 = vpop.f32.mrf.mxu0
  %v2121 = vadd.f32 %v324, %v2120
  %v2122 = vpop.f32.mrf.mxu0
  %v2123 = vpop.f32.mrf.mxu0
  %2124 = vdwg.mxu0
  %2125 = vmatprep.subr.bf16.mxu0 %v892
  %2126 = vmatpush1.bf16.msra.mxu0 %v891
  %2127 = vmatprep.subr.bf16.mxu0 %v888
  %2128 = vmatpush1.bf16.msra.mxu0 %v887
  %2129 = vmatprep.subr.bf16.mxu0 %v884
  %2130 = vmatpush1.bf16.msra.mxu0 %v883
  %2131 = vmatprep.subr.bf16.mxu0 %v880
  %2132 = vmatpush1.bf16.msra.mxu0 %v879
  %2133 = vmatprep.subr.bf16.mxu0 %v876
  %2134 = vmatpush1.bf16.msra.mxu0 %v875
  %2135 = vmatprep.subr.bf16.mxu0 %v872
  %2136 = vmatpush1.bf16.msra.mxu0 %v871
  %2137 = vmatprep.subr.bf16.mxu0 %v868
  %2138 = vmatpush1.bf16.msra.mxu0 %v867
  %2139 = vmatprep.subr.bf16.mxu0 %v864
  %2140 = vmatpush1.bf16.msra.mxu0 %v863
  %2141 = vmatprep.subr.bf16.mxu0 %v924
  %2142 = vmatpush2.bf16.msra.mxu0 %v923
  %2143 = vmatprep.subr.bf16.mxu0 %v920
  %2144 = vmatpush2.bf16.msra.mxu0 %v919
  %2145 = vmatprep.subr.bf16.mxu0 %v916
  %2146 = vmatpush2.bf16.msra.mxu0 %v915
  %2147 = vmatprep.subr.bf16.mxu0 %v912
  %2148 = vmatpush2.bf16.msra.mxu0 %v911
  %2149 = vmatprep.subr.bf16.mxu0 %v908
  %2150 = vmatpush2.bf16.msra.mxu0 %v907
  %2151 = vmatprep.subr.bf16.mxu0 %v904
  %2152 = vmatpush2.bf16.msra.mxu0 %v903
  %2153 = vmatprep.subr.bf16.mxu0 %v900
  %2154 = vmatpush2.bf16.msra.mxu0 %v899
  %2155 = vmatprep.subr.bf16.mxu0 %v896
  %2156 = vmatpush2.bf16.msra.mxu0 %v895
  %2157 = vmatprep.mubr.bf16.mxu0 %v2083
  %2158 = vmatmul.mubr.bf16.gmra.mxu0 %v2082
  %v2159 = vpop.f32.mrf.mxu0
  %v2160 = vadd.f32 %v328, %v2159
  %v2161 = vpop.f32.mrf.mxu0
  %v2162 = vadd.f32 %v332, %v2161
  %v2163 = vpop.f32.mrf.mxu0
  %v2164 = vpop.f32.mrf.mxu0
  %2165 = vdwg.mxu0
  %v2166 = vxor.u32 %v2119, 2147483648
  %v2167 = vxor.u32 %v2121, 2147483648
  %v2168 = vmul.f32 %v2166, 1.442695
  %v2169 = vpow.pop %v2168
  %v2170 = vmul.f32 %v2167, 1.442695
  %v2171 = vpow.pop %v2170
  %v2172 = vadd.f32 %v2169, 1.0
  %v2173 = vadd.f32 %v2171, 1.0
  %v2174 = vrcp.pop %v2172
  %v2175 = vmul.f32 1.0, %v2174
  %v2176 = vrcp.pop %v2173
  %v2177 = vmul.f32 1.0, %v2176
  %v2178 = vmul.f32 %v2175, %v2162
  %v2179 = vadd.f32 %v2160, %v2178
  %v2180 = vtanh.pop %v2179
  %v2181 = vsub.f32 1.0, %v2177
  %v2182 = vmul.f32 %v2181, %v2180
  %v2183 = vmul.f32 %v2177, %v1973
  %v2184 = vadd.f32 %v2182, %v2183
  %vm2185 = vcmp.gt.s32.totalorder %v297, 5
  %v2186 = vsel %vm2185, 1, 0
  %2187 = vset.pattern.permute.xlu0 0
  %2188 = vperm.xlu0 %2187, %v2186
  %v2189 = vpop.permute.xlu0 %2188
  %vm2190 = vcmp.eq.s32.totalorder %v2189, 1
  %v2191 = vsel %vm2190, %v2081, %v1972
  %v2192 = vsel %vm2190, %v2184, %v1973
  %v2193 = vsel %vm2190, %v1978, %v1974
  %v2194 = vld [vmem:[#allocation2 + $0x90] sm:$0xff]
  %v2195 = vld [vmem:[#allocation2 + $0x98] sm:$0xff]
  %v2196 = vld [vmem:[#allocation2 + $0xa0] sm:$0xff]
  %v2197 = vld [vmem:[%s0 + $0x30] sm:$0xff]
  %v2198 = vpack.c.bf16 %v2191, %v2191
  %2199 = vmatprep.subr.bf16.mxu0 %v475
  %2200 = vmatpush1.bf16.msra.mxu0 %v474
  %2201 = vmatprep.subr.bf16.mxu0 %v472
  %2202 = vmatpush1.bf16.msra.mxu0 %v471
  %2203 = vmatprep.subr.bf16.mxu0 %v469
  %2204 = vmatpush1.bf16.msra.mxu0 %v468
  %2205 = vmatprep.subr.bf16.mxu0 %v466
  %2206 = vmatpush1.bf16.msra.mxu0 %v465
  %2207 = vmatprep.subr.bf16.mxu0 %v463
  %2208 = vmatpush1.bf16.msra.mxu0 %v462
  %2209 = vmatprep.subr.bf16.mxu0 %v460
  %2210 = vmatpush1.bf16.msra.mxu0 %v459
  %2211 = vmatprep.subr.bf16.mxu0 %v457
  %2212 = vmatpush1.bf16.msra.mxu0 %v456
  %2213 = vmatprep.subr.bf16.mxu0 %v454
  %2214 = vmatpush1.bf16.msra.mxu0 %v453
  %2215 = vmatprep.subr.bf16.mxu0 0
  %2216 = vmatpush2.bf16.msra.mxu0 0
  %2217 = vmatprep.subr.bf16.mxu0 0
  %2218 = vmatpush2.bf16.msra.mxu0 0
  %2219 = vmatprep.subr.bf16.mxu0 0
  %2220 = vmatpush2.bf16.msra.mxu0 0
  %2221 = vmatprep.subr.bf16.mxu0 0
  %2222 = vmatpush2.bf16.msra.mxu0 0
  %2223 = vmatprep.subr.bf16.mxu0 0
  %2224 = vmatpush2.bf16.msra.mxu0 0
  %2225 = vmatprep.subr.bf16.mxu0 0
  %2226 = vmatpush2.bf16.msra.mxu0 0
  %2227 = vmatprep.subr.bf16.mxu0 0
  %2228 = vmatpush2.bf16.msra.mxu0 0
  %2229 = vmatprep.subr.bf16.mxu0 0
  %2230 = vmatpush2.bf16.msra.mxu0 0
  %2231 = vmatprep.mubr.bf16.mxu0 0
  %2232 = vmatmul.mubr.bf16.gmra.mxu0 %v2198
  %v2233 = vpop.f32.mrf.mxu0
  %v2234 = vadd.f32 %v303, %v2233
  %v2235 = vpop.f32.mrf.mxu0
  %v2236 = vadd.f32 %v307, %v2235
  %v2237 = vpop.f32.mrf.mxu0
  %v2238 = vpop.f32.mrf.mxu0
  %2239 = vdwg.mxu0
  %2240 = vmatprep.subr.bf16.mxu0 0
  %2241 = vmatpush1.bf16.msra.mxu0 %v476
  %2242 = vmatprep.subr.bf16.mxu0 0
  %2243 = vmatpush1.bf16.msra.mxu0 %v473
  %2244 = vmatprep.subr.bf16.mxu0 0
  %2245 = vmatpush1.bf16.msra.mxu0 %v470
  %2246 = vmatprep.subr.bf16.mxu0 0
  %2247 = vmatpush1.bf16.msra.mxu0 %v467
  %2248 = vmatprep.subr.bf16.mxu0 0
  %2249 = vmatpush1.bf16.msra.mxu0 %v464
  %2250 = vmatprep.subr.bf16.mxu0 0
  %2251 = vmatpush1.bf16.msra.mxu0 %v461
  %2252 = vmatprep.subr.bf16.mxu0 0
  %2253 = vmatpush1.bf16.msra.mxu0 %v458
  %2254 = vmatprep.subr.bf16.mxu0 0
  %2255 = vmatpush1.bf16.msra.mxu0 %v455
  %2256 = vmatprep.subr.bf16.mxu0 0
  %2257 = vmatpush2.bf16.msra.mxu0 0
  %2258 = vmatprep.subr.bf16.mxu0 0
  %2259 = vmatpush2.bf16.msra.mxu0 0
  %2260 = vmatprep.subr.bf16.mxu0 0
  %2261 = vmatpush2.bf16.msra.mxu0 0
  %2262 = vmatprep.subr.bf16.mxu0 0
  %2263 = vmatpush2.bf16.msra.mxu0 0
  %2264 = vmatprep.subr.bf16.mxu0 0
  %2265 = vmatpush2.bf16.msra.mxu0 0
  %2266 = vmatprep.subr.bf16.mxu0 0
  %2267 = vmatpush2.bf16.msra.mxu0 0
  %2268 = vmatprep.subr.bf16.mxu0 0
  %2269 = vmatpush2.bf16.msra.mxu0 0
  %2270 = vmatprep.subr.bf16.mxu0 0
  %2271 = vmatpush2.bf16.msra.mxu0 0
  %2272 = vmatprep.mubr.bf16.mxu0 0
  %2273 = vmatmul.mubr.bf16.gmra.mxu0 %v2198
  %v2274 = vpop.f32.mrf.mxu0
  %v2275 = vadd.f32 %v311, %v2274
  %v2276 = vpop.f32.mrf.mxu0
  %v2277 = vpop.f32.mrf.mxu0
  %v2278 = vpop.f32.mrf.mxu0
  %2279 = vdwg.mxu0
  %v2280 = vadd.f32 %v2194, %v2234
  %v2281 = vadd.f32 %v2195, %v2236
  %v2282 = vxor.u32 %v2280, 2147483648
  %v2283 = vxor.u32 %v2281, 2147483648
  %v2284 = vmul.f32 %v2282, 1.442695
  %v2285 = vpow.pop %v2284
  %v2286 = vmul.f32 %v2283, 1.442695
  %v2287 = vpow.pop %v2286
  %v2288 = vadd.f32 %v2285, 1.0
  %v2289 = vadd.f32 %v2287, 1.0
  %v2290 = vrcp.pop %v2288
  %v2291 = vmul.f32 1.0, %v2290
  %v2292 = vrcp.pop %v2289
  %v2293 = vmul.f32 1.0, %v2292
  %v2294 = vmul.f32 %v2291, %v2275
  %v2295 = vadd.f32 %v2196, %v2294
  %v2296 = vtanh.pop %v2295
  %v2297 = vsub.f32 1.0, %v2293
  %v2298 = vmul.f32 %v2297, %v2296
  %v2299 = vmul.f32 %v2293, %v2191
  %v2300 = vadd.f32 %v2298, %v2299
  %v2301 = vpack.c.bf16 %v2300, %v2300
  %v2302 = vpack.c.bf16 %v2192, %v2192
  %2303 = vmatprep.subr.bf16.mxu0 %v890
  %2304 = vmatpush1.bf16.msra.mxu0 %v889
  %2305 = vmatprep.subr.bf16.mxu0 %v886
  %2306 = vmatpush1.bf16.msra.mxu0 %v885
  %2307 = vmatprep.subr.bf16.mxu0 %v882
  %2308 = vmatpush1.bf16.msra.mxu0 %v881
  %2309 = vmatprep.subr.bf16.mxu0 %v878
  %2310 = vmatpush1.bf16.msra.mxu0 %v877
  %2311 = vmatprep.subr.bf16.mxu0 %v874
  %2312 = vmatpush1.bf16.msra.mxu0 %v873
  %2313 = vmatprep.subr.bf16.mxu0 %v870
  %2314 = vmatpush1.bf16.msra.mxu0 %v869
  %2315 = vmatprep.subr.bf16.mxu0 %v866
  %2316 = vmatpush1.bf16.msra.mxu0 %v865
  %2317 = vmatprep.subr.bf16.mxu0 %v862
  %2318 = vmatpush1.bf16.msra.mxu0 %v861
  %2319 = vmatprep.subr.bf16.mxu0 %v922
  %2320 = vmatpush2.bf16.msra.mxu0 %v921
  %2321 = vmatprep.subr.bf16.mxu0 %v918
  %2322 = vmatpush2.bf16.msra.mxu0 %v917
  %2323 = vmatprep.subr.bf16.mxu0 %v914
  %2324 = vmatpush2.bf16.msra.mxu0 %v913
  %2325 = vmatprep.subr.bf16.mxu0 %v910
  %2326 = vmatpush2.bf16.msra.mxu0 %v909
  %2327 = vmatprep.subr.bf16.mxu0 %v906
  %2328 = vmatpush2.bf16.msra.mxu0 %v905
  %2329 = vmatprep.subr.bf16.mxu0 %v902
  %2330 = vmatpush2.bf16.msra.mxu0 %v901
  %2331 = vmatprep.subr.bf16.mxu0 %v898
  %2332 = vmatpush2.bf16.msra.mxu0 %v897
  %2333 = vmatprep.subr.bf16.mxu0 %v894
  %2334 = vmatpush2.bf16.msra.mxu0 %v893
  %2335 = vmatprep.mubr.bf16.mxu0 %v2302
  %2336 = vmatmul.mubr.bf16.gmra.mxu0 %v2301
  %v2337 = vpop.f32.mrf.mxu0
  %v2338 = vadd.f32 %v320, %v2337
  %v2339 = vpop.f32.mrf.mxu0
  %v2340 = vadd.f32 %v324, %v2339
  %v2341 = vpop.f32.mrf.mxu0
  %v2342 = vpop.f32.mrf.mxu0
  %2343 = vdwg.mxu0
  %2344 = vmatprep.subr.bf16.mxu0 %v892
  %2345 = vmatpush1.bf16.msra.mxu0 %v891
  %2346 = vmatprep.subr.bf16.mxu0 %v888
  %2347 = vmatpush1.bf16.msra.mxu0 %v887
  %2348 = vmatprep.subr.bf16.mxu0 %v884
  %2349 = vmatpush1.bf16.msra.mxu0 %v883
  %2350 = vmatprep.subr.bf16.mxu0 %v880
  %2351 = vmatpush1.bf16.msra.mxu0 %v879
  %2352 = vmatprep.subr.bf16.mxu0 %v876
  %2353 = vmatpush1.bf16.msra.mxu0 %v875
  %2354 = vmatprep.subr.bf16.mxu0 %v872
  %2355 = vmatpush1.bf16.msra.mxu0 %v871
  %2356 = vmatprep.subr.bf16.mxu0 %v868
  %2357 = vmatpush1.bf16.msra.mxu0 %v867
  %2358 = vmatprep.subr.bf16.mxu0 %v864
  %2359 = vmatpush1.bf16.msra.mxu0 %v863
  %2360 = vmatprep.subr.bf16.mxu0 %v924
  %2361 = vmatpush2.bf16.msra.mxu0 %v923
  %2362 = vmatprep.subr.bf16.mxu0 %v920
  %2363 = vmatpush2.bf16.msra.mxu0 %v919
  %2364 = vmatprep.subr.bf16.mxu0 %v916
  %2365 = vmatpush2.bf16.msra.mxu0 %v915
  %2366 = vmatprep.subr.bf16.mxu0 %v912
  %2367 = vmatpush2.bf16.msra.mxu0 %v911
  %2368 = vmatprep.subr.bf16.mxu0 %v908
  %2369 = vmatpush2.bf16.msra.mxu0 %v907
  %2370 = vmatprep.subr.bf16.mxu0 %v904
  %2371 = vmatpush2.bf16.msra.mxu0 %v903
  %2372 = vmatprep.subr.bf16.mxu0 %v900
  %2373 = vmatpush2.bf16.msra.mxu0 %v899
  %2374 = vmatprep.subr.bf16.mxu0 %v896
  %2375 = vmatpush2.bf16.msra.mxu0 %v895
  %2376 = vmatprep.mubr.bf16.mxu0 %v2302
  %2377 = vmatmul.mubr.bf16.gmra.mxu0 %v2301
  %v2378 = vpop.f32.mrf.mxu0
  %v2379 = vadd.f32 %v328, %v2378
  %v2380 = vpop.f32.mrf.mxu0
  %v2381 = vadd.f32 %v332, %v2380
  %v2382 = vpop.f32.mrf.mxu0
  %v2383 = vpop.f32.mrf.mxu0
  %2384 = vdwg.mxu0
  %v2385 = vxor.u32 %v2338, 2147483648
  %v2386 = vxor.u32 %v2340, 2147483648
  %v2387 = vmul.f32 %v2385, 1.442695
  %v2388 = vpow.pop %v2387
  %v2389 = vmul.f32 %v2386, 1.442695
  %v2390 = vpow.pop %v2389
  %v2391 = vadd.f32 %v2388, 1.0
  %v2392 = vadd.f32 %v2390, 1.0
  %v2393 = vrcp.pop %v2391
  %v2394 = vmul.f32 1.0, %v2393
  %v2395 = vrcp.pop %v2392
  %v2396 = vmul.f32 1.0, %v2395
  %v2397 = vmul.f32 %v2394, %v2381
  %v2398 = vadd.f32 %v2379, %v2397
  %v2399 = vtanh.pop %v2398
  %v2400 = vsub.f32 1.0, %v2396
  %v2401 = vmul.f32 %v2400, %v2399
  %v2402 = vmul.f32 %v2396, %v2192
  %v2403 = vadd.f32 %v2401, %v2402
  %vm2404 = vcmp.gt.s32.totalorder %v297, 6
  %v2405 = vsel %vm2404, 1, 0
  %2406 = vset.pattern.permute.xlu0 0
  %2407 = vperm.xlu0 %2406, %v2405
  %v2408 = vpop.permute.xlu0 %2407
  %vm2409 = vcmp.eq.s32.totalorder %v2408, 1
  %v2410 = vsel %vm2409, %v2300, %v2191
  %v2411 = vsel %vm2409, %v2403, %v2192
  %v2412 = vsel %vm2409, %v2197, %v2193
  %v2413 = vld [vmem:[#allocation2 + $0xa8] sm:$0xff]
  %v2414 = vld [vmem:[#allocation2 + $0xb0] sm:$0xff]
  %v2415 = vld [vmem:[#allocation2 + $0xb8] sm:$0xff]
  %v2416 = vld [vmem:[%s0 + $0x38] sm:$0xff]
  %v2417 = vpack.c.bf16 %v2410, %v2410
  %2418 = vmatprep.subr.bf16.mxu0 %v475
  %2419 = vmatpush1.bf16.msra.mxu0 %v474
  %2420 = vmatprep.subr.bf16.mxu0 %v472
  %2421 = vmatpush1.bf16.msra.mxu0 %v471
  %2422 = vmatprep.subr.bf16.mxu0 %v469
  %2423 = vmatpush1.bf16.msra.mxu0 %v468
  %2424 = vmatprep.subr.bf16.mxu0 %v466
  %2425 = vmatpush1.bf16.msra.mxu0 %v465
  %2426 = vmatprep.subr.bf16.mxu0 %v463
  %2427 = vmatpush1.bf16.msra.mxu0 %v462
  %2428 = vmatprep.subr.bf16.mxu0 %v460
  %2429 = vmatpush1.bf16.msra.mxu0 %v459
  %2430 = vmatprep.subr.bf16.mxu0 %v457
  %2431 = vmatpush1.bf16.msra.mxu0 %v456
  %2432 = vmatprep.subr.bf16.mxu0 %v454
  %2433 = vmatpush1.bf16.msra.mxu0 %v453
  %2434 = vmatprep.subr.bf16.mxu0 0
  %2435 = vmatpush2.bf16.msra.mxu0 0
  %2436 = vmatprep.subr.bf16.mxu0 0
  %2437 = vmatpush2.bf16.msra.mxu0 0
  %2438 = vmatprep.subr.bf16.mxu0 0
  %2439 = vmatpush2.bf16.msra.mxu0 0
  %2440 = vmatprep.subr.bf16.mxu0 0
  %2441 = vmatpush2.bf16.msra.mxu0 0
  %2442 = vmatprep.subr.bf16.mxu0 0
  %2443 = vmatpush2.bf16.msra.mxu0 0
  %2444 = vmatprep.subr.bf16.mxu0 0
  %2445 = vmatpush2.bf16.msra.mxu0 0
  %2446 = vmatprep.subr.bf16.mxu0 0
  %2447 = vmatpush2.bf16.msra.mxu0 0
  %2448 = vmatprep.subr.bf16.mxu0 0
  %2449 = vmatpush2.bf16.msra.mxu0 0
  %2450 = vmatprep.mubr.bf16.mxu0 0
  %2451 = vmatmul.mubr.bf16.gmra.mxu0 %v2417
  %v2452 = vpop.f32.mrf.mxu0
  %v2453 = vadd.f32 %v303, %v2452
  %v2454 = vpop.f32.mrf.mxu0
  %v2455 = vadd.f32 %v307, %v2454
  %v2456 = vpop.f32.mrf.mxu0
  %v2457 = vpop.f32.mrf.mxu0
  %2458 = vdwg.mxu0
  %2459 = vmatprep.subr.bf16.mxu0 0
  %2460 = vmatpush1.bf16.msra.mxu0 %v476
  %2461 = vmatprep.subr.bf16.mxu0 0
  %2462 = vmatpush1.bf16.msra.mxu0 %v473
  %2463 = vmatprep.subr.bf16.mxu0 0
  %2464 = vmatpush1.bf16.msra.mxu0 %v470
  %2465 = vmatprep.subr.bf16.mxu0 0
  %2466 = vmatpush1.bf16.msra.mxu0 %v467
  %2467 = vmatprep.subr.bf16.mxu0 0
  %2468 = vmatpush1.bf16.msra.mxu0 %v464
  %2469 = vmatprep.subr.bf16.mxu0 0
  %2470 = vmatpush1.bf16.msra.mxu0 %v461
  %2471 = vmatprep.subr.bf16.mxu0 0
  %2472 = vmatpush1.bf16.msra.mxu0 %v458
  %2473 = vmatprep.subr.bf16.mxu0 0
  %2474 = vmatpush1.bf16.msra.mxu0 %v455
  %2475 = vmatprep.subr.bf16.mxu0 0
  %2476 = vmatpush2.bf16.msra.mxu0 0
  %2477 = vmatprep.subr.bf16.mxu0 0
  %2478 = vmatpush2.bf16.msra.mxu0 0
  %2479 = vmatprep.subr.bf16.mxu0 0
  %2480 = vmatpush2.bf16.msra.mxu0 0
  %2481 = vmatprep.subr.bf16.mxu0 0
  %2482 = vmatpush2.bf16.msra.mxu0 0
  %2483 = vmatprep.subr.bf16.mxu0 0
  %2484 = vmatpush2.bf16.msra.mxu0 0
  %2485 = vmatprep.subr.bf16.mxu0 0
  %2486 = vmatpush2.bf16.msra.mxu0 0
  %2487 = vmatprep.subr.bf16.mxu0 0
  %2488 = vmatpush2.bf16.msra.mxu0 0
  %2489 = vmatprep.subr.bf16.mxu0 0
  %2490 = vmatpush2.bf16.msra.mxu0 0
  %2491 = vmatprep.mubr.bf16.mxu0 0
  %2492 = vmatmul.mubr.bf16.gmra.mxu0 %v2417
  %v2493 = vpop.f32.mrf.mxu0
  %v2494 = vadd.f32 %v311, %v2493
  %v2495 = vpop.f32.mrf.mxu0
  %v2496 = vpop.f32.mrf.mxu0
  %v2497 = vpop.f32.mrf.mxu0
  %2498 = vdwg.mxu0
  %v2499 = vadd.f32 %v2413, %v2453
  %v2500 = vadd.f32 %v2414, %v2455
  %v2501 = vxor.u32 %v2499, 2147483648
  %v2502 = vxor.u32 %v2500, 2147483648
  %v2503 = vmul.f32 %v2501, 1.442695
  %v2504 = vpow.pop %v2503
  %v2505 = vmul.f32 %v2502, 1.442695
  %v2506 = vpow.pop %v2505
  %v2507 = vadd.f32 %v2504, 1.0
  %v2508 = vadd.f32 %v2506, 1.0
  %v2509 = vrcp.pop %v2507
  %v2510 = vmul.f32 1.0, %v2509
  %v2511 = vrcp.pop %v2508
  %v2512 = vmul.f32 1.0, %v2511
  %v2513 = vmul.f32 %v2510, %v2494
  %v2514 = vadd.f32 %v2415, %v2513
  %v2515 = vtanh.pop %v2514
  %v2516 = vsub.f32 1.0, %v2512
  %v2517 = vmul.f32 %v2516, %v2515
  %v2518 = vmul.f32 %v2512, %v2410
  %v2519 = vadd.f32 %v2517, %v2518
  %v2520 = vpack.c.bf16 %v2519, %v2519
  %v2521 = vpack.c.bf16 %v2411, %v2411
  %2522 = vmatprep.subr.bf16.mxu0 %v890
  %2523 = vmatpush1.bf16.msra.mxu0 %v889
  %2524 = vmatprep.subr.bf16.mxu0 %v886
  %2525 = vmatpush1.bf16.msra.mxu0 %v885
  %2526 = vmatprep.subr.bf16.mxu0 %v882
  %2527 = vmatpush1.bf16.msra.mxu0 %v881
  %2528 = vmatprep.subr.bf16.mxu0 %v878
  %2529 = vmatpush1.bf16.msra.mxu0 %v877
  %2530 = vmatprep.subr.bf16.mxu0 %v874
  %2531 = vmatpush1.bf16.msra.mxu0 %v873
  %2532 = vmatprep.subr.bf16.mxu0 %v870
  %2533 = vmatpush1.bf16.msra.mxu0 %v869
  %2534 = vmatprep.subr.bf16.mxu0 %v866
  %2535 = vmatpush1.bf16.msra.mxu0 %v865
  %2536 = vmatprep.subr.bf16.mxu0 %v862
  %2537 = vmatpush1.bf16.msra.mxu0 %v861
  %2538 = vmatprep.subr.bf16.mxu0 %v922
  %2539 = vmatpush2.bf16.msra.mxu0 %v921
  %2540 = vmatprep.subr.bf16.mxu0 %v918
  %2541 = vmatpush2.bf16.msra.mxu0 %v917
  %2542 = vmatprep.subr.bf16.mxu0 %v914
  %2543 = vmatpush2.bf16.msra.mxu0 %v913
  %2544 = vmatprep.subr.bf16.mxu0 %v910
  %2545 = vmatpush2.bf16.msra.mxu0 %v909
  %2546 = vmatprep.subr.bf16.mxu0 %v906
  %2547 = vmatpush2.bf16.msra.mxu0 %v905
  %2548 = vmatprep.subr.bf16.mxu0 %v902
  %2549 = vmatpush2.bf16.msra.mxu0 %v901
  %2550 = vmatprep.subr.bf16.mxu0 %v898
  %2551 = vmatpush2.bf16.msra.mxu0 %v897
  %2552 = vmatprep.subr.bf16.mxu0 %v894
  %2553 = vmatpush2.bf16.msra.mxu0 %v893
  %2554 = vmatprep.mubr.bf16.mxu0 %v2521
  %2555 = vmatmul.mubr.bf16.gmra.mxu0 %v2520
  %v2556 = vpop.f32.mrf.mxu0
  %v2557 = vadd.f32 %v320, %v2556
  %v2558 = vpop.f32.mrf.mxu0
  %v2559 = vadd.f32 %v324, %v2558
  %v2560 = vpop.f32.mrf.mxu0
  %v2561 = vpop.f32.mrf.mxu0
  %2562 = vdwg.mxu0
  %2563 = vmatprep.subr.bf16.mxu0 %v892
  %2564 = vmatpush1.bf16.msra.mxu0 %v891
  %2565 = vmatprep.subr.bf16.mxu0 %v888
  %2566 = vmatpush1.bf16.msra.mxu0 %v887
  %2567 = vmatprep.subr.bf16.mxu0 %v884
  %2568 = vmatpush1.bf16.msra.mxu0 %v883
  %2569 = vmatprep.subr.bf16.mxu0 %v880
  %2570 = vmatpush1.bf16.msra.mxu0 %v879
  %2571 = vmatprep.subr.bf16.mxu0 %v876
  %2572 = vmatpush1.bf16.msra.mxu0 %v875
  %2573 = vmatprep.subr.bf16.mxu0 %v872
  %2574 = vmatpush1.bf16.msra.mxu0 %v871
  %2575 = vmatprep.subr.bf16.mxu0 %v868
  %2576 = vmatpush1.bf16.msra.mxu0 %v867
  %2577 = vmatprep.subr.bf16.mxu0 %v864
  %2578 = vmatpush1.bf16.msra.mxu0 %v863
  %2579 = vmatprep.subr.bf16.mxu0 %v924
  %2580 = vmatpush2.bf16.msra.mxu0 %v923
  %2581 = vmatprep.subr.bf16.mxu0 %v920
  %2582 = vmatpush2.bf16.msra.mxu0 %v919
  %2583 = vmatprep.subr.bf16.mxu0 %v916
  %2584 = vmatpush2.bf16.msra.mxu0 %v915
  %2585 = vmatprep.subr.bf16.mxu0 %v912
  %2586 = vmatpush2.bf16.msra.mxu0 %v911
  %2587 = vmatprep.subr.bf16.mxu0 %v908
  %2588 = vmatpush2.bf16.msra.mxu0 %v907
  %2589 = vmatprep.subr.bf16.mxu0 %v904
  %2590 = vmatpush2.bf16.msra.mxu0 %v903
  %2591 = vmatprep.subr.bf16.mxu0 %v900
  %2592 = vmatpush2.bf16.msra.mxu0 %v899
  %2593 = vmatprep.subr.bf16.mxu0 %v896
  %2594 = vmatpush2.bf16.msra.mxu0 %v895
  %2595 = vmatprep.mubr.bf16.mxu0 %v2521
  %2596 = vmatmul.mubr.bf16.gmra.mxu0 %v2520
  %v2597 = vpop.f32.mrf.mxu0
  %v2598 = vadd.f32 %v328, %v2597
  %v2599 = vpop.f32.mrf.mxu0
  %v2600 = vadd.f32 %v332, %v2599
  %v2601 = vpop.f32.mrf.mxu0
  %v2602 = vpop.f32.mrf.mxu0
  %2603 = vdwg.mxu0
  %v2604 = vxor.u32 %v2557, 2147483648
  %v2605 = vxor.u32 %v2559, 2147483648
  %v2606 = vmul.f32 %v2604, 1.442695
  %v2607 = vpow.pop %v2606
  %v2608 = vmul.f32 %v2605, 1.442695
  %v2609 = vpow.pop %v2608
  %v2610 = vadd.f32 %v2607, 1.0
  %v2611 = vadd.f32 %v2609, 1.0
  %v2612 = vrcp.pop %v2610
  %v2613 = vmul.f32 1.0, %v2612
  %v2614 = vrcp.pop %v2611
  %v2615 = vmul.f32 1.0, %v2614
  %v2616 = vmul.f32 %v2613, %v2600
  %v2617 = vadd.f32 %v2598, %v2616
  %v2618 = vtanh.pop %v2617
  %v2619 = vsub.f32 1.0, %v2615
  %v2620 = vmul.f32 %v2619, %v2618
  %v2621 = vmul.f32 %v2615, %v2411
  %v2622 = vadd.f32 %v2620, %v2621
  %vm2623 = vcmp.gt.s32.totalorder %v297, 7
  %v2624 = vsel %vm2623, 1, 0
  %2625 = vset.pattern.permute.xlu0 0
  %2626 = vperm.xlu0 %2625, %v2624
  %v2627 = vpop.permute.xlu0 %2626
  %vm2628 = vcmp.eq.s32.totalorder %v2627, 1
  %v2629 = vsel %vm2628, %v2622, %v2411
  %v2630 = vsel %vm2628, %v2416, %v2412
  %v2631 = vld [vmem:[%s9] sm:$0xff]
  %v2632 = vld [vmem:[%s9 + $0x8] sm:$0xff]
  %v2633 = vld [vmem:[%s9 + $0x10] sm:$0xff]
  %v2634 = vld [vmem:[%s9 + $0x18] sm:$0xff]
  %v2635 = vld [vmem:[%s9 + $0x20] sm:$0xff]
  %v2636 = vld [vmem:[%s9 + $0x28] sm:$0xff]
  %v2637 = vld [vmem:[%s9 + $0x30] sm:$0xff]
  %v2638 = vld [vmem:[%s9 + $0x38] sm:$0xff]
  %v2639 = vld [vmem:[%s9 + $0x40] sm:$0xff]
  %v2640 = vld [vmem:[%s9 + $0x48] sm:$0xff]
  %v2641 = vld [vmem:[%s9 + $0x50] sm:$0xff]
  %v2642 = vld [vmem:[%s9 + $0x58] sm:$0xff]
  %v2643 = vld [vmem:[%s9 + $0x60] sm:$0xff]
  %v2644 = vld [vmem:[%s9 + $0x68] sm:$0xff]
  %v2645 = vld [vmem:[%s9 + $0x70] sm:$0xff]
  %v2646 = vld [vmem:[%s9 + $0x78] sm:$0xff]
  %v2647 = vld [vmem:[%s9 + $0x80] sm:$0xff]
  %v2648 = vld [vmem:[%s9 + $0x88] sm:$0xff]
  %v2649 = vld [vmem:[%s9 + $0x90] sm:$0xff]
  %v2650 = vld [vmem:[%s9 + $0x98] sm:$0xff]
  %v2651 = vld [vmem:[%s9 + $0xa0] sm:$0xff]
  %v2652 = vld [vmem:[%s9 + $0xa8] sm:$0xff]
  %v2653 = vld [vmem:[%s9 + $0xb0] sm:$0xff]
  %v2654 = vld [vmem:[%s9 + $0xb8] sm:$0xff]
  %v2655 = vld [vmem:[%s9 + $0xc0] sm:$0xff]
  %v2656 = vld [vmem:[%s9 + $0xc8] sm:$0xff]
  %v2657 = vld [vmem:[%s9 + $0xd0] sm:$0xff]
  %v2658 = vld [vmem:[%s9 + $0xd8] sm:$0xff]
  %v2659 = vld [vmem:[%s9 + $0xe0] sm:$0xff]
  %v2660 = vld [vmem:[%s9 + $0xe8] sm:$0xff]
  %v2661 = vld [vmem:[%s9 + $0xf0] sm:$0xff]
  %v2662 = vld [vmem:[%s9 + $0xf8] sm:$0xff]
  %v2663 = vld [vmem:[%s10] sm:$0x3]
  %v2665 = vlaneseq
  %v2666 = vshrl.u32 %v2665, 7
  %v2667 = vsub.s32 0, %v2666
  %v2668 = vrot.slane %v2663, %v2667
  %v2669 = vlaneseq
  %v2670 = vshrl.u32 %v2669, 7
  %v2671 = vsub.s32 1, %v2670
  %v2672 = vrot.slane %v2663, %v2671
  %2675 = vmatprep.subr.mxu0 %v2662
  %2676 = vmatpush1.msra.mxu0 %v2661
  %2677 = vmatprep.subr.mxu0 %v2660
  %2678 = vmatpush1.msra.mxu0 %v2659
  %2679 = vmatprep.subr.mxu0 %v2658
  %2680 = vmatpush1.msra.mxu0 %v2657
  %2681 = vmatprep.subr.mxu0 %v2656
  %2682 = vmatpush1.msra.mxu0 %v2655
  %2683 = vmatprep.subr.mxu0 %v2654
  %2684 = vmatpush1.msra.mxu0 %v2653
  %2685 = vmatprep.subr.mxu0 %v2652
  %2686 = vmatpush1.msra.mxu0 %v2651
  %2687 = vmatprep.subr.mxu0 %v2650
  %2688 = vmatpush1.msra.mxu0 %v2649
  %2689 = vmatprep.subr.mxu0 %v2648
  %2690 = vmatpush1.msra.mxu0 %v2647
  %2691 = vmatprep.subr.mxu0 %v2646
  %2692 = vmatpush1.msra.mxu0 %v2645
  %2693 = vmatprep.subr.mxu0 %v2644
  %2694 = vmatpush1.msra.mxu0 %v2643
  %2695 = vmatprep.subr.mxu0 %v2642
  %2696 = vmatpush1.msra.mxu0 %v2641
  %2697 = vmatprep.subr.mxu0 %v2640
  %2698 = vmatpush1.msra.mxu0 %v2639
  %2699 = vmatprep.subr.mxu0 %v2638
  %2700 = vmatpush1.msra.mxu0 %v2637
  %2701 = vmatprep.subr.mxu0 %v2636
  %2702 = vmatpush1.msra.mxu0 %v2635
  %2703 = vmatprep.subr.mxu0 %v2634
  %2704 = vmatpush1.msra.mxu0 %v2633
  %2705 = vmatprep.subr.mxu0 %v2632
  %2706 = vmatpush1.msra.mxu0 %v2631
  %2707 = vmatprep.subr.mxu0 0.0
  %2708 = vmatpush2.msra.mxu0 0.0
  %2709 = vmatprep.subr.mxu0 0.0
  %2710 = vmatpush2.msra.mxu0 0.0
  %2711 = vmatprep.subr.mxu0 0.0
  %2712 = vmatpush2.msra.mxu0 0.0
  %2713 = vmatprep.subr.mxu0 0.0
  %2714 = vmatpush2.msra.mxu0 0.0
  %2715 = vmatprep.subr.mxu0 0.0
  %2716 = vmatpush2.msra.mxu0 0.0
  %2717 = vmatprep.subr.mxu0 0.0
  %2718 = vmatpush2.msra.mxu0 0.0
  %2719 = vmatprep.subr.mxu0 0.0
  %2720 = vmatpush2.msra.mxu0 0.0
  %2721 = vmatprep.subr.mxu0 0.0
  %2722 = vmatpush2.msra.mxu0 0.0
  %2723 = vmatprep.subr.mxu0 0.0
  %2724 = vmatpush2.msra.mxu0 0.0
  %2725 = vmatprep.subr.mxu0 0.0
  %2726 = vmatpush2.msra.mxu0 0.0
  %2727 = vmatprep.subr.mxu0 0.0
  %2728 = vmatpush2.msra.mxu0 0.0
  %2729 = vmatprep.subr.mxu0 0.0
  %2730 = vmatpush2.msra.mxu0 0.0
  %2731 = vmatprep.subr.mxu0 0.0
  %2732 = vmatpush2.msra.mxu0 0.0
  %2733 = vmatprep.subr.mxu0 0.0
  %2734 = vmatpush2.msra.mxu0 0.0
  %2735 = vmatprep.subr.mxu0 0.0
  %2736 = vmatpush2.msra.mxu0 0.0
  %2737 = vmatprep.subr.mxu0 0.0
  %2738 = vmatpush2.msra.mxu0 0.0
  %2739 = vmatprep.mubr.f32.mxu0 0.0
  %2740 = vmatmul.mubr.f32.gmra.mxu0 %v2629
  %v2741 = vpop.f32.mrf.mxu0
  %v2742 = vadd.f32 %v2668, %v2741
  %v2743 = vpop.f32.mrf.mxu0
  %v2744 = vadd.f32 %v2672, %v2743
  %2745 = vdwg.mxu0
  %v2746 = vmax.f32 %v2744, -10.0
  %v2747 = vmin.f32 %v2746, 10.0
  %vm2748 = vcmask 39936
  %2749 = vst.msk [vmem:[%s18] sm:$0xff] %vm2748, %v2742
  %2750 = vst.msk [vmem:[%s19] sm:$0xff] %vm2748, %v2747
  %v2751 = vld [vmem:[%s2] sm:$0xff]
  %v2752 = vmul.f32 %v2747, 0.5
  %v2753 = vmul.f32 %v2752, 1.442695
  %v2754 = vpow.pop %v2753
  %v2755 = vmul.f32 %v2751, %v2754
  %v2756 = vadd.f32 %v2742, %v2755
  %v2757 = vld [vmem:[%s11] sm:$0xff]
  %v2758 = vld [vmem:[%s11 + $0x8] sm:$0x7f]
  %v2759 = vld [vmem:[%s12] sm:$0x1f]
  %v2761 = vsel %vm2748, %v2756, 0
  %vm2763 = vcmask 1044480
  %v2765 = vsel %vm2763, %v2759, 0
  %2767 = vmatprep.subr.mxu0 0.0
  %2768 = vmatpush1.msra.mxu0 0.0
  %2769 = vmatprep.subr.mxu0 0.0
  %2770 = vmatpush1.msra.mxu0 0.0
  %2771 = vmatprep.subr.mxu0 0.0
  %2772 = vmatpush1.msra.mxu0 0.0
  %2773 = vmatprep.subr.mxu0 0.0
  %2774 = vmatpush1.msra.mxu0 0.0
  %2775 = vmatprep.subr.mxu0 0.0
  %2776 = vmatpush1.msra.mxu0 0.0
  %2777 = vmatprep.subr.mxu0 0.0
  %2778 = vmatpush1.msra.mxu0 0.0
  %2779 = vmatprep.subr.mxu0 0.0
  %2780 = vmatpush1.msra.mxu0 0.0
  %2781 = vmatprep.subr.mxu0 0.0
  %2782 = vmatpush1.msra.mxu0 0.0
  %2783 = vmatprep.subr.mxu0 0.0
  %2784 = vmatpush1.msra.mxu0 0.0
  %2785 = vmatprep.subr.mxu0 0.0
  %2786 = vmatpush1.msra.mxu0 0.0
  %2787 = vmatprep.subr.mxu0 0.0
  %2788 = vmatpush1.msra.mxu0 0.0
  %2789 = vmatprep.subr.mxu0 0.0
  %2790 = vmatpush1.msra.mxu0 0.0
  %2791 = vmatprep.subr.mxu0 0.0
  %2792 = vmatpush1.msra.mxu0 0.0
  %2793 = vmatprep.subr.mxu0 0.0
  %2794 = vmatpush1.msra.mxu0 0.0
  %2795 = vmatprep.subr.mxu0 0.0
  %2796 = vmatpush1.msra.mxu0 0.0
  %2797 = vmatprep.subr.mxu0 0.0
  %2798 = vmatpush1.msra.mxu0 %v2765
  %2799 = vmatprep.subr.mxu0 0.0
  %2800 = vmatpush2.msra.mxu0 0.0
  %2801 = vmatprep.subr.mxu0 0.0
  %2802 = vmatpush2.msra.mxu0 0.0
  %2803 = vmatprep.subr.mxu0 0.0
  %2804 = vmatpush2.msra.mxu0 0.0
  %2805 = vmatprep.subr.mxu0 0.0
  %2806 = vmatpush2.msra.mxu0 0.0
  %2807 = vmatprep.subr.mxu0 0.0
  %2808 = vmatpush2.msra.mxu0 0.0
  %2809 = vmatprep.subr.mxu0 0.0
  %2810 = vmatpush2.msra.mxu0 0.0
  %2811 = vmatprep.subr.mxu0 0.0
  %2812 = vmatpush2.msra.mxu0 0.0
  %2813 = vmatprep.subr.mxu0 0.0
  %2814 = vmatpush2.msra.mxu0 0.0
  %2815 = vmatprep.subr.mxu0 0.0
  %2816 = vmatpush2.msra.mxu0 0.0
  %2817 = vmatprep.subr.mxu0 0.0
  %2818 = vmatpush2.msra.mxu0 0.0
  %2819 = vmatprep.subr.mxu0 0.0
  %2820 = vmatpush2.msra.mxu0 0.0
  %2821 = vmatprep.subr.mxu0 0.0
  %2822 = vmatpush2.msra.mxu0 0.0
  %2823 = vmatprep.subr.mxu0 0.0
  %2824 = vmatpush2.msra.mxu0 0.0
  %2825 = vmatprep.subr.mxu0 0.0
  %2826 = vmatpush2.msra.mxu0 0.0
  %2827 = vmatprep.subr.mxu0 0.0
  %2828 = vmatpush2.msra.mxu0 0.0
  %2829 = vmatprep.subr.mxu0 0.0
  %2830 = vmatpush2.msra.mxu0 0.0
  %2831 = vmatprep.mubr.f32.mxu0 0.0
  %2832 = vmatmul.mubr.f32.gmra.mxu0 %v2761
  %v2833 = vpop.f32.mrf.mxu0
  %v2834 = vadd.f32 0.0, %v2833
  %v2835 = vpop.f32.mrf.mxu0
  %2836 = vdwg.mxu0
  %v2838 = vsel %vm109, %v2630, 0
  %v2841 = vsel %vm122, %v2758, 0
  %2843 = vmatprep.subr.mxu0 0.0
  %2844 = vmatpush1.msra.mxu0 0.0
  %2845 = vmatprep.subr.mxu0 0.0
  %2846 = vmatpush1.msra.mxu0 0.0
  %2847 = vmatprep.subr.mxu0 0.0
  %2848 = vmatpush1.msra.mxu0 0.0
  %2849 = vmatprep.subr.mxu0 0.0
  %2850 = vmatpush1.msra.mxu0 0.0
  %2851 = vmatprep.subr.mxu0 0.0
  %2852 = vmatpush1.msra.mxu0 0.0
  %2853 = vmatprep.subr.mxu0 0.0
  %2854 = vmatpush1.msra.mxu0 0.0
  %2855 = vmatprep.subr.mxu0 0.0
  %2856 = vmatpush1.msra.mxu0 0.0
  %2857 = vmatprep.subr.mxu0 0.0
  %2858 = vmatpush1.msra.mxu0 0.0
  %2859 = vmatprep.subr.mxu0 0.0
  %2860 = vmatpush1.msra.mxu0 0.0
  %2861 = vmatprep.subr.mxu0 0.0
  %2862 = vmatpush1.msra.mxu0 0.0
  %2863 = vmatprep.subr.mxu0 0.0
  %2864 = vmatpush1.msra.mxu0 0.0
  %2865 = vmatprep.subr.mxu0 0.0
  %2866 = vmatpush1.msra.mxu0 0.0
  %2867 = vmatprep.subr.mxu0 0.0
  %2868 = vmatpush1.msra.mxu0 0.0
  %2869 = vmatprep.subr.mxu0 0.0
  %2870 = vmatpush1.msra.mxu0 0.0
  %2871 = vmatprep.subr.mxu0 0.0
  %2872 = vmatpush1.msra.mxu0 %v2841
  %2873 = vmatprep.subr.mxu0 0.0
  %2874 = vmatpush1.msra.mxu0 %v2757
  %2875 = vmatprep.subr.mxu0 0.0
  %2876 = vmatpush2.msra.mxu0 0.0
  %2877 = vmatprep.subr.mxu0 0.0
  %2878 = vmatpush2.msra.mxu0 0.0
  %2879 = vmatprep.subr.mxu0 0.0
  %2880 = vmatpush2.msra.mxu0 0.0
  %2881 = vmatprep.subr.mxu0 0.0
  %2882 = vmatpush2.msra.mxu0 0.0
  %2883 = vmatprep.subr.mxu0 0.0
  %2884 = vmatpush2.msra.mxu0 0.0
  %2885 = vmatprep.subr.mxu0 0.0
  %2886 = vmatpush2.msra.mxu0 0.0
  %2887 = vmatprep.subr.mxu0 0.0
  %2888 = vmatpush2.msra.mxu0 0.0
  %2889 = vmatprep.subr.mxu0 0.0
  %2890 = vmatpush2.msra.mxu0 0.0
  %2891 = vmatprep.subr.mxu0 0.0
  %2892 = vmatpush2.msra.mxu0 0.0
  %2893 = vmatprep.subr.mxu0 0.0
  %2894 = vmatpush2.msra.mxu0 0.0
  %2895 = vmatprep.subr.mxu0 0.0
  %2896 = vmatpush2.msra.mxu0 0.0
  %2897 = vmatprep.subr.mxu0 0.0
  %2898 = vmatpush2.msra.mxu0 0.0
  %2899 = vmatprep.subr.mxu0 0.0
  %2900 = vmatpush2.msra.mxu0 0.0
  %2901 = vmatprep.subr.mxu0 0.0
  %2902 = vmatpush2.msra.mxu0 0.0
  %2903 = vmatprep.subr.mxu0 0.0
  %2904 = vmatpush2.msra.mxu0 0.0
  %2905 = vmatprep.subr.mxu0 0.0
  %2906 = vmatpush2.msra.mxu0 0.0
  %2907 = vmatprep.mubr.f32.mxu0 0.0
  %2908 = vmatmul.mubr.f32.gmra.mxu0 %v2838
  %v2909 = vpop.f32.mrf.mxu0
  %v2910 = vadd.f32 %v2834, %v2909
  %v2911 = vpop.f32.mrf.mxu0
  %2912 = vdwg.mxu0
  %v2913 = vld [vmem:[%s13] sm:$0x1]
  %v2915 = vlaneseq
  %v2916 = vshrl.u32 %v2915, 7
  %v2917 = vsub.s32 0, %v2916
  %v2918 = vrot.slane %v2913, %v2917
  %v2920 = vadd.f32 %v2910, %v2918
  %v2921 = vmax.f32 %v2920, 0.0
  %v2922 = vld [vmem:[%s14] sm:$0xff]
  %v2923 = vld [vmem:[%s14 + $0x8] sm:$0xff]
  %v2924 = vld [vmem:[%s14 + $0x10] sm:$0xff]
  %v2925 = vld [vmem:[%s14 + $0x18] sm:$0xff]
  %v2926 = vld [vmem:[%s14 + $0x20] sm:$0xff]
  %v2927 = vld [vmem:[%s14 + $0x28] sm:$0xff]
  %v2928 = vld [vmem:[%s14 + $0x30] sm:$0xff]
  %v2929 = vld [vmem:[%s14 + $0x38] sm:$0xff]
  %v2930 = vld [vmem:[%s14 + $0x40] sm:$0xff]
  %v2931 = vld [vmem:[%s14 + $0x48] sm:$0xff]
  %v2932 = vld [vmem:[%s14 + $0x50] sm:$0xff]
  %v2933 = vld [vmem:[%s14 + $0x58] sm:$0xff]
  %v2934 = vld [vmem:[%s14 + $0x60] sm:$0xff]
  %v2935 = vld [vmem:[%s14 + $0x68] sm:$0xff]
  %v2936 = vld [vmem:[%s14 + $0x70] sm:$0xff]
  %v2937 = vld [vmem:[%s14 + $0x78] sm:$0xff]
  %v2938 = vld [vmem:[%s15] sm:$0x1]
  %v2940 = vlaneseq
  %v2941 = vshrl.u32 %v2940, 7
  %v2942 = vsub.s32 0, %v2941
  %v2943 = vrot.slane %v2938, %v2942
  %2945 = vmatprep.subr.mxu0 0.0
  %2946 = vmatpush1.msra.mxu0 %v2937
  %2947 = vmatprep.subr.mxu0 0.0
  %2948 = vmatpush1.msra.mxu0 %v2936
  %2949 = vmatprep.subr.mxu0 0.0
  %2950 = vmatpush1.msra.mxu0 %v2935
  %2951 = vmatprep.subr.mxu0 0.0
  %2952 = vmatpush1.msra.mxu0 %v2934
  %2953 = vmatprep.subr.mxu0 0.0
  %2954 = vmatpush1.msra.mxu0 %v2933
  %2955 = vmatprep.subr.mxu0 0.0
  %2956 = vmatpush1.msra.mxu0 %v2932
  %2957 = vmatprep.subr.mxu0 0.0
  %2958 = vmatpush1.msra.mxu0 %v2931
  %2959 = vmatprep.subr.mxu0 0.0
  %2960 = vmatpush1.msra.mxu0 %v2930
  %2961 = vmatprep.subr.mxu0 0.0
  %2962 = vmatpush1.msra.mxu0 %v2929
  %2963 = vmatprep.subr.mxu0 0.0
  %2964 = vmatpush1.msra.mxu0 %v2928
  %2965 = vmatprep.subr.mxu0 0.0
  %2966 = vmatpush1.msra.mxu0 %v2927
  %2967 = vmatprep.subr.mxu0 0.0
  %2968 = vmatpush1.msra.mxu0 %v2926
  %2969 = vmatprep.subr.mxu0 0.0
  %2970 = vmatpush1.msra.mxu0 %v2925
  %2971 = vmatprep.subr.mxu0 0.0
  %2972 = vmatpush1.msra.mxu0 %v2924
  %2973 = vmatprep.subr.mxu0 0.0
  %2974 = vmatpush1.msra.mxu0 %v2923
  %2975 = vmatprep.subr.mxu0 0.0
  %2976 = vmatpush1.msra.mxu0 %v2922
  %2977 = vmatprep.subr.mxu0 0.0
  %2978 = vmatpush2.msra.mxu0 0.0
  %2979 = vmatprep.subr.mxu0 0.0
  %2980 = vmatpush2.msra.mxu0 0.0
  %2981 = vmatprep.subr.mxu0 0.0
  %2982 = vmatpush2.msra.mxu0 0.0
  %2983 = vmatprep.subr.mxu0 0.0
  %2984 = vmatpush2.msra.mxu0 0.0
  %2985 = vmatprep.subr.mxu0 0.0
  %2986 = vmatpush2.msra.mxu0 0.0
  %2987 = vmatprep.subr.mxu0 0.0
  %2988 = vmatpush2.msra.mxu0 0.0
  %2989 = vmatprep.subr.mxu0 0.0
  %2990 = vmatpush2.msra.mxu0 0.0
  %2991 = vmatprep.subr.mxu0 0.0
  %2992 = vmatpush2.msra.mxu0 0.0
  %2993 = vmatprep.subr.mxu0 0.0
  %2994 = vmatpush2.msra.mxu0 0.0
  %2995 = vmatprep.subr.mxu0 0.0
  %2996 = vmatpush2.msra.mxu0 0.0
  %2997 = vmatprep.subr.mxu0 0.0
  %2998 = vmatpush2.msra.mxu0 0.0
  %2999 = vmatprep.subr.mxu0 0.0
  %3000 = vmatpush2.msra.mxu0 0.0
  %3001 = vmatprep.subr.mxu0 0.0
  %3002 = vmatpush2.msra.mxu0 0.0
  %3003 = vmatprep.subr.mxu0 0.0
  %3004 = vmatpush2.msra.mxu0 0.0
  %3005 = vmatprep.subr.mxu0 0.0
  %3006 = vmatpush2.msra.mxu0 0.0
  %3007 = vmatprep.subr.mxu0 0.0
  %3008 = vmatpush2.msra.mxu0 0.0
  %3009 = vmatprep.mubr.f32.mxu0 0.0
  %3010 = vmatmul.mubr.f32.gmra.mxu0 %v2921
  %v3011 = vpop.f32.mrf.mxu0
  %v3012 = vadd.f32 %v2943, %v3011
  %v3013 = vpop.f32.mrf.mxu0
  %3014 = vdwg.mxu0
  %v3015 = vmax.f32 %v3012, 0.0
  %v3016 = vld [vmem:[%s16] sm:$0xff]
  %v3017 = vld [vmem:[%s16 + $0x8] sm:$0xff]
  %v3018 = vld [vmem:[%s16 + $0x10] sm:$0xff]
  %v3019 = vld [vmem:[%s16 + $0x18] sm:$0xff]
  %v3020 = vld [vmem:[%s16 + $0x20] sm:$0xff]
  %v3021 = vld [vmem:[%s16 + $0x28] sm:$0xff]
  %v3022 = vld [vmem:[%s16 + $0x30] sm:$0xff]
  %v3023 = vld [vmem:[%s16 + $0x38] sm:$0xff]
  %v3024 = vld [vmem:[%s16 + $0x40] sm:$0xff]
  %v3025 = vld [vmem:[%s16 + $0x48] sm:$0xff]
  %v3026 = vld [vmem:[%s16 + $0x50] sm:$0xff]
  %v3027 = vld [vmem:[%s16 + $0x58] sm:$0xff]
  %v3028 = vld [vmem:[%s16 + $0x60] sm:$0xff]
  %v3029 = vld [vmem:[%s16 + $0x68] sm:$0xff]
  %v3030 = vld [vmem:[%s16 + $0x70] sm:$0xff]
  %v3031 = vld [vmem:[%s16 + $0x78] sm:$0xff]
  %v3032 = vld [vmem:[%s16 + $0x80] sm:$0xff]
  %v3033 = vld [vmem:[%s16 + $0x88] sm:$0xff]
  %v3034 = vld [vmem:[%s16 + $0x90] sm:$0xff]
  %v3035 = vld [vmem:[%s16 + $0x98] sm:$0xff]
  %v3036 = vld [vmem:[%s16 + $0xa0] sm:$0xff]
  %v3037 = vld [vmem:[%s16 + $0xa8] sm:$0xff]
  %v3038 = vld [vmem:[%s16 + $0xb0] sm:$0xff]
  %v3039 = vld [vmem:[%s16 + $0xb8] sm:$0xff]
  %v3040 = vld [vmem:[%s16 + $0xc0] sm:$0xff]
  %v3041 = vld [vmem:[%s16 + $0xc8] sm:$0xff]
  %v3042 = vld [vmem:[%s16 + $0xd0] sm:$0xff]
  %v3043 = vld [vmem:[%s16 + $0xd8] sm:$0xff]
  %v3044 = vld [vmem:[%s16 + $0xe0] sm:$0xff]
  %v3045 = vld [vmem:[%s16 + $0xe8] sm:$0xff]
  %v3046 = vld [vmem:[%s16 + $0xf0] sm:$0xff]
  %v3047 = vld [vmem:[%s16 + $0xf8] sm:$0xff]
  %v3048 = vld [vmem:[%s17] sm:$0x3]
  %v3050 = vlaneseq
  %v3051 = vshrl.u32 %v3050, 7
  %v3052 = vsub.s32 0, %v3051
  %v3053 = vrot.slane %v3048, %v3052
  %v3054 = vlaneseq
  %v3055 = vshrl.u32 %v3054, 7
  %v3056 = vsub.s32 1, %v3055
  %v3057 = vrot.slane %v3048, %v3056
  %3060 = vmatprep.subr.mxu0 %v3047
  %3061 = vmatpush1.msra.mxu0 %v3046
  %3062 = vmatprep.subr.mxu0 %v3045
  %3063 = vmatpush1.msra.mxu0 %v3044
  %3064 = vmatprep.subr.mxu0 %v3043
  %3065 = vmatpush1.msra.mxu0 %v3042
  %3066 = vmatprep.subr.mxu0 %v3041
  %3067 = vmatpush1.msra.mxu0 %v3040
  %3068 = vmatprep.subr.mxu0 %v3039
  %3069 = vmatpush1.msra.mxu0 %v3038
  %3070 = vmatprep.subr.mxu0 %v3037
  %3071 = vmatpush1.msra.mxu0 %v3036
  %3072 = vmatprep.subr.mxu0 %v3035
  %3073 = vmatpush1.msra.mxu0 %v3034
  %3074 = vmatprep.subr.mxu0 %v3033
  %3075 = vmatpush1.msra.mxu0 %v3032
  %3076 = vmatprep.subr.mxu0 %v3031
  %3077 = vmatpush1.msra.mxu0 %v3030
  %3078 = vmatprep.subr.mxu0 %v3029
  %3079 = vmatpush1.msra.mxu0 %v3028
  %3080 = vmatprep.subr.mxu0 %v3027
  %3081 = vmatpush1.msra.mxu0 %v3026
  %3082 = vmatprep.subr.mxu0 %v3025
  %3083 = vmatpush1.msra.mxu0 %v3024
  %3084 = vmatprep.subr.mxu0 %v3023
  %3085 = vmatpush1.msra.mxu0 %v3022
  %3086 = vmatprep.subr.mxu0 %v3021
  %3087 = vmatpush1.msra.mxu0 %v3020
  %3088 = vmatprep.subr.mxu0 %v3019
  %3089 = vmatpush1.msra.mxu0 %v3018
  %3090 = vmatprep.subr.mxu0 %v3017
  %3091 = vmatpush1.msra.mxu0 %v3016
  %3092 = vmatprep.subr.mxu0 0.0
  %3093 = vmatpush2.msra.mxu0 0.0
  %3094 = vmatprep.subr.mxu0 0.0
  %3095 = vmatpush2.msra.mxu0 0.0
  %3096 = vmatprep.subr.mxu0 0.0
  %3097 = vmatpush2.msra.mxu0 0.0
  %3098 = vmatprep.subr.mxu0 0.0
  %3099 = vmatpush2.msra.mxu0 0.0
  %3100 = vmatprep.subr.mxu0 0.0
  %3101 = vmatpush2.msra.mxu0 0.0
  %3102 = vmatprep.subr.mxu0 0.0
  %3103 = vmatpush2.msra.mxu0 0.0
  %3104 = vmatprep.subr.mxu0 0.0
  %3105 = vmatpush2.msra.mxu0 0.0
  %3106 = vmatprep.subr.mxu0 0.0
  %3107 = vmatpush2.msra.mxu0 0.0
  %3108 = vmatprep.subr.mxu0 0.0
  %3109 = vmatpush2.msra.mxu0 0.0
  %3110 = vmatprep.subr.mxu0 0.0
  %3111 = vmatpush2.msra.mxu0 0.0
  %3112 = vmatprep.subr.mxu0 0.0
  %3113 = vmatpush2.msra.mxu0 0.0
  %3114 = vmatprep.subr.mxu0 0.0
  %3115 = vmatpush2.msra.mxu0 0.0
  %3116 = vmatprep.subr.mxu0 0.0
  %3117 = vmatpush2.msra.mxu0 0.0
  %3118 = vmatprep.subr.mxu0 0.0
  %3119 = vmatpush2.msra.mxu0 0.0
  %3120 = vmatprep.subr.mxu0 0.0
  %3121 = vmatpush2.msra.mxu0 0.0
  %3122 = vmatprep.subr.mxu0 0.0
  %3123 = vmatpush2.msra.mxu0 0.0
  %3124 = vmatprep.mubr.f32.mxu0 0.0
  %3125 = vmatmul.mubr.f32.gmra.mxu0 %v3015
  %v3126 = vpop.f32.mrf.mxu0
  %v3127 = vadd.f32 %v3053, %v3126
  %v3128 = vpop.f32.mrf.mxu0
  %v3129 = vadd.f32 %v3057, %v3128
  %3130 = vdwg.mxu0
  %v3131 = vld [vmem:[%s0 + $0x38] sm:$0xff]
  %v3132 = vlaneseq
  %v3133 = vand.u32 %v3132, 127
  %vm3134 = vcmp.eq.s32.totalorder %v3133, 14
  %v3135 = vsel %vm3134, 1, 0
  %v3136 = vcvt.s32.f32 %v3135
  %v3137 = vmul.f32 %v3131, %v3136
  %v3138 = vsel %vm109, %v3137, 0.0
  %3139 = vadd.xlane.f32.xlu0 %v3138
  %v3140 = vpop.xlane.xlu0 %3139
  %v3141 = vlaneseq
  %v3142 = vshrl.u32 %v3141, 7
  %vm3143 = vcmp.lt.s32.totalorder %v3142, 2
  %v3144 = vsel %vm3143, 1, 0
  %v3145 = vcvt.s32.f32 %v3144
  %v3146 = vsub.f32 %v3127, %v3131
  %v3147 = vmul.f32 %v3146, %v3146
  %v3148 = vmul.f32 %v3147, %v3145
  %vm3149 = vcmask 48128
  %v3150 = vsel %vm3149, %v3148, 0.0
  %3151 = vadd.xlane.f32.xlu0 %v3150
  %v3152 = vpop.xlane.xlu0 %3151
  %v3153 = vrot.slane %v3152, 4
  %v3154 = vadd.f32 %v3152, %v3153
  %v3155 = vrot.slane %v3154, 2
  %v3156 = vadd.f32 %v3154, %v3155
  %v3157 = vrot.slane %v3156, 1
  %v3158 = vadd.f32 %v3156, %v3157
  %s3159 = vtos %v3158
  %v3160 = vstv %s3159
  %v3161 = vmul.f32 %v3160, 0.083333336
  %v3162 = vsub.f32 %v3129, %v3140
  %v3163 = vmul.f32 %v3162, %v3162
  %v3164 = vmul.f32 %v3163, %v3145
  %vm3165 = vcmask 7168
  %v3166 = vsel %vm3165, %v3164, 0.0
  %3167 = vadd.xlane.f32.xlu0 %v3166
  %v3168 = vpop.xlane.xlu0 %3167
  %v3169 = vrot.slane %v3168, 4
  %v3170 = vadd.f32 %v3168, %v3169
  %v3171 = vrot.slane %v3170, 2
  %v3172 = vadd.f32 %v3170, %v3171
  %v3173 = vrot.slane %v3172, 1
  %v3174 = vadd.f32 %v3172, %v3173
  %s3175 = vtos %v3174
  %v3176 = vstv %s3175
  %v3177 = vmul.f32 %v3176, 0.5
  %v3178 = vadd.f32 %v3161, %v3177
  %v3179 = vmul.f32 %v2747, -0.5
  %v3180 = vmul.f32 %v2747, 1.442695
  %v3181 = vpow.pop %v3180
  %v3182 = vmul.f32 %v2742, %v2742
  %v3183 = vadd.f32 %v3181, %v3182
  %v3184 = vmul.f32 %v3183, 0.5
  %v3185 = vadd.f32 %v3179, %v3184
  %v3186 = vsub.f32 %v3185, 0.5
  %v3187 = vsel %vm2748, %v3186, 0.0
  %3188 = vadd.xlane.f32.xlu0 %v3187
  %v3189 = vpop.xlane.xlu0 %3188
  %v3190 = vmul.f32 %v3189, %v3145
  %v3191 = vsel %vm3165, %v3190, 0.0
  %3192 = vadd.xlane.f32.xlu0 %v3191
  %v3193 = vpop.xlane.xlu0 %3192
  %v3194 = vrot.slane %v3193, 4
  %v3195 = vadd.f32 %v3193, %v3194
  %v3196 = vrot.slane %v3195, 2
  %v3197 = vadd.f32 %v3195, %v3196
  %v3198 = vrot.slane %v3197, 1
  %v3199 = vadd.f32 %v3197, %v3198
  %s3200 = vtos %v3199
  %v3201 = vstv %s3200
  %v3202 = vmul.f32 %v3201, 0.5
  %v3203 = vadd.f32 %v3178, %v3202
  %v3204 = vsub.f32 0.0, %v3203
  %vm3205 = vcmp.eq.s32.totalorder %v3133, 0
  %v3206 = vsel %vm3205, %v3161, 0.0
  %vm3207 = vcmp.eq.s32.totalorder %v3133, 1
  %v3208 = vsel %vm3207, %v3177, 0.0
  %v3209 = vadd.f32 %v3206, %v3208
  %vm3210 = vcmp.eq.s32.totalorder %v3133, 2
  %v3211 = vsel %vm3210, %v3178, 0.0
  %v3212 = vadd.f32 %v3209, %v3211
  %vm3213 = vcmp.eq.s32.totalorder %v3133, 3
  %v3214 = vsel %vm3213, %v3202, 0.0
  %v3215 = vadd.f32 %v3212, %v3214
  %vm3216 = vcmp.eq.s32.totalorder %v3133, 4
  %v3217 = vsel %vm3216, %v3204, 0.0
  %v3218 = vadd.f32 %v3215, %v3217
  %3219 = vst [vmem:[%s20] sm:$0x1] %v3218
  // Predicated region
  $region74: #{varibad_vae_forward.1} parent=0 // pred_check
    _
  $region75: #{varibad_vae_forward.1} parent=0 // pred_check_branch
    %3221 = sbr.rel (0) target = $region77
  $region76: #{varibad_vae_forward.1} parent=0 // pred_region
    _
  $region77: #{varibad_vae_forward.1} parent=0 // pred_fallthru
    _
  // Predicated region
  $region78: #{varibad_vae_forward.1} parent=0 // pred_check
    _
  $region79: #{varibad_vae_forward.1} parent=0 // pred_check_branch
    %3223 = sbr.rel (0) target = $region81
  $region80: #{varibad_vae_forward.1} parent=0 // pred_region
    _
  $region81: #{varibad_vae_forward.1} parent=0 // pred_fallthru
    _
  // Predicated region
  $region82: #{varibad_vae_forward.1} parent=0 // pred_check
    _
  $region83: #{varibad_vae_forward.1} parent=0 // pred_check_branch
    %3225 = sbr.rel (0) target = $region85
  $region84: #{varibad_vae_forward.1} parent=0 // pred_region
    _
  $region85: #{varibad_vae_forward.1} parent=0 // pred_fallthru
    _
  // Predicated region
  $region86: #{varibad_vae_forward.1} parent=0 // pred_check
    _
  $region87: #{varibad_vae_forward.1} parent=0 // pred_check_branch
    %3227 = sbr.rel (0) target = $region89
  $region88: #{varibad_vae_forward.1} parent=0 // pred_region
    _
  $region89: #{varibad_vae_forward.1} parent=0 // pred_fallthru
    _
  // Predicated region
  $region90: #{varibad_vae_forward.1} parent=0 // pred_check
    _
  $region91: #{varibad_vae_forward.1} parent=0 // pred_check_branch
    %3229 = sbr.rel (0) target = $region93
  $region92: #{varibad_vae_forward.1} parent=0 // pred_region
    _
  $region93: #{varibad_vae_forward.1} parent=0 // pred_fallthru
    _
  // Predicated region
  $region94: #{varibad_vae_forward.1} parent=0 // pred_check
    _
  $region95: #{varibad_vae_forward.1} parent=0 // pred_check_branch
    %3231 = sbr.rel (0) target = $region97
  $region96: #{varibad_vae_forward.1} parent=0 // pred_region
    _
  $region97: #{varibad_vae_forward.1} parent=0 // pred_fallthru
    _

</llo_original>
